<compile_context>
chip_gen: v7x
topology: tpu7x:2x2x1
jax: 0.10.0
libtpu: 0.0.40
codegen_flags: <defaults>
</compile_context>

<pallas_src>
import jax
import jax.numpy as jnp
from jax.experimental import pallas as pl
from jax.experimental.pallas import tpu as pltpu


def _round_up(x, m):
    return (x + m - 1) // m * m


# --------------------------------------------------------------------------- #
# Fused TouchNet kernel                                                        #
# --------------------------------------------------------------------------- #
def _make_touchnet_kernel(N, C, HW, HWL, TB, chunk=128):
    """One grid step = TB batch rows, full pipeline (all frames) for each."""
    n_chunks = HWL // chunk

    def kernel(x_ref, wsT_ref, bs_ref, wcT_ref, bc_ref, wlT_ref, bl_ref, o_ref):
        # x_ref:   (TB, N, 9, HWL)  lane-major im2col taps (zero-padded past HW)
        # wsT_ref: (C, 9)    stem weight^T, pre-scaled by 1/(H*W)
        # bs_ref:  (C, 1)    stem bias,     pre-scaled by 1/(H*W)
        # wcT_ref: (C, N*C)  combination 1x1-conv weight^T (resident across the grid)
        # bc_ref:  (C, 1)    combination bias
        # wlT_ref: (NCp, C)  classifier weight^T (zero-padded to NCp rows)
        # bl_ref:  (NCp, 1)  classifier bias (zero-padded)
        # o_ref:   (1, NCp, TB) column-major logits for this batch block
        for b in range(TB):                       # unrolled; TB is small & static
            # Init with the combination bias (bias-then-pool == pool-then-bias).
            acc = bc_ref[...]                     # (C, 1)
            for n in range(N):                    # fully unrolled frame loop (grid collapse)
                pooled = jnp.zeros((C, 1), jnp.float32)
                # ---- SmallNet stand-in: 3x3 conv (1->128) + ReLU, pooling fused ----
                # Process the spatial axis in 128-lane chunks to bound vreg pressure;
                # the K=9 contraction runs on the (otherwise idle) MXU, so there is no
                # per-tap slicing and no sublane relayout.
                for ci in range(n_chunks):
                    c0 = ci * chunk
                    if c0 >= HW:                  # chunk is entirely lane padding: skip
                        continue
                    taps = x_ref[b, n, :, c0:c0 + chunk]            # (9, chunk), 128-aligned
                    feat = jnp.dot(wsT_ref[...], taps,
                                   preferred_element_type=jnp.float32)   # (C, chunk)
                    feat = jnp.maximum(feat + bs_ref[...], 0.0)
                    if c0 + chunk > HW:           # partially padded chunk: mask pad lanes
                        lane = jax.lax.broadcasted_iota(jnp.int32, feat.shape, 1) + c0
                        feat = jnp.where(lane < HW, feat, 0.0)
                    # AdaptiveAvgPool2d(1): 1/(H*W) is already folded into wsT/bs.
                    pooled = pooled + jnp.sum(feat, axis=1, keepdims=True)    # (C, 1)
                # ---- combination 1x1 conv, frame-n contribution (pool-first refactor) ----
                # Static, 128-aligned lane slice of the resident transposed weight.
                acc = acc + jnp.dot(wcT_ref[:, n * C:(n + 1) * C], pooled,
                                    preferred_element_type=jnp.float32)       # (C, 1)
            # ---- classifier ----
            logits = jnp.dot(wlT_ref[...], acc,
                             preferred_element_type=jnp.float32) + bl_ref[...]  # (NCp, 1)
            o_ref[0, :, b:b + 1] = logits

    return kernel


def touchnet_forward(x, params):
    """x: [B, nFrames, H, W] float32 (PyTorch NCHW frame layout) -> [B, num_classes]."""
    B, N, H, W = x.shape
    C = params["w_stem"].shape[1]                  # 128 feature channels
    num_classes = params["w_cls"].shape[1]
    HW = H * W
    HWL = _round_up(HW, 128)                       # lane-padded spatial length
    NCp = _round_up(num_classes, 128)              # padded class dim
    # TB batch rows per grid step: keep >=2 grid blocks at tiny B (both v7x cores busy),
    # batch the matmuls over 8 rows per step at production batch sizes.
    TB = 1 if B < 16 else 8
    Bpad = _round_up(B, TB)
    n_blocks = Bpad // TB

    # Host-side im2col: (B, N, 9, HWL) with the flattened spatial axis lane-major.
    # Layout plumbing only: ~B*N*9*HWL*4 bytes (tens of KiB), built once by XLA.
    xpad = jnp.pad(x, ((0, 0), (0, 0), (1, 1), (1, 1)))            # conv padding = 1
    taps = jnp.stack([xpad[:, :, dh:dh + H, dw:dw + W].reshape(B, N, HW)
                      for dh in range(3) for dw in range(3)], axis=2)       # (B, N, 9, HW)
    taps = jnp.pad(taps, ((0, Bpad - B), (0, 0), (0, 0), (0, HWL - HW)))

    # Fold the AdaptiveAvgPool2d(1) scale into the stem (positive scale commutes with ReLU).
    inv = 1.0 / HW
    wsT = params["w_stem"].T * inv                                 # (C, 9)
    bs = params["b_stem"].reshape(C, 1) * inv                      # (C, 1)
    wcT = params["w_comb"].T                                       # (C, N*C), resident once
    bc = params["b_comb"].reshape(C, 1)                            # (C, 1)
    wlT = jnp.zeros((NCp, C), jnp.float32).at[:num_classes, :].set(params["w_cls"].T)
    bl = jnp.zeros((NCp, 1), jnp.float32).at[:num_classes, 0].set(params["b_cls"][0])

    kernel = _make_touchnet_kernel(N, C, HW, HWL, TB)
    out = pl.pallas_call(
        kernel,
        out_shape=jax.ShapeDtypeStruct((n_blocks, NCp, TB), jnp.float32),
        grid=(n_blocks,),
        in_specs=[
            pl.BlockSpec((TB, N, 9, HWL), lambda i: (i, 0, 0, 0)),   # im2col frames
            pl.BlockSpec((C, 9), lambda i: (0, 0)),                  # stem weight^T
            pl.BlockSpec((C, 1), lambda i: (0, 0)),                  # stem bias
            pl.BlockSpec((C, N * C), lambda i: (0, 0)),              # comb weight^T (resident)
            pl.BlockSpec((C, 1), lambda i: (0, 0)),                  # comb bias
            pl.BlockSpec((NCp, C), lambda i: (0, 0)),                # classifier weight^T
            pl.BlockSpec((NCp, 1), lambda i: (0, 0)),                # classifier bias
        ],
        out_specs=pl.BlockSpec((1, NCp, TB), lambda i: (i, 0, 0)),
        compiler_params=pltpu.CompilerParams(
            dimension_semantics=("parallel",)),
    )(taps, wsT, bs, wcT, bc, wlT, bl)

    # (n_blocks, NCp, TB) column-major logits -> (B, num_classes); ~1 KiB fix-up done by XLA.
    out = out.transpose(0, 2, 1).reshape(Bpad, NCp)
    return out[:B, :num_classes]


# --------------------------------------------------------------------------- #
# Pure-JAX reference (computed the "torch way": conv -> cat -> 1x1 -> pool -> fc)
# --------------------------------------------------------------------------- #
def touchnet_reference(x, params):
    B, N, H, W = x.shape
    hp = jax.lax.Precision.HIGHEST
    xp = jnp.pad(x, ((0, 0), (0, 0), (1, 1), (1, 1)))
    taps = jnp.stack([xp[:, :, dh:dh + H, dw:dw + W]
                      for dh in range(3) for dw in range(3)], axis=-1)  # (B,N,H,W,9)
    feat = jnp.einsum("bnhwk,kc->bnhwc", taps, params["w_stem"], precision=hp)
    feat = jnp.maximum(feat + params["b_stem"][0], 0.0)                 # (B,N,H,W,C)
    # torch.cat(xs, dim=1): frame n occupies channels [n*C, (n+1)*C)
    featc = feat.transpose(0, 2, 3, 1, 4).reshape(B, H, W, -1)          # (B,H,W,N*C)
    comb = jnp.einsum("bhwi,io->bhwo", featc, params["w_comb"], precision=hp)
    comb = comb + params["b_comb"][0]
    pooled = comb.mean(axis=(1, 2))                                     # (B, C)
    return jnp.dot(pooled, params["w_cls"], precision=hp) + params["b_cls"][0]


def init_params(key, num_classes=10, nFrames=5, feat_ch=128):
    k1, k2, k3, k4, k5, k6 = jax.random.split(key, 6)
    scale = 0.05
    return {
        # stem conv: Conv2d(1, 128, 3, padding=1) -> weight laid out as [9, 128]
        "w_stem": scale * jax.random.normal(k1, (9, feat_ch), jnp.float32),
        "b_stem": scale * jax.random.normal(k2, (1, feat_ch), jnp.float32),
        # combination: Conv2d(128*nFrames, 128, 1) -> weight [128*nFrames, 128]
        "w_comb": scale * jax.random.normal(k3, (feat_ch * nFrames, feat_ch), jnp.float32),
        "b_comb": scale * jax.random.normal(k4, (1, feat_ch), jnp.float32),
        # classifier: Linear(128, num_classes) -> weight [128, num_classes]
        "w_cls": scale * jax.random.normal(k5, (feat_ch, num_classes), jnp.float32),
        "b_cls": scale * jax.random.normal(k6, (1, num_classes), jnp.float32),
    }


if __name__ == "__main__":
    B, nFrames, H, W = 2, 5, 16, 16
    num_classes = 10

    key = jax.random.PRNGKey(0)
    kx, kp = jax.random.split(key)
    x = jax.random.normal(kx, (B, nFrames, H, W), jnp.float32)
    params = init_params(kp, num_classes=num_classes, nFrames=nFrames)

    fwd = jax.jit(touchnet_forward)
    logits = fwd(x, params)
    jax.block_until_ready(logits)

    assert logits.shape == (B, num_classes)
    assert bool(jnp.all(jnp.isfinite(logits)))

    ref = touchnet_reference(x, params)
    err = float(jnp.max(jnp.abs(logits - ref)))
    # Loose bound to tolerate any reduced-precision handling of f32 MXU matmuls;
    # observed error is typically far below 1e-3.
    assert err < 2e-2, f"kernel/reference mismatch: max |diff| = {err}"
    print("KERNEL_OK")
</pallas_src>

<mosaic_0001>
module attributes {stable_mosaic.version = 11 : i64} {
  func.func @kernel(%arg0: i32, %arg1: memref<1x5x9x256xf32, #tpu.memory_space<vmem>>, %arg2: memref<128x9xf32, #tpu.memory_space<vmem>>, %arg3: memref<128x1xf32, #tpu.memory_space<vmem>>, %arg4: memref<128x640xf32, #tpu.memory_space<vmem>>, %arg5: memref<128x1xf32, #tpu.memory_space<vmem>>, %arg6: memref<128x128xf32, #tpu.memory_space<vmem>>, %arg7: memref<128x1xf32, #tpu.memory_space<vmem>>, %arg8: memref<1x128x1xf32, #tpu.memory_space<vmem>>) attributes {dimension_semantics = [#tpu.dimension_semantics<parallel>], iteration_bounds = array<i64: 2>, scalar_prefetch = 0 : i64, scratch_operands = 0 : i64, tpu.core_type = #tpu.core_type<tc>, window_params = [{transform_indices = @transform_0, window_bounds = array<i64: 1, 5, 9, 256>}, {pipeline_mode = #tpu.pipeline_mode<synchronous>, transform_indices = @transform_1, window_bounds = array<i64: 128, 9>}, {pipeline_mode = #tpu.pipeline_mode<synchronous>, transform_indices = @transform_2, window_bounds = array<i64: 128, 1>}, {pipeline_mode = #tpu.pipeline_mode<synchronous>, transform_indices = @transform_3, window_bounds = array<i64: 128, 640>}, {pipeline_mode = #tpu.pipeline_mode<synchronous>, transform_indices = @transform_4, window_bounds = array<i64: 128, 1>}, {pipeline_mode = #tpu.pipeline_mode<synchronous>, transform_indices = @transform_5, window_bounds = array<i64: 128, 128>}, {pipeline_mode = #tpu.pipeline_mode<synchronous>, transform_indices = @transform_6, window_bounds = array<i64: 128, 1>}, {transform_indices = @transform_7, window_bounds = array<i64: 1, 128, 1>}]} {
    %c0 = arith.constant 0 : index
    %c0_0 = arith.constant 0 : index
    %0 = vector.load %arg5[%c0, %c0_0] : memref<128x1xf32, #tpu.memory_space<vmem>>, vector<128x1xf32>
    %cst = arith.constant 0.000000e+00 : f32
    %1 = vector.broadcast %cst : f32 to vector<128x1xf32>
    %c0_1 = arith.constant 0 : index
    %c0_2 = arith.constant 0 : index
    %c0_3 = arith.constant 0 : index
    %c0_4 = arith.constant 0 : index
    %2 = vector.load %arg1[%c0_1, %c0_2, %c0_3, %c0_4] : memref<1x5x9x256xf32, #tpu.memory_space<vmem>>, vector<1x1x9x128xf32>
    %3 = vector.shape_cast %2 : vector<1x1x9x128xf32> to vector<9x128xf32>
    %c0_5 = arith.constant 0 : index
    %c0_6 = arith.constant 0 : index
    %4 = vector.load %arg2[%c0_5, %c0_6] : memref<128x9xf32, #tpu.memory_space<vmem>>, vector<128x9xf32>
    %cst_7 = arith.constant dense<0.000000e+00> : vector<128x128xf32>
    %5 = tpu.matmul %4, %3, %cst_7 {dimension_numbers = #tpu.dot_dimension_numbers<[1], [0], [0], [1], [0, 0, 1, 1], [], []>} : vector<128x9xf32>, vector<9x128xf32>, vector<128x128xf32> -> vector<128x128xf32>
    %c0_8 = arith.constant 0 : index
    %c0_9 = arith.constant 0 : index
    %6 = vector.load %arg3[%c0_8, %c0_9] : memref<128x1xf32, #tpu.memory_space<vmem>>, vector<128x1xf32>
    %7 = vector.broadcast %6 : vector<128x1xf32> to vector<128x128xf32>
    %8 = arith.addf %5, %7 : vector<128x128xf32>
    %cst_10 = arith.constant 0.000000e+00 : f32
    %9 = vector.broadcast %cst_10 : f32 to vector<128x128xf32>
    %10 = arith.maximumf %8, %9 : vector<128x128xf32>
    %cst_11 = arith.constant dense<0.000000e+00> : vector<128xf32>
    %11 = vector.multi_reduction <add>, %10, %cst_11 [1] : vector<128x128xf32> to vector<128xf32>
    %12 = vector.shape_cast %11 : vector<128xf32> to vector<128x1xf32>
    %13 = arith.addf %1, %12 : vector<128x1xf32>
    %c0_12 = arith.constant 0 : index
    %c0_13 = arith.constant 0 : index
    %c0_14 = arith.constant 0 : index
    %c128 = arith.constant 128 : index
    %14 = vector.load %arg1[%c0_12, %c0_13, %c0_14, %c128] : memref<1x5x9x256xf32, #tpu.memory_space<vmem>>, vector<1x1x9x128xf32>
    %15 = vector.shape_cast %14 : vector<1x1x9x128xf32> to vector<9x128xf32>
    %c0_15 = arith.constant 0 : index
    %c0_16 = arith.constant 0 : index
    %16 = vector.load %arg2[%c0_15, %c0_16] : memref<128x9xf32, #tpu.memory_space<vmem>>, vector<128x9xf32>
    %cst_17 = arith.constant dense<0.000000e+00> : vector<128x128xf32>
    %17 = tpu.matmul %16, %15, %cst_17 {dimension_numbers = #tpu.dot_dimension_numbers<[1], [0], [0], [1], [0, 0, 1, 1], [], []>} : vector<128x9xf32>, vector<9x128xf32>, vector<128x128xf32> -> vector<128x128xf32>
    %c0_18 = arith.constant 0 : index
    %c0_19 = arith.constant 0 : index
    %18 = vector.load %arg3[%c0_18, %c0_19] : memref<128x1xf32, #tpu.memory_space<vmem>>, vector<128x1xf32>
    %19 = vector.broadcast %18 : vector<128x1xf32> to vector<128x128xf32>
    %20 = arith.addf %17, %19 : vector<128x128xf32>
    %cst_20 = arith.constant 0.000000e+00 : f32
    %21 = vector.broadcast %cst_20 : f32 to vector<128x128xf32>
    %22 = arith.maximumf %20, %21 : vector<128x128xf32>
    %cst_21 = arith.constant dense<0.000000e+00> : vector<128xf32>
    %23 = vector.multi_reduction <add>, %22, %cst_21 [1] : vector<128x128xf32> to vector<128xf32>
    %24 = vector.shape_cast %23 : vector<128xf32> to vector<128x1xf32>
    %25 = arith.addf %13, %24 : vector<128x1xf32>
    %c0_22 = arith.constant 0 : index
    %c0_23 = arith.constant 0 : index
    %26 = vector.load %arg4[%c0_22, %c0_23] : memref<128x640xf32, #tpu.memory_space<vmem>>, vector<128x128xf32>
    %cst_24 = arith.constant dense<0.000000e+00> : vector<128x1xf32>
    %27 = tpu.matmul %26, %25, %cst_24 {dimension_numbers = #tpu.dot_dimension_numbers<[1], [0], [0], [1], [0, 0, 1, 1], [], []>} : vector<128x128xf32>, vector<128x1xf32>, vector<128x1xf32> -> vector<128x1xf32>
    %28 = arith.addf %0, %27 : vector<128x1xf32>
    %cst_25 = arith.constant 0.000000e+00 : f32
    %29 = vector.broadcast %cst_25 : f32 to vector<128x1xf32>
    %c0_26 = arith.constant 0 : index
    %c1 = arith.constant 1 : index
    %c0_27 = arith.constant 0 : index
    %c0_28 = arith.constant 0 : index
    %30 = vector.load %arg1[%c0_26, %c1, %c0_27, %c0_28] : memref<1x5x9x256xf32, #tpu.memory_space<vmem>>, vector<1x1x9x128xf32>
    %31 = vector.shape_cast %30 : vector<1x1x9x128xf32> to vector<9x128xf32>
    %c0_29 = arith.constant 0 : index
    %c0_30 = arith.constant 0 : index
    %32 = vector.load %arg2[%c0_29, %c0_30] : memref<128x9xf32, #tpu.memory_space<vmem>>, vector<128x9xf32>
    %cst_31 = arith.constant dense<0.000000e+00> : vector<128x128xf32>
    %33 = tpu.matmul %32, %31, %cst_31 {dimension_numbers = #tpu.dot_dimension_numbers<[1], [0], [0], [1], [0, 0, 1, 1], [], []>} : vector<128x9xf32>, vector<9x128xf32>, vector<128x128xf32> -> vector<128x128xf32>
    %c0_32 = arith.constant 0 : index
    %c0_33 = arith.constant 0 : index
    %34 = vector.load %arg3[%c0_32, %c0_33] : memref<128x1xf32, #tpu.memory_space<vmem>>, vector<128x1xf32>
    %35 = vector.broadcast %34 : vector<128x1xf32> to vector<128x128xf32>
    %36 = arith.addf %33, %35 : vector<128x128xf32>
    %cst_34 = arith.constant 0.000000e+00 : f32
    %37 = vector.broadcast %cst_34 : f32 to vector<128x128xf32>
    %38 = arith.maximumf %36, %37 : vector<128x128xf32>
    %cst_35 = arith.constant dense<0.000000e+00> : vector<128xf32>
    %39 = vector.multi_reduction <add>, %38, %cst_35 [1] : vector<128x128xf32> to vector<128xf32>
    %40 = vector.shape_cast %39 : vector<128xf32> to vector<128x1xf32>
    %41 = arith.addf %29, %40 : vector<128x1xf32>
    %c0_36 = arith.constant 0 : index
    %c1_37 = arith.constant 1 : index
    %c0_38 = arith.constant 0 : index
    %c128_39 = arith.constant 128 : index
    %42 = vector.load %arg1[%c0_36, %c1_37, %c0_38, %c128_39] : memref<1x5x9x256xf32, #tpu.memory_space<vmem>>, vector<1x1x9x128xf32>
    %43 = vector.shape_cast %42 : vector<1x1x9x128xf32> to vector<9x128xf32>
    %c0_40 = arith.constant 0 : index
    %c0_41 = arith.constant 0 : index
    %44 = vector.load %arg2[%c0_40, %c0_41] : memref<128x9xf32, #tpu.memory_space<vmem>>, vector<128x9xf32>
    %cst_42 = arith.constant dense<0.000000e+00> : vector<128x128xf32>
    %45 = tpu.matmul %44, %43, %cst_42 {dimension_numbers = #tpu.dot_dimension_numbers<[1], [0], [0], [1], [0, 0, 1, 1], [], []>} : vector<128x9xf32>, vector<9x128xf32>, vector<128x128xf32> -> vector<128x128xf32>
    %c0_43 = arith.constant 0 : index
    %c0_44 = arith.constant 0 : index
    %46 = vector.load %arg3[%c0_43, %c0_44] : memref<128x1xf32, #tpu.memory_space<vmem>>, vector<128x1xf32>
    %47 = vector.broadcast %46 : vector<128x1xf32> to vector<128x128xf32>
    %48 = arith.addf %45, %47 : vector<128x128xf32>
    %cst_45 = arith.constant 0.000000e+00 : f32
    %49 = vector.broadcast %cst_45 : f32 to vector<128x128xf32>
    %50 = arith.maximumf %48, %49 : vector<128x128xf32>
    %cst_46 = arith.constant dense<0.000000e+00> : vector<128xf32>
    %51 = vector.multi_reduction <add>, %50, %cst_46 [1] : vector<128x128xf32> to vector<128xf32>
    %52 = vector.shape_cast %51 : vector<128xf32> to vector<128x1xf32>
    %53 = arith.addf %41, %52 : vector<128x1xf32>
    %c0_47 = arith.constant 0 : index
    %c128_48 = arith.constant 128 : index
    %54 = vector.load %arg4[%c0_47, %c128_48] : memref<128x640xf32, #tpu.memory_space<vmem>>, vector<128x128xf32>
    %cst_49 = arith.constant dense<0.000000e+00> : vector<128x1xf32>
    %55 = tpu.matmul %54, %53, %cst_49 {dimension_numbers = #tpu.dot_dimension_numbers<[1], [0], [0], [1], [0, 0, 1, 1], [], []>} : vector<128x128xf32>, vector<128x1xf32>, vector<128x1xf32> -> vector<128x1xf32>
    %56 = arith.addf %28, %55 : vector<128x1xf32>
    %cst_50 = arith.constant 0.000000e+00 : f32
    %57 = vector.broadcast %cst_50 : f32 to vector<128x1xf32>
    %c0_51 = arith.constant 0 : index
    %c2 = arith.constant 2 : index
    %c0_52 = arith.constant 0 : index
    %c0_53 = arith.constant 0 : index
    %58 = vector.load %arg1[%c0_51, %c2, %c0_52, %c0_53] : memref<1x5x9x256xf32, #tpu.memory_space<vmem>>, vector<1x1x9x128xf32>
    %59 = vector.shape_cast %58 : vector<1x1x9x128xf32> to vector<9x128xf32>
    %c0_54 = arith.constant 0 : index
    %c0_55 = arith.constant 0 : index
    %60 = vector.load %arg2[%c0_54, %c0_55] : memref<128x9xf32, #tpu.memory_space<vmem>>, vector<128x9xf32>
    %cst_56 = arith.constant dense<0.000000e+00> : vector<128x128xf32>
    %61 = tpu.matmul %60, %59, %cst_56 {dimension_numbers = #tpu.dot_dimension_numbers<[1], [0], [0], [1], [0, 0, 1, 1], [], []>} : vector<128x9xf32>, vector<9x128xf32>, vector<128x128xf32> -> vector<128x128xf32>
    %c0_57 = arith.constant 0 : index
    %c0_58 = arith.constant 0 : index
    %62 = vector.load %arg3[%c0_57, %c0_58] : memref<128x1xf32, #tpu.memory_space<vmem>>, vector<128x1xf32>
    %63 = vector.broadcast %62 : vector<128x1xf32> to vector<128x128xf32>
    %64 = arith.addf %61, %63 : vector<128x128xf32>
    %cst_59 = arith.constant 0.000000e+00 : f32
    %65 = vector.broadcast %cst_59 : f32 to vector<128x128xf32>
    %66 = arith.maximumf %64, %65 : vector<128x128xf32>
    %cst_60 = arith.constant dense<0.000000e+00> : vector<128xf32>
    %67 = vector.multi_reduction <add>, %66, %cst_60 [1] : vector<128x128xf32> to vector<128xf32>
    %68 = vector.shape_cast %67 : vector<128xf32> to vector<128x1xf32>
    %69 = arith.addf %57, %68 : vector<128x1xf32>
    %c0_61 = arith.constant 0 : index
    %c2_62 = arith.constant 2 : index
    %c0_63 = arith.constant 0 : index
    %c128_64 = arith.constant 128 : index
    %70 = vector.load %arg1[%c0_61, %c2_62, %c0_63, %c128_64] : memref<1x5x9x256xf32, #tpu.memory_space<vmem>>, vector<1x1x9x128xf32>
    %71 = vector.shape_cast %70 : vector<1x1x9x128xf32> to vector<9x128xf32>
    %c0_65 = arith.constant 0 : index
    %c0_66 = arith.constant 0 : index
    %72 = vector.load %arg2[%c0_65, %c0_66] : memref<128x9xf32, #tpu.memory_space<vmem>>, vector<128x9xf32>
    %cst_67 = arith.constant dense<0.000000e+00> : vector<128x128xf32>
    %73 = tpu.matmul %72, %71, %cst_67 {dimension_numbers = #tpu.dot_dimension_numbers<[1], [0], [0], [1], [0, 0, 1, 1], [], []>} : vector<128x9xf32>, vector<9x128xf32>, vector<128x128xf32> -> vector<128x128xf32>
    %c0_68 = arith.constant 0 : index
    %c0_69 = arith.constant 0 : index
    %74 = vector.load %arg3[%c0_68, %c0_69] : memref<128x1xf32, #tpu.memory_space<vmem>>, vector<128x1xf32>
    %75 = vector.broadcast %74 : vector<128x1xf32> to vector<128x128xf32>
    %76 = arith.addf %73, %75 : vector<128x128xf32>
    %cst_70 = arith.constant 0.000000e+00 : f32
    %77 = vector.broadcast %cst_70 : f32 to vector<128x128xf32>
    %78 = arith.maximumf %76, %77 : vector<128x128xf32>
    %cst_71 = arith.constant dense<0.000000e+00> : vector<128xf32>
    %79 = vector.multi_reduction <add>, %78, %cst_71 [1] : vector<128x128xf32> to vector<128xf32>
    %80 = vector.shape_cast %79 : vector<128xf32> to vector<128x1xf32>
    %81 = arith.addf %69, %80 : vector<128x1xf32>
    %c0_72 = arith.constant 0 : index
    %c256 = arith.constant 256 : index
    %82 = vector.load %arg4[%c0_72, %c256] : memref<128x640xf32, #tpu.memory_space<vmem>>, vector<128x128xf32>
    %cst_73 = arith.constant dense<0.000000e+00> : vector<128x1xf32>
    %83 = tpu.matmul %82, %81, %cst_73 {dimension_numbers = #tpu.dot_dimension_numbers<[1], [0], [0], [1], [0, 0, 1, 1], [], []>} : vector<128x128xf32>, vector<128x1xf32>, vector<128x1xf32> -> vector<128x1xf32>
    %84 = arith.addf %56, %83 : vector<128x1xf32>
    %cst_74 = arith.constant 0.000000e+00 : f32
    %85 = vector.broadcast %cst_74 : f32 to vector<128x1xf32>
    %c0_75 = arith.constant 0 : index
    %c3 = arith.constant 3 : index
    %c0_76 = arith.constant 0 : index
    %c0_77 = arith.constant 0 : index
    %86 = vector.load %arg1[%c0_75, %c3, %c0_76, %c0_77] : memref<1x5x9x256xf32, #tpu.memory_space<vmem>>, vector<1x1x9x128xf32>
    %87 = vector.shape_cast %86 : vector<1x1x9x128xf32> to vector<9x128xf32>
    %c0_78 = arith.constant 0 : index
    %c0_79 = arith.constant 0 : index
    %88 = vector.load %arg2[%c0_78, %c0_79] : memref<128x9xf32, #tpu.memory_space<vmem>>, vector<128x9xf32>
    %cst_80 = arith.constant dense<0.000000e+00> : vector<128x128xf32>
    %89 = tpu.matmul %88, %87, %cst_80 {dimension_numbers = #tpu.dot_dimension_numbers<[1], [0], [0], [1], [0, 0, 1, 1], [], []>} : vector<128x9xf32>, vector<9x128xf32>, vector<128x128xf32> -> vector<128x128xf32>
    %c0_81 = arith.constant 0 : index
    %c0_82 = arith.constant 0 : index
    %90 = vector.load %arg3[%c0_81, %c0_82] : memref<128x1xf32, #tpu.memory_space<vmem>>, vector<128x1xf32>
    %91 = vector.broadcast %90 : vector<128x1xf32> to vector<128x128xf32>
    %92 = arith.addf %89, %91 : vector<128x128xf32>
    %cst_83 = arith.constant 0.000000e+00 : f32
    %93 = vector.broadcast %cst_83 : f32 to vector<128x128xf32>
    %94 = arith.maximumf %92, %93 : vector<128x128xf32>
    %cst_84 = arith.constant dense<0.000000e+00> : vector<128xf32>
    %95 = vector.multi_reduction <add>, %94, %cst_84 [1] : vector<128x128xf32> to vector<128xf32>
    %96 = vector.shape_cast %95 : vector<128xf32> to vector<128x1xf32>
    %97 = arith.addf %85, %96 : vector<128x1xf32>
    %c0_85 = arith.constant 0 : index
    %c3_86 = arith.constant 3 : index
    %c0_87 = arith.constant 0 : index
    %c128_88 = arith.constant 128 : index
    %98 = vector.load %arg1[%c0_85, %c3_86, %c0_87, %c128_88] : memref<1x5x9x256xf32, #tpu.memory_space<vmem>>, vector<1x1x9x128xf32>
    %99 = vector.shape_cast %98 : vector<1x1x9x128xf32> to vector<9x128xf32>
    %c0_89 = arith.constant 0 : index
    %c0_90 = arith.constant 0 : index
    %100 = vector.load %arg2[%c0_89, %c0_90] : memref<128x9xf32, #tpu.memory_space<vmem>>, vector<128x9xf32>
    %cst_91 = arith.constant dense<0.000000e+00> : vector<128x128xf32>
    %101 = tpu.matmul %100, %99, %cst_91 {dimension_numbers = #tpu.dot_dimension_numbers<[1], [0], [0], [1], [0, 0, 1, 1], [], []>} : vector<128x9xf32>, vector<9x128xf32>, vector<128x128xf32> -> vector<128x128xf32>
    %c0_92 = arith.constant 0 : index
    %c0_93 = arith.constant 0 : index
    %102 = vector.load %arg3[%c0_92, %c0_93] : memref<128x1xf32, #tpu.memory_space<vmem>>, vector<128x1xf32>
    %103 = vector.broadcast %102 : vector<128x1xf32> to vector<128x128xf32>
    %104 = arith.addf %101, %103 : vector<128x128xf32>
    %cst_94 = arith.constant 0.000000e+00 : f32
    %105 = vector.broadcast %cst_94 : f32 to vector<128x128xf32>
    %106 = arith.maximumf %104, %105 : vector<128x128xf32>
    %cst_95 = arith.constant dense<0.000000e+00> : vector<128xf32>
    %107 = vector.multi_reduction <add>, %106, %cst_95 [1] : vector<128x128xf32> to vector<128xf32>
    %108 = vector.shape_cast %107 : vector<128xf32> to vector<128x1xf32>
    %109 = arith.addf %97, %108 : vector<128x1xf32>
    %c0_96 = arith.constant 0 : index
    %c384 = arith.constant 384 : index
    %110 = vector.load %arg4[%c0_96, %c384] : memref<128x640xf32, #tpu.memory_space<vmem>>, vector<128x128xf32>
    %cst_97 = arith.constant dense<0.000000e+00> : vector<128x1xf32>
    %111 = tpu.matmul %110, %109, %cst_97 {dimension_numbers = #tpu.dot_dimension_numbers<[1], [0], [0], [1], [0, 0, 1, 1], [], []>} : vector<128x128xf32>, vector<128x1xf32>, vector<128x1xf32> -> vector<128x1xf32>
    %112 = arith.addf %84, %111 : vector<128x1xf32>
    %cst_98 = arith.constant 0.000000e+00 : f32
    %113 = vector.broadcast %cst_98 : f32 to vector<128x1xf32>
    %c0_99 = arith.constant 0 : index
    %c4 = arith.constant 4 : index
    %c0_100 = arith.constant 0 : index
    %c0_101 = arith.constant 0 : index
    %114 = vector.load %arg1[%c0_99, %c4, %c0_100, %c0_101] : memref<1x5x9x256xf32, #tpu.memory_space<vmem>>, vector<1x1x9x128xf32>
    %115 = vector.shape_cast %114 : vector<1x1x9x128xf32> to vector<9x128xf32>
    %c0_102 = arith.constant 0 : index
    %c0_103 = arith.constant 0 : index
    %116 = vector.load %arg2[%c0_102, %c0_103] : memref<128x9xf32, #tpu.memory_space<vmem>>, vector<128x9xf32>
    %cst_104 = arith.constant dense<0.000000e+00> : vector<128x128xf32>
    %117 = tpu.matmul %116, %115, %cst_104 {dimension_numbers = #tpu.dot_dimension_numbers<[1], [0], [0], [1], [0, 0, 1, 1], [], []>} : vector<128x9xf32>, vector<9x128xf32>, vector<128x128xf32> -> vector<128x128xf32>
    %c0_105 = arith.constant 0 : index
    %c0_106 = arith.constant 0 : index
    %118 = vector.load %arg3[%c0_105, %c0_106] : memref<128x1xf32, #tpu.memory_space<vmem>>, vector<128x1xf32>
    %119 = vector.broadcast %118 : vector<128x1xf32> to vector<128x128xf32>
    %120 = arith.addf %117, %119 : vector<128x128xf32>
    %cst_107 = arith.constant 0.000000e+00 : f32
    %121 = vector.broadcast %cst_107 : f32 to vector<128x128xf32>
    %122 = arith.maximumf %120, %121 : vector<128x128xf32>
    %cst_108 = arith.constant dense<0.000000e+00> : vector<128xf32>
    %123 = vector.multi_reduction <add>, %122, %cst_108 [1] : vector<128x128xf32> to vector<128xf32>
    %124 = vector.shape_cast %123 : vector<128xf32> to vector<128x1xf32>
    %125 = arith.addf %113, %124 : vector<128x1xf32>
    %c0_109 = arith.constant 0 : index
    %c4_110 = arith.constant 4 : index
    %c0_111 = arith.constant 0 : index
    %c128_112 = arith.constant 128 : index
    %126 = vector.load %arg1[%c0_109, %c4_110, %c0_111, %c128_112] : memref<1x5x9x256xf32, #tpu.memory_space<vmem>>, vector<1x1x9x128xf32>
    %127 = vector.shape_cast %126 : vector<1x1x9x128xf32> to vector<9x128xf32>
    %c0_113 = arith.constant 0 : index
    %c0_114 = arith.constant 0 : index
    %128 = vector.load %arg2[%c0_113, %c0_114] : memref<128x9xf32, #tpu.memory_space<vmem>>, vector<128x9xf32>
    %cst_115 = arith.constant dense<0.000000e+00> : vector<128x128xf32>
    %129 = tpu.matmul %128, %127, %cst_115 {dimension_numbers = #tpu.dot_dimension_numbers<[1], [0], [0], [1], [0, 0, 1, 1], [], []>} : vector<128x9xf32>, vector<9x128xf32>, vector<128x128xf32> -> vector<128x128xf32>
    %c0_116 = arith.constant 0 : index
    %c0_117 = arith.constant 0 : index
    %130 = vector.load %arg3[%c0_116, %c0_117] : memref<128x1xf32, #tpu.memory_space<vmem>>, vector<128x1xf32>
    %131 = vector.broadcast %130 : vector<128x1xf32> to vector<128x128xf32>
    %132 = arith.addf %129, %131 : vector<128x128xf32>
    %cst_118 = arith.constant 0.000000e+00 : f32
    %133 = vector.broadcast %cst_118 : f32 to vector<128x128xf32>
    %134 = arith.maximumf %132, %133 : vector<128x128xf32>
    %cst_119 = arith.constant dense<0.000000e+00> : vector<128xf32>
    %135 = vector.multi_reduction <add>, %134, %cst_119 [1] : vector<128x128xf32> to vector<128xf32>
    %136 = vector.shape_cast %135 : vector<128xf32> to vector<128x1xf32>
    %137 = arith.addf %125, %136 : vector<128x1xf32>
    %c0_120 = arith.constant 0 : index
    %c512 = arith.constant 512 : index
    %138 = vector.load %arg4[%c0_120, %c512] : memref<128x640xf32, #tpu.memory_space<vmem>>, vector<128x128xf32>
    %cst_121 = arith.constant dense<0.000000e+00> : vector<128x1xf32>
    %139 = tpu.matmul %138, %137, %cst_121 {dimension_numbers = #tpu.dot_dimension_numbers<[1], [0], [0], [1], [0, 0, 1, 1], [], []>} : vector<128x128xf32>, vector<128x1xf32>, vector<128x1xf32> -> vector<128x1xf32>
    %140 = arith.addf %112, %139 : vector<128x1xf32>
    %c0_122 = arith.constant 0 : index
    %c0_123 = arith.constant 0 : index
    %141 = vector.load %arg6[%c0_122, %c0_123] : memref<128x128xf32, #tpu.memory_space<vmem>>, vector<128x128xf32>
    %cst_124 = arith.constant dense<0.000000e+00> : vector<128x1xf32>
    %142 = tpu.matmul %141, %140, %cst_124 {dimension_numbers = #tpu.dot_dimension_numbers<[1], [0], [0], [1], [0, 0, 1, 1], [], []>} : vector<128x128xf32>, vector<128x1xf32>, vector<128x1xf32> -> vector<128x1xf32>
    %c0_125 = arith.constant 0 : index
    %c0_126 = arith.constant 0 : index
    %143 = vector.load %arg7[%c0_125, %c0_126] : memref<128x1xf32, #tpu.memory_space<vmem>>, vector<128x1xf32>
    %144 = arith.addf %142, %143 : vector<128x1xf32>
    %c0_127 = arith.constant 0 : index
    %c0_128 = arith.constant 0 : index
    %c0_129 = arith.constant 0 : index
    %145 = vector.load %arg8[%c0_127, %c0_128, %c0_129] : memref<1x128x1xf32, #tpu.memory_space<vmem>>, vector<1x128x1xf32>
    %146 = vector.shape_cast %145 : vector<1x128x1xf32> to vector<128x1xf32>
    %147 = vector.shape_cast %144 : vector<128x1xf32> to vector<1x128x1xf32>
    tpu.vector_store %arg8[%c0_127, %c0_128, %c0_129], %147 {strides = array<i32>} : memref<1x128x1xf32, #tpu.memory_space<vmem>>, vector<1x128x1xf32>,
    return
  }
  func.func @transform_0(%arg0: i32) -> (i32, i32, i32, i32) {
    %c0_i32 = arith.constant 0 : i32
    %c0_i32_0 = arith.constant 0 : i32
    %c0_i32_1 = arith.constant 0 : i32
    %c0_i32_2 = arith.constant 0 : i32
    return %arg0, %c0_i32, %c0_i32_0, %c0_i32_1 : i32, i32, i32, i32
  }
  func.func @transform_1(%arg0: i32) -> (i32, i32) {
    %c0_i32 = arith.constant 0 : i32
    %c0_i32_0 = arith.constant 0 : i32
    %c0_i32_1 = arith.constant 0 : i32
    return %c0_i32, %c0_i32_0 : i32, i32
  }
  func.func @transform_2(%arg0: i32) -> (i32, i32) {
    %c0_i32 = arith.constant 0 : i32
    %c0_i32_0 = arith.constant 0 : i32
    %c0_i32_1 = arith.constant 0 : i32
    return %c0_i32, %c0_i32_0 : i32, i32
  }
  func.func @transform_3(%arg0: i32) -> (i32, i32) {
    %c0_i32 = arith.constant 0 : i32
    %c0_i32_0 = arith.constant 0 : i32
    %c0_i32_1 = arith.constant 0 : i32
    return %c0_i32, %c0_i32_0 : i32, i32
  }
  func.func @transform_4(%arg0: i32) -> (i32, i32) {
    %c0_i32 = arith.constant 0 : i32
    %c0_i32_0 = arith.constant 0 : i32
    %c0_i32_1 = arith.constant 0 : i32
    return %c0_i32, %c0_i32_0 : i32, i32
  }
  func.func @transform_5(%arg0: i32) -> (i32, i32) {
    %c0_i32 = arith.constant 0 : i32
    %c0_i32_0 = arith.constant 0 : i32
    %c0_i32_1 = arith.constant 0 : i32
    return %c0_i32, %c0_i32_0 : i32, i32
  }
  func.func @transform_6(%arg0: i32) -> (i32, i32) {
    %c0_i32 = arith.constant 0 : i32
    %c0_i32_0 = arith.constant 0 : i32
    %c0_i32_1 = arith.constant 0 : i32
    return %c0_i32, %c0_i32_0 : i32, i32
  }
  func.func @transform_7(%arg0: i32) -> (i32, i32, i32) {
    %c0_i32 = arith.constant 0 : i32
    %c0_i32_0 = arith.constant 0 : i32
    %c0_i32_1 = arith.constant 0 : i32
    return %arg0, %c0_i32, %c0_i32_0 : i32, i32, i32
  }
}

</mosaic_0001>

<llo_original>
// kernel: touchnet_forward.1
$region0: #{touchnet_forward.1}
  #allocation0 [shape = 'u32[]', space=smem, size = 0x4, offset = 0x4, fixed_abs, tag = 'smem constant byte address 0x4 - core index']
  #allocation1 [shape = 'u32[144,128]{1,0:T(1,128)}', space=vmem, size = 0x12000, scoped, tag = 'internal scratch']
  %s0 = inlined_call_operand.vmem [shape: f32[2,5,9,256], index: 0, kind: input, shape index: {}]
  %s1 = inlined_call_operand.vmem [shape: f32[128,9], index: 1, kind: input, shape index: {}]
  %s2 = inlined_call_operand.vmem [shape: f32[128,1], index: 2, kind: input, shape index: {}]
  %s3 = inlined_call_operand.vmem [shape: f32[128,640], index: 3, kind: input, shape index: {}]
  %s4 = inlined_call_operand.vmem [shape: f32[128,1], index: 4, kind: input, shape index: {}]
  %s5 = inlined_call_operand.vmem [shape: f32[128,128], index: 5, kind: input, shape index: {}]
  %s6 = inlined_call_operand.vmem [shape: f32[128,1], index: 6, kind: input, shape index: {}]
  %s7 = inlined_call_operand.vmem [shape: f32[2,128,1], index: 7, kind: output, shape index: {}]
  %s8 = sld [smem:[#allocation0]]
  $region61: #{touchnet_forward.1} parent=0
    _
  %s10 = ssub.s32 1, %s8
  %s11 = scalar_select 0, %s10, %s8
  loop: start=0, step=1, limit=4
  $region2: #{touchnet_forward.1} parent=0 // loop_pre_header
    _
  $region3: #{touchnet_forward.1} parent=0 // loop_header
    %s13 = sphi 0, %s17
    %p14 = scmp.ge.s32.totalorder %s13, 4
    %s23 = sphi 0, %s25
    %s26 = sphi 0, %s23
    %s27 = sphi 0, %s26
    %s43 = sphi 0, %s27
    %s47 = sphi 0, %s47
    %s49 = sphi 0, %s47
    %s50 = sphi 0, %s49
    %s64 = sphi 0, %s50
    %s68 = sphi 0, %s68
    %s70 = sphi 0, %s68
    %s71 = sphi 0, %s70
    %s85 = sphi 0, %s71
    %s89 = sphi 0, %s89
    %s91 = sphi 0, %s89
    %s92 = sphi 0, %s91
    %s106 = sphi 0, %s92
    %s110 = sphi 0, %s110
    %s112 = sphi 0, %s110
    %s113 = sphi 0, %s112
    %s127 = sphi 0, %s113
    %s131 = sphi 0, %s131
    %s133 = sphi 0, %s131
    %s134 = sphi 0, %s133
    %s148 = sphi 0, %s134
    %s152 = sphi 0, %s152
    %s154 = sphi 0, %s152
    %s155 = sphi 0, %s154
    %s169 = sphi 0, %s155
    %s175 = sphi 0, %s177
    %s178 = sphi 0, %s175
    %s179 = sphi 0, %s178
    %s195 = sphi 0, %s179
  $region4: #{touchnet_forward.1} parent=0 // loop_header_branch
    %16 = sbr.rel (%p14) target = $region8
  $region5: #{touchnet_forward.1} parent=0 // loop_body
    %s18 = ssub.s32 %s13, 1
    %s19 = ssub.s32 %s13, 2
    %s20 = sadd.s32 %s13, 1
    %s21 = ssub.s32 %s13, %s20
    %p22 = scmp.eq.s32.totalorder %s21, 0
    %s24 = sadd.s32 %s23, 1
    %s25 = scalar_select %p22, %s23, %s24
    %p28 = pneg %p22
    %p29 = scmp.eq.s32.totalorder %s13, 1
    %p30 = por %p28, %p29
    %p31 = scmp.ne.s32.totalorder %s23, %s26
    %p32 = scmp.eq.s32.totalorder %s13, 0
    %p33 = por %p31, %p32
    %p34 = scmp.ne.s32.totalorder %s23, %s26
    %p35 = scmp.eq.s32.totalorder %s18, 1
    %p36 = por %p34, %p35
    %p37 = scmp.ne.s32.totalorder %s26, %s27
    %p38 = scmp.eq.s32.totalorder %s18, 0
    %p39 = por %p37, %p38
    %p40 = scmp.ne.s32.totalorder %s26, %s27
    %p41 = scmp.eq.s32.totalorder %s19, 1
    %p42 = por %p40, %p41
    %p44 = scmp.ne.s32.totalorder %s27, %s43
    %p45 = scmp.eq.s32.totalorder %s19, 0
    %p46 = por %p44, %p45
    %s48 = sadd.s32 %s47, 1
    %p51 = scmp.eq.s32.totalorder %s13, 1
    %p52 = scmp.ne.s32.totalorder %s47, %s49
    %p53 = scmp.eq.s32.totalorder %s13, 0
    %p54 = por %p52, %p53
    %p55 = scmp.ne.s32.totalorder %s47, %s49
    %p56 = scmp.eq.s32.totalorder %s18, 1
    %p57 = por %p55, %p56
    %p58 = scmp.ne.s32.totalorder %s49, %s50
    %p59 = scmp.eq.s32.totalorder %s18, 0
    %p60 = por %p58, %p59
    %p61 = scmp.ne.s32.totalorder %s49, %s50
    %p62 = scmp.eq.s32.totalorder %s19, 1
    %p63 = por %p61, %p62
    %p65 = scmp.ne.s32.totalorder %s50, %s64
    %p66 = scmp.eq.s32.totalorder %s19, 0
    %p67 = por %p65, %p66
    %s69 = sadd.s32 %s68, 1
    %p72 = scmp.eq.s32.totalorder %s13, 1
    %p73 = scmp.ne.s32.totalorder %s68, %s70
    %p74 = scmp.eq.s32.totalorder %s13, 0
    %p75 = por %p73, %p74
    %p76 = scmp.ne.s32.totalorder %s68, %s70
    %p77 = scmp.eq.s32.totalorder %s18, 1
    %p78 = por %p76, %p77
    %p79 = scmp.ne.s32.totalorder %s70, %s71
    %p80 = scmp.eq.s32.totalorder %s18, 0
    %p81 = por %p79, %p80
    %p82 = scmp.ne.s32.totalorder %s70, %s71
    %p83 = scmp.eq.s32.totalorder %s19, 1
    %p84 = por %p82, %p83
    %p86 = scmp.ne.s32.totalorder %s71, %s85
    %p87 = scmp.eq.s32.totalorder %s19, 0
    %p88 = por %p86, %p87
    %s90 = sadd.s32 %s89, 1
    %p93 = scmp.eq.s32.totalorder %s13, 1
    %p94 = scmp.ne.s32.totalorder %s89, %s91
    %p95 = scmp.eq.s32.totalorder %s13, 0
    %p96 = por %p94, %p95
    %p97 = scmp.ne.s32.totalorder %s89, %s91
    %p98 = scmp.eq.s32.totalorder %s18, 1
    %p99 = por %p97, %p98
    %p100 = scmp.ne.s32.totalorder %s91, %s92
    %p101 = scmp.eq.s32.totalorder %s18, 0
    %p102 = por %p100, %p101
    %p103 = scmp.ne.s32.totalorder %s91, %s92
    %p104 = scmp.eq.s32.totalorder %s19, 1
    %p105 = por %p103, %p104
    %p107 = scmp.ne.s32.totalorder %s92, %s106
    %p108 = scmp.eq.s32.totalorder %s19, 0
    %p109 = por %p107, %p108
    %s111 = sadd.s32 %s110, 1
    %p114 = scmp.eq.s32.totalorder %s13, 1
    %p115 = scmp.ne.s32.totalorder %s110, %s112
    %p116 = scmp.eq.s32.totalorder %s13, 0
    %p117 = por %p115, %p116
    %p118 = scmp.ne.s32.totalorder %s110, %s112
    %p119 = scmp.eq.s32.totalorder %s18, 1
    %p120 = por %p118, %p119
    %p121 = scmp.ne.s32.totalorder %s112, %s113
    %p122 = scmp.eq.s32.totalorder %s18, 0
    %p123 = por %p121, %p122
    %p124 = scmp.ne.s32.totalorder %s112, %s113
    %p125 = scmp.eq.s32.totalorder %s19, 1
    %p126 = por %p124, %p125
    %p128 = scmp.ne.s32.totalorder %s113, %s127
    %p129 = scmp.eq.s32.totalorder %s19, 0
    %p130 = por %p128, %p129
    %s132 = sadd.s32 %s131, 1
    %p135 = scmp.eq.s32.totalorder %s13, 1
    %p136 = scmp.ne.s32.totalorder %s131, %s133
    %p137 = scmp.eq.s32.totalorder %s13, 0
    %p138 = por %p136, %p137
    %p139 = scmp.ne.s32.totalorder %s131, %s133
    %p140 = scmp.eq.s32.totalorder %s18, 1
    %p141 = por %p139, %p140
    %p142 = scmp.ne.s32.totalorder %s133, %s134
    %p143 = scmp.eq.s32.totalorder %s18, 0
    %p144 = por %p142, %p143
    %p145 = scmp.ne.s32.totalorder %s133, %s134
    %p146 = scmp.eq.s32.totalorder %s19, 1
    %p147 = por %p145, %p146
    %p149 = scmp.ne.s32.totalorder %s134, %s148
    %p150 = scmp.eq.s32.totalorder %s19, 0
    %p151 = por %p149, %p150
    %s153 = sadd.s32 %s152, 1
    %p156 = scmp.eq.s32.totalorder %s13, 1
    %p157 = scmp.ne.s32.totalorder %s152, %s154
    %p158 = scmp.eq.s32.totalorder %s13, 0
    %p159 = por %p157, %p158
    %p160 = scmp.ne.s32.totalorder %s152, %s154
    %p161 = scmp.eq.s32.totalorder %s18, 1
    %p162 = por %p160, %p161
    %p163 = scmp.ne.s32.totalorder %s154, %s155
    %p164 = scmp.eq.s32.totalorder %s18, 0
    %p165 = por %p163, %p164
    %p166 = scmp.ne.s32.totalorder %s154, %s155
    %p167 = scmp.eq.s32.totalorder %s19, 1
    %p168 = por %p166, %p167
    %p170 = scmp.ne.s32.totalorder %s155, %s169
    %p171 = scmp.eq.s32.totalorder %s19, 0
    %p172 = por %p170, %p171
    %s173 = ssub.s32 %s13, %s20
    %p174 = scmp.eq.s32.totalorder %s173, 0
    %s176 = sadd.s32 %s175, 1
    %s177 = scalar_select %p174, %s175, %s176
    %p180 = pneg %p174
    %p181 = scmp.eq.s32.totalorder %s13, 1
    %p182 = por %p180, %p181
    %p183 = scmp.ne.s32.totalorder %s175, %s178
    %p184 = scmp.eq.s32.totalorder %s13, 0
    %p185 = por %p183, %p184
    %p186 = scmp.ne.s32.totalorder %s175, %s178
    %p187 = scmp.eq.s32.totalorder %s18, 1
    %p188 = por %p186, %p187
    %p189 = scmp.ne.s32.totalorder %s178, %s179
    %p190 = scmp.eq.s32.totalorder %s18, 0
    %p191 = por %p189, %p190
    %p192 = scmp.ne.s32.totalorder %s178, %s179
    %p193 = scmp.eq.s32.totalorder %s19, 1
    %p194 = por %p192, %p193
    %p196 = scmp.ne.s32.totalorder %s179, %s195
    %p197 = scmp.eq.s32.totalorder %s19, 0
    %p198 = por %p196, %p197
    %p199 = scmp.le.s32.totalorder 1, %s13
    %p200 = scmp.lt.s32.totalorder %s13, 3
    %p201 = pnand %p199, %p200
    %p202 = pneg %p201
    // Predicated region
    $region9: #{touchnet_forward.1} parent=5 // pred_check
      _
    $region10: #{touchnet_forward.1} parent=5 // pred_check_branch
      %204 = sbr.rel (%p201) target = $region12
    $region11: #{touchnet_forward.1} parent=5 // pred_region
      %s205 = ssub.s32 %s13, 1
      // Predicated region
      $region13: #{touchnet_forward.1} parent=11 // pred_check
        %p206 = pneg %p60
      $region14: #{touchnet_forward.1} parent=11 // pred_check_branch
        %208 = sbr.rel (%p206) target = $region16
      $region15: #{touchnet_forward.1} parent=11 // pred_region
        _
      $region16: #{touchnet_forward.1} parent=11 // pred_fallthru
        _
      // Predicated region
      $region17: #{touchnet_forward.1} parent=11 // pred_check
        %p209 = pneg %p81
      $region18: #{touchnet_forward.1} parent=11 // pred_check_branch
        %211 = sbr.rel (%p209) target = $region20
      $region19: #{touchnet_forward.1} parent=11 // pred_region
        _
      $region20: #{touchnet_forward.1} parent=11 // pred_fallthru
        _
      // Predicated region
      $region21: #{touchnet_forward.1} parent=11 // pred_check
        %p212 = pneg %p102
      $region22: #{touchnet_forward.1} parent=11 // pred_check_branch
        %214 = sbr.rel (%p212) target = $region24
      $region23: #{touchnet_forward.1} parent=11 // pred_region
        _
      $region24: #{touchnet_forward.1} parent=11 // pred_fallthru
        _
      // Predicated region
      $region25: #{touchnet_forward.1} parent=11 // pred_check
        %p215 = pneg %p123
      $region26: #{touchnet_forward.1} parent=11 // pred_check_branch
        %217 = sbr.rel (%p215) target = $region28
      $region27: #{touchnet_forward.1} parent=11 // pred_region
        _
      $region28: #{touchnet_forward.1} parent=11 // pred_fallthru
        _
      // Predicated region
      $region29: #{touchnet_forward.1} parent=11 // pred_check
        %p218 = pneg %p144
      $region30: #{touchnet_forward.1} parent=11 // pred_check_branch
        %220 = sbr.rel (%p218) target = $region32
      $region31: #{touchnet_forward.1} parent=11 // pred_region
        _
      $region32: #{touchnet_forward.1} parent=11 // pred_fallthru
        _
      // Predicated region
      $region33: #{touchnet_forward.1} parent=11 // pred_check
        %p221 = pneg %p165
      $region34: #{touchnet_forward.1} parent=11 // pred_check_branch
        %223 = sbr.rel (%p221) target = $region36
      $region35: #{touchnet_forward.1} parent=11 // pred_region
        _
      $region36: #{touchnet_forward.1} parent=11 // pred_fallthru
        _
    $region12: #{touchnet_forward.1} parent=5 // pred_fallthru
      _
    %p224 = scmp.lt.s32.totalorder %s13, 2
    // Predicated region
    $region37: #{touchnet_forward.1} parent=5 // pred_check
      %p225 = pneg %p224
    $region38: #{touchnet_forward.1} parent=5 // pred_check_branch
      %227 = sbr.rel (%p225) target = $region40
    $region39: #{touchnet_forward.1} parent=5 // pred_region
      // Predicated region
      $region41: #{touchnet_forward.1} parent=39 // pred_check
        %p228 = pneg %p33
      $region42: #{touchnet_forward.1} parent=39 // pred_check_branch
        %230 = sbr.rel (%p228) target = $region44
      $region43: #{touchnet_forward.1} parent=39 // pred_region
        %p231 = scmp.lt.s32.totalorder %s13, 1
        %s232 = scalar_select %p231, %s13, 1
        %s233 = smul.addr %s232, 20
        %s234 = smul.addr %s233, 8
        %s235 = scalar_lea.vmem %s0, %s234
      $region44: #{touchnet_forward.1} parent=39 // pred_fallthru
        _
    $region40: #{touchnet_forward.1} parent=5 // pred_fallthru
      _
    %p236 = scmp.le.s32.totalorder 1, %s13
    %p237 = scmp.lt.s32.totalorder %s13, 3
    %p238 = pnand %p236, %p237
    %p239 = pneg %p238
    // Predicated region
    $region45: #{touchnet_forward.1} parent=5 // pred_check
      _
    $region46: #{touchnet_forward.1} parent=5 // pred_check_branch
      %241 = sbr.rel (%p238) target = $region48
    $region47: #{touchnet_forward.1} parent=5 // pred_region
      %s242 = ssub.s32 %s13, 1
      %p243 = scmp.lt.s32.totalorder %s18, 1
      %s244 = scalar_select %p243, %s18, 1
      %s245 = smul.addr %s244, 20
      %s246 = smul.addr %s245, 8
      %s247 = scalar_lea.vmem %s0, %s246
      %p248 = pneg %p39
      %p249 = pneg %p36
      %p250 = pneg %p60
      %p251 = pneg %p57
      %p252 = pneg %p81
      %p253 = pneg %p78
      %p254 = pneg %p102
      %p255 = pneg %p99
      %p256 = pneg %p123
      %p257 = pneg %p120
      %p258 = pneg %p144
      %p259 = pneg %p141
      %p260 = pneg %p165
      %p261 = pneg %p162
      %p262 = pneg %p191
      %p263 = pneg %p188
      %p264 = scmp.lt.s32.totalorder %s18, 1
      %s265 = scalar_select %p264, %s18, 1
      %s266 = smul.addr %s265, 16
      %s267 = smul.addr %s266, 8
      %s268 = scalar_lea.vmem %s7, %s267
      %p269 = scmp.lt.s32.totalorder %s18, 1
      %s270 = scalar_select %p269, %s18, 1
      %s271 = smul.addr %s270, 20
      %s272 = smul.addr %s271, 8
      %s273 = scalar_lea.vmem %s0, %s272
      %p274 = scmp.lt.s32.totalorder %s18, 1
      %s275 = scalar_select %p274, %s18, 1
      %s276 = smul.addr %s275, 16
      %s277 = smul.addr %s276, 8
      %s278 = scalar_lea.vmem %s7, %s277
      %v279 = vld [vmem:[%s4] sm:$0xff]
      %v280 = vld [vmem:[%s4 + $0x8] sm:$0xff]
      %v281 = vld [vmem:[%s4 + $0x10] sm:$0xff]
      %v282 = vld [vmem:[%s4 + $0x18] sm:$0xff]
      %v283 = vld [vmem:[%s4 + $0x20] sm:$0xff]
      %v284 = vld [vmem:[%s4 + $0x28] sm:$0xff]
      %v285 = vld [vmem:[%s4 + $0x30] sm:$0xff]
      %v286 = vld [vmem:[%s4 + $0x38] sm:$0xff]
      %v287 = vld [vmem:[%s4 + $0x40] sm:$0xff]
      %v288 = vld [vmem:[%s4 + $0x48] sm:$0xff]
      %v289 = vld [vmem:[%s4 + $0x50] sm:$0xff]
      %v290 = vld [vmem:[%s4 + $0x58] sm:$0xff]
      %v291 = vld [vmem:[%s4 + $0x60] sm:$0xff]
      %v292 = vld [vmem:[%s4 + $0x68] sm:$0xff]
      %v293 = vld [vmem:[%s4 + $0x70] sm:$0xff]
      %v294 = vld [vmem:[%s4 + $0x78] sm:$0xff]
      %v295 = vld [vmem:[%s273] sm:$0xff]
      %v296 = vld [vmem:[%s273 + $0x10] sm:$0x1]
      %v297 = vld [vmem:[%s1] sm:$0xff]
      %v298 = vld [vmem:[%s1 + $0x8] sm:$0xff]
      %v299 = vld [vmem:[%s1 + $0x10] sm:$0xff]
      %v300 = vld [vmem:[%s1 + $0x18] sm:$0xff]
      %v301 = vld [vmem:[%s1 + $0x20] sm:$0xff]
      %v302 = vld [vmem:[%s1 + $0x28] sm:$0xff]
      %v303 = vld [vmem:[%s1 + $0x30] sm:$0xff]
      %v304 = vld [vmem:[%s1 + $0x38] sm:$0xff]
      %v305 = vld [vmem:[%s1 + $0x40] sm:$0xff]
      %v306 = vld [vmem:[%s1 + $0x48] sm:$0xff]
      %v307 = vld [vmem:[%s1 + $0x50] sm:$0xff]
      %v308 = vld [vmem:[%s1 + $0x58] sm:$0xff]
      %v309 = vld [vmem:[%s1 + $0x60] sm:$0xff]
      %v310 = vld [vmem:[%s1 + $0x68] sm:$0xff]
      %v311 = vld [vmem:[%s1 + $0x70] sm:$0xff]
      %v312 = vld [vmem:[%s1 + $0x78] sm:$0xff]
      %v313 = vld [vmem:[%s2] sm:$0xff]
      %v314 = vld [vmem:[%s2 + $0x8] sm:$0xff]
      %v315 = vld [vmem:[%s2 + $0x10] sm:$0xff]
      %v316 = vld [vmem:[%s2 + $0x18] sm:$0xff]
      %v317 = vld [vmem:[%s2 + $0x20] sm:$0xff]
      %v318 = vld [vmem:[%s2 + $0x28] sm:$0xff]
      %v319 = vld [vmem:[%s2 + $0x30] sm:$0xff]
      %v320 = vld [vmem:[%s2 + $0x38] sm:$0xff]
      %v321 = vld [vmem:[%s2 + $0x40] sm:$0xff]
      %v322 = vld [vmem:[%s2 + $0x48] sm:$0xff]
      %v323 = vld [vmem:[%s2 + $0x50] sm:$0xff]
      %v324 = vld [vmem:[%s2 + $0x58] sm:$0xff]
      %v325 = vld [vmem:[%s2 + $0x60] sm:$0xff]
      %v326 = vld [vmem:[%s2 + $0x68] sm:$0xff]
      %v327 = vld [vmem:[%s2 + $0x70] sm:$0xff]
      %v328 = vld [vmem:[%s2 + $0x78] sm:$0xff]
      %330 = vset.pattern.permute.xlu0 0
      %331 = vperm.xlu0 %330, %v313
      %v332 = vpop.permute.xlu0 %331
      %335 = vset.pattern.permute.xlu0 0
      %336 = vperm.xlu0 %335, %v314
      %v337 = vpop.permute.xlu0 %336
      %340 = vset.pattern.permute.xlu0 0
      %341 = vperm.xlu0 %340, %v315
      %v342 = vpop.permute.xlu0 %341
      %345 = vset.pattern.permute.xlu0 0
      %346 = vperm.xlu0 %345, %v316
      %v347 = vpop.permute.xlu0 %346
      %350 = vset.pattern.permute.xlu0 0
      %351 = vperm.xlu0 %350, %v317
      %v352 = vpop.permute.xlu0 %351
      %355 = vset.pattern.permute.xlu0 0
      %356 = vperm.xlu0 %355, %v318
      %v357 = vpop.permute.xlu0 %356
      %360 = vset.pattern.permute.xlu0 0
      %361 = vperm.xlu0 %360, %v319
      %v362 = vpop.permute.xlu0 %361
      %365 = vset.pattern.permute.xlu0 0
      %366 = vperm.xlu0 %365, %v320
      %v367 = vpop.permute.xlu0 %366
      %370 = vset.pattern.permute.xlu0 0
      %371 = vperm.xlu0 %370, %v321
      %v372 = vpop.permute.xlu0 %371
      %375 = vset.pattern.permute.xlu0 0
      %376 = vperm.xlu0 %375, %v322
      %v377 = vpop.permute.xlu0 %376
      %380 = vset.pattern.permute.xlu0 0
      %381 = vperm.xlu0 %380, %v323
      %v382 = vpop.permute.xlu0 %381
      %385 = vset.pattern.permute.xlu0 0
      %386 = vperm.xlu0 %385, %v324
      %v387 = vpop.permute.xlu0 %386
      %390 = vset.pattern.permute.xlu0 0
      %391 = vperm.xlu0 %390, %v325
      %v392 = vpop.permute.xlu0 %391
      %395 = vset.pattern.permute.xlu0 0
      %396 = vperm.xlu0 %395, %v326
      %v397 = vpop.permute.xlu0 %396
      %400 = vset.pattern.permute.xlu0 0
      %401 = vperm.xlu0 %400, %v327
      %v402 = vpop.permute.xlu0 %401
      %405 = vset.pattern.permute.xlu0 0
      %406 = vperm.xlu0 %405, %v328
      %v407 = vpop.permute.xlu0 %406
      %vm409 = vcmask 72704
      %v411 = vsel %vm409, %v297, 0
      %v414 = vsel %vm409, %v298, 0
      %v417 = vsel %vm409, %v299, 0
      %v420 = vsel %vm409, %v300, 0
      %v423 = vsel %vm409, %v301, 0
      %v426 = vsel %vm409, %v302, 0
      %v429 = vsel %vm409, %v303, 0
      %v432 = vsel %vm409, %v304, 0
      %v435 = vsel %vm409, %v305, 0
      %v438 = vsel %vm409, %v306, 0
      %v441 = vsel %vm409, %v307, 0
      %v444 = vsel %vm409, %v308, 0
      %v447 = vsel %vm409, %v309, 0
      %v450 = vsel %vm409, %v310, 0
      %v453 = vsel %vm409, %v311, 0
      %v456 = vsel %vm409, %v312, 0
      %vm458 = vcmask 1040384
      %v460 = vsel %vm458, %v296, 0
      %462 = vmatprep.subr.mxu0 0.0
      %463 = vmatpush1.msra.mxu0 %v295
      %464 = vmatprep.subr.mxu0 0.0
      %465 = vmatpush1.msra.mxu0 %v460
      %466 = vmatprep.subr.mxu0 0.0
      %467 = vmatpush1.msra.mxu0 0.0
      %468 = vmatprep.subr.mxu0 0.0
      %469 = vmatpush1.msra.mxu0 0.0
      %470 = vmatprep.subr.mxu0 0.0
      %471 = vmatpush1.msra.mxu0 0.0
      %472 = vmatprep.subr.mxu0 0.0
      %473 = vmatpush1.msra.mxu0 0.0
      %474 = vmatprep.subr.mxu0 0.0
      %475 = vmatpush1.msra.mxu0 0.0
      %476 = vmatprep.subr.mxu0 0.0
      %477 = vmatpush1.msra.mxu0 0.0
      %478 = vmatprep.subr.mxu0 0.0
      %479 = vmatpush1.msra.mxu0 0.0
      %480 = vmatprep.subr.mxu0 0.0
      %481 = vmatpush1.msra.mxu0 0.0
      %482 = vmatprep.subr.mxu0 0.0
      %483 = vmatpush1.msra.mxu0 0.0
      %484 = vmatprep.subr.mxu0 0.0
      %485 = vmatpush1.msra.mxu0 0.0
      %486 = vmatprep.subr.mxu0 0.0
      %487 = vmatpush1.msra.mxu0 0.0
      %488 = vmatprep.subr.mxu0 0.0
      %489 = vmatpush1.msra.mxu0 0.0
      %490 = vmatprep.subr.mxu0 0.0
      %491 = vmatpush1.msra.mxu0 0.0
      %492 = vmatprep.subr.mxu0 0.0
      %493 = vmatpush1.msra.mxu0 0.0
      %494 = vmatprep.subr.mxu0 0.0
      %495 = vmatpush1.msra.mxu0 0.0
      %496 = vmatprep.subr.mxu0 0.0
      %497 = vmatpush1.msra.mxu0 0.0
      %498 = vmatprep.subr.mxu0 0.0
      %499 = vmatpush1.msra.mxu0 0.0
      %500 = vmatprep.subr.mxu0 0.0
      %501 = vmatpush1.msra.mxu0 0.0
      %502 = vmatprep.subr.mxu0 0.0
      %503 = vmatpush1.msra.mxu0 0.0
      %504 = vmatprep.subr.mxu0 0.0
      %505 = vmatpush1.msra.mxu0 0.0
      %506 = vmatprep.subr.mxu0 0.0
      %507 = vmatpush1.msra.mxu0 0.0
      %508 = vmatprep.subr.mxu0 0.0
      %509 = vmatpush1.msra.mxu0 0.0
      %510 = vmatprep.subr.mxu0 0.0
      %511 = vmatpush1.msra.mxu0 0.0
      %512 = vmatprep.subr.mxu0 0.0
      %513 = vmatpush1.msra.mxu0 0.0
      %514 = vmatprep.subr.mxu0 0.0
      %515 = vmatpush1.msra.mxu0 0.0
      %516 = vmatprep.subr.mxu0 0.0
      %517 = vmatpush1.msra.mxu0 0.0
      %518 = vmatprep.subr.mxu0 0.0
      %519 = vmatpush1.msra.mxu0 0.0
      %520 = vmatprep.subr.mxu0 0.0
      %521 = vmatpush1.msra.mxu0 0.0
      %522 = vmatprep.subr.mxu0 0.0
      %523 = vmatpush1.msra.mxu0 0.0
      %524 = vmatprep.subr.mxu0 0.0
      %525 = vmatpush1.msra.mxu0 0.0
      %526 = vmatprep.mubr.f32.mxu0 0.0
      %527 = vmatmul.mubr.f32.gmra.mrb[0].mxu0 %v411
      %v528 = vpop.f32.mrb[0].mxu0
      %v529 = vadd.f32 %v332, %v528
      %v530 = vpop.f32.mrb[0].mxu0
      %531 = vmatprep.mubr.f32.mxu0 0.0
      %532 = vmatmul.mubr.f32.gmra.mrb[0].mxu0 %v414
      %v533 = vpop.f32.mrb[0].mxu0
      %v534 = vadd.f32 %v337, %v533
      %v535 = vpop.f32.mrb[0].mxu0
      %536 = vmatprep.mubr.f32.mxu0 0.0
      %537 = vmatmul.mubr.f32.gmra.mrb[0].mxu0 %v417
      %v538 = vpop.f32.mrb[0].mxu0
      %v539 = vadd.f32 %v342, %v538
      %v540 = vpop.f32.mrb[0].mxu0
      %541 = vmatprep.mubr.f32.mxu0 0.0
      %542 = vmatmul.mubr.f32.gmra.mrb[0].mxu0 %v420
      %v543 = vpop.f32.mrb[0].mxu0
      %v544 = vadd.f32 %v347, %v543
      %v545 = vpop.f32.mrb[0].mxu0
      %546 = vmatprep.mubr.f32.mxu0 0.0
      %547 = vmatmul.mubr.f32.gmra.mrb[0].mxu0 %v423
      %v548 = vpop.f32.mrb[0].mxu0
      %v549 = vadd.f32 %v352, %v548
      %v550 = vpop.f32.mrb[0].mxu0
      %551 = vmatprep.mubr.f32.mxu0 0.0
      %552 = vmatmul.mubr.f32.gmra.mrb[0].mxu0 %v426
      %v553 = vpop.f32.mrb[0].mxu0
      %v554 = vadd.f32 %v357, %v553
      %v555 = vpop.f32.mrb[0].mxu0
      %556 = vmatprep.mubr.f32.mxu0 0.0
      %557 = vmatmul.mubr.f32.gmra.mrb[0].mxu0 %v429
      %v558 = vpop.f32.mrb[0].mxu0
      %v559 = vadd.f32 %v362, %v558
      %v560 = vpop.f32.mrb[0].mxu0
      %561 = vmatprep.mubr.f32.mxu0 0.0
      %562 = vmatmul.mubr.f32.gmra.mrb[0].mxu0 %v432
      %v563 = vpop.f32.mrb[0].mxu0
      %v564 = vadd.f32 %v367, %v563
      %v565 = vpop.f32.mrb[0].mxu0
      %566 = vmatprep.mubr.f32.mxu0 0.0
      %567 = vmatmul.mubr.f32.gmra.mrb[0].mxu0 %v435
      %v568 = vpop.f32.mrb[0].mxu0
      %v569 = vadd.f32 %v372, %v568
      %v570 = vpop.f32.mrb[0].mxu0
      %571 = vmatprep.mubr.f32.mxu0 0.0
      %572 = vmatmul.mubr.f32.gmra.mrb[0].mxu0 %v438
      %v573 = vpop.f32.mrb[0].mxu0
      %v574 = vadd.f32 %v377, %v573
      %v575 = vpop.f32.mrb[0].mxu0
      %576 = vmatprep.mubr.f32.mxu0 0.0
      %577 = vmatmul.mubr.f32.gmra.mrb[0].mxu0 %v441
      %v578 = vpop.f32.mrb[0].mxu0
      %v579 = vadd.f32 %v382, %v578
      %v580 = vpop.f32.mrb[0].mxu0
      %581 = vmatprep.mubr.f32.mxu0 0.0
      %582 = vmatmul.mubr.f32.gmra.mrb[0].mxu0 %v444
      %v583 = vpop.f32.mrb[0].mxu0
      %v584 = vadd.f32 %v387, %v583
      %v585 = vpop.f32.mrb[0].mxu0
      %586 = vmatprep.mubr.f32.mxu0 0.0
      %587 = vmatmul.mubr.f32.gmra.mrb[0].mxu0 %v447
      %v588 = vpop.f32.mrb[0].mxu0
      %v589 = vadd.f32 %v392, %v588
      %v590 = vpop.f32.mrb[0].mxu0
      %591 = vmatprep.mubr.f32.mxu0 0.0
      %592 = vmatmul.mubr.f32.gmra.mrb[0].mxu0 %v450
      %v593 = vpop.f32.mrb[0].mxu0
      %v594 = vadd.f32 %v397, %v593
      %v595 = vpop.f32.mrb[0].mxu0
      %596 = vmatprep.mubr.f32.mxu0 0.0
      %597 = vmatmul.mubr.f32.gmra.mrb[0].mxu0 %v453
      %v598 = vpop.f32.mrb[0].mxu0
      %v599 = vadd.f32 %v402, %v598
      %v600 = vpop.f32.mrb[0].mxu0
      %601 = vmatprep.mubr.f32.mxu0 0.0
      %602 = vmatmul.mubr.f32.gmra.mrb[0].mxu0 %v456
      %v603 = vpop.f32.mrb[0].mxu0
      %v604 = vadd.f32 %v407, %v603
      %v605 = vpop.f32.mrb[0].mxu0
      %606 = vdwg.mxu0
      %v607 = vmax.f32 %v529, 0.0
      %v608 = vmax.f32 %v534, 0.0
      %v609 = vmax.f32 %v539, 0.0
      %v610 = vmax.f32 %v544, 0.0
      %v611 = vmax.f32 %v549, 0.0
      %v612 = vmax.f32 %v554, 0.0
      %v613 = vmax.f32 %v559, 0.0
      %v614 = vmax.f32 %v564, 0.0
      %v615 = vmax.f32 %v569, 0.0
      %v616 = vmax.f32 %v574, 0.0
      %v617 = vmax.f32 %v579, 0.0
      %v618 = vmax.f32 %v584, 0.0
      %v619 = vmax.f32 %v589, 0.0
      %v620 = vmax.f32 %v594, 0.0
      %v621 = vmax.f32 %v599, 0.0
      %v622 = vmax.f32 %v604, 0.0
      %623 = vadd.xlane.f32.xlu0 %v607
      %v624 = vpop.xlane.xlu0 %623
      %625 = vadd.xlane.f32.xlu0 %v608
      %v626 = vpop.xlane.xlu0 %625
      %627 = vadd.xlane.f32.xlu0 %v609
      %v628 = vpop.xlane.xlu0 %627
      %629 = vadd.xlane.f32.xlu0 %v610
      %v630 = vpop.xlane.xlu0 %629
      %631 = vadd.xlane.f32.xlu0 %v611
      %v632 = vpop.xlane.xlu0 %631
      %633 = vadd.xlane.f32.xlu0 %v612
      %v634 = vpop.xlane.xlu0 %633
      %635 = vadd.xlane.f32.xlu0 %v613
      %v636 = vpop.xlane.xlu0 %635
      %637 = vadd.xlane.f32.xlu0 %v614
      %v638 = vpop.xlane.xlu0 %637
      %639 = vadd.xlane.f32.xlu0 %v615
      %v640 = vpop.xlane.xlu0 %639
      %641 = vadd.xlane.f32.xlu0 %v616
      %v642 = vpop.xlane.xlu0 %641
      %643 = vadd.xlane.f32.xlu0 %v617
      %v644 = vpop.xlane.xlu0 %643
      %645 = vadd.xlane.f32.xlu0 %v618
      %v646 = vpop.xlane.xlu0 %645
      %647 = vadd.xlane.f32.xlu0 %v619
      %v648 = vpop.xlane.xlu0 %647
      %649 = vadd.xlane.f32.xlu0 %v620
      %v650 = vpop.xlane.xlu0 %649
      %651 = vadd.xlane.f32.xlu0 %v621
      %v652 = vpop.xlane.xlu0 %651
      %653 = vadd.xlane.f32.xlu0 %v622
      %v654 = vpop.xlane.xlu0 %653
      %v655 = vadd.f32 %v624, 0.0
      %v656 = vadd.f32 %v626, 0.0
      %v657 = vadd.f32 %v628, 0.0
      %v658 = vadd.f32 %v630, 0.0
      %v659 = vadd.f32 %v632, 0.0
      %v660 = vadd.f32 %v634, 0.0
      %v661 = vadd.f32 %v636, 0.0
      %v662 = vadd.f32 %v638, 0.0
      %v663 = vadd.f32 %v640, 0.0
      %v664 = vadd.f32 %v642, 0.0
      %v665 = vadd.f32 %v644, 0.0
      %v666 = vadd.f32 %v646, 0.0
      %v667 = vadd.f32 %v648, 0.0
      %v668 = vadd.f32 %v650, 0.0
      %v669 = vadd.f32 %v652, 0.0
      %v670 = vadd.f32 %v654, 0.0
      %v671 = vld [vmem:[%s273 + $0x8] sm:$0xff]
      %v672 = vld [vmem:[%s273 + $0x18] sm:$0x1]
      %v674 = vsel %vm458, %v672, 0
      %676 = vmatprep.subr.mxu0 0.0
      %677 = vmatpush1.msra.mxu0 %v671
      %678 = vmatprep.subr.mxu0 0.0
      %679 = vmatpush1.msra.mxu0 %v674
      %680 = vmatprep.subr.mxu0 0.0
      %681 = vmatpush1.msra.mxu0 0.0
      %682 = vmatprep.subr.mxu0 0.0
      %683 = vmatpush1.msra.mxu0 0.0
      %684 = vmatprep.subr.mxu0 0.0
      %685 = vmatpush1.msra.mxu0 0.0
      %686 = vmatprep.subr.mxu0 0.0
      %687 = vmatpush1.msra.mxu0 0.0
      %688 = vmatprep.subr.mxu0 0.0
      %689 = vmatpush1.msra.mxu0 0.0
      %690 = vmatprep.subr.mxu0 0.0
      %691 = vmatpush1.msra.mxu0 0.0
      %692 = vmatprep.subr.mxu0 0.0
      %693 = vmatpush1.msra.mxu0 0.0
      %694 = vmatprep.subr.mxu0 0.0
      %695 = vmatpush1.msra.mxu0 0.0
      %696 = vmatprep.subr.mxu0 0.0
      %697 = vmatpush1.msra.mxu0 0.0
      %698 = vmatprep.subr.mxu0 0.0
      %699 = vmatpush1.msra.mxu0 0.0
      %700 = vmatprep.subr.mxu0 0.0
      %701 = vmatpush1.msra.mxu0 0.0
      %702 = vmatprep.subr.mxu0 0.0
      %703 = vmatpush1.msra.mxu0 0.0
      %704 = vmatprep.subr.mxu0 0.0
      %705 = vmatpush1.msra.mxu0 0.0
      %706 = vmatprep.subr.mxu0 0.0
      %707 = vmatpush1.msra.mxu0 0.0
      %708 = vmatprep.subr.mxu0 0.0
      %709 = vmatpush1.msra.mxu0 0.0
      %710 = vmatprep.subr.mxu0 0.0
      %711 = vmatpush1.msra.mxu0 0.0
      %712 = vmatprep.subr.mxu0 0.0
      %713 = vmatpush1.msra.mxu0 0.0
      %714 = vmatprep.subr.mxu0 0.0
      %715 = vmatpush1.msra.mxu0 0.0
      %716 = vmatprep.subr.mxu0 0.0
      %717 = vmatpush1.msra.mxu0 0.0
      %718 = vmatprep.subr.mxu0 0.0
      %719 = vmatpush1.msra.mxu0 0.0
      %720 = vmatprep.subr.mxu0 0.0
      %721 = vmatpush1.msra.mxu0 0.0
      %722 = vmatprep.subr.mxu0 0.0
      %723 = vmatpush1.msra.mxu0 0.0
      %724 = vmatprep.subr.mxu0 0.0
      %725 = vmatpush1.msra.mxu0 0.0
      %726 = vmatprep.subr.mxu0 0.0
      %727 = vmatpush1.msra.mxu0 0.0
      %728 = vmatprep.subr.mxu0 0.0
      %729 = vmatpush1.msra.mxu0 0.0
      %730 = vmatprep.subr.mxu0 0.0
      %731 = vmatpush1.msra.mxu0 0.0
      %732 = vmatprep.subr.mxu0 0.0
      %733 = vmatpush1.msra.mxu0 0.0
      %734 = vmatprep.subr.mxu0 0.0
      %735 = vmatpush1.msra.mxu0 0.0
      %736 = vmatprep.subr.mxu0 0.0
      %737 = vmatpush1.msra.mxu0 0.0
      %738 = vmatprep.subr.mxu0 0.0
      %739 = vmatpush1.msra.mxu0 0.0
      %740 = vmatprep.mubr.f32.mxu0 0.0
      %741 = vmatmul.mubr.f32.gmra.mrb[0].mxu0 %v411
      %v742 = vpop.f32.mrb[0].mxu0
      %v743 = vadd.f32 %v332, %v742
      %v744 = vpop.f32.mrb[0].mxu0
      %745 = vmatprep.mubr.f32.mxu0 0.0
      %746 = vmatmul.mubr.f32.gmra.mrb[0].mxu0 %v414
      %v747 = vpop.f32.mrb[0].mxu0
      %v748 = vadd.f32 %v337, %v747
      %v749 = vpop.f32.mrb[0].mxu0
      %750 = vmatprep.mubr.f32.mxu0 0.0
      %751 = vmatmul.mubr.f32.gmra.mrb[0].mxu0 %v417
      %v752 = vpop.f32.mrb[0].mxu0
      %v753 = vadd.f32 %v342, %v752
      %v754 = vpop.f32.mrb[0].mxu0
      %755 = vmatprep.mubr.f32.mxu0 0.0
      %756 = vmatmul.mubr.f32.gmra.mrb[0].mxu0 %v420
      %v757 = vpop.f32.mrb[0].mxu0
      %v758 = vadd.f32 %v347, %v757
      %v759 = vpop.f32.mrb[0].mxu0
      %760 = vmatprep.mubr.f32.mxu0 0.0
      %761 = vmatmul.mubr.f32.gmra.mrb[0].mxu0 %v423
      %v762 = vpop.f32.mrb[0].mxu0
      %v763 = vadd.f32 %v352, %v762
      %v764 = vpop.f32.mrb[0].mxu0
      %765 = vmatprep.mubr.f32.mxu0 0.0
      %766 = vmatmul.mubr.f32.gmra.mrb[0].mxu0 %v426
      %v767 = vpop.f32.mrb[0].mxu0
      %v768 = vadd.f32 %v357, %v767
      %v769 = vpop.f32.mrb[0].mxu0
      %770 = vmatprep.mubr.f32.mxu0 0.0
      %771 = vmatmul.mubr.f32.gmra.mrb[0].mxu0 %v429
      %v772 = vpop.f32.mrb[0].mxu0
      %v773 = vadd.f32 %v362, %v772
      %v774 = vpop.f32.mrb[0].mxu0
      %775 = vmatprep.mubr.f32.mxu0 0.0
      %776 = vmatmul.mubr.f32.gmra.mrb[0].mxu0 %v432
      %v777 = vpop.f32.mrb[0].mxu0
      %v778 = vadd.f32 %v367, %v777
      %v779 = vpop.f32.mrb[0].mxu0
      %780 = vmatprep.mubr.f32.mxu0 0.0
      %781 = vmatmul.mubr.f32.gmra.mrb[0].mxu0 %v435
      %v782 = vpop.f32.mrb[0].mxu0
      %v783 = vadd.f32 %v372, %v782
      %v784 = vpop.f32.mrb[0].mxu0
      %785 = vmatprep.mubr.f32.mxu0 0.0
      %786 = vmatmul.mubr.f32.gmra.mrb[0].mxu0 %v438
      %v787 = vpop.f32.mrb[0].mxu0
      %v788 = vadd.f32 %v377, %v787
      %v789 = vpop.f32.mrb[0].mxu0
      %790 = vmatprep.mubr.f32.mxu0 0.0
      %791 = vmatmul.mubr.f32.gmra.mrb[0].mxu0 %v441
      %v792 = vpop.f32.mrb[0].mxu0
      %v793 = vadd.f32 %v382, %v792
      %v794 = vpop.f32.mrb[0].mxu0
      %795 = vmatprep.mubr.f32.mxu0 0.0
      %796 = vmatmul.mubr.f32.gmra.mrb[0].mxu0 %v444
      %v797 = vpop.f32.mrb[0].mxu0
      %v798 = vadd.f32 %v387, %v797
      %v799 = vpop.f32.mrb[0].mxu0
      %800 = vmatprep.mubr.f32.mxu0 0.0
      %801 = vmatmul.mubr.f32.gmra.mrb[0].mxu0 %v447
      %v802 = vpop.f32.mrb[0].mxu0
      %v803 = vadd.f32 %v392, %v802
      %v804 = vpop.f32.mrb[0].mxu0
      %805 = vmatprep.mubr.f32.mxu0 0.0
      %806 = vmatmul.mubr.f32.gmra.mrb[0].mxu0 %v450
      %v807 = vpop.f32.mrb[0].mxu0
      %v808 = vadd.f32 %v397, %v807
      %v809 = vpop.f32.mrb[0].mxu0
      %810 = vmatprep.mubr.f32.mxu0 0.0
      %811 = vmatmul.mubr.f32.gmra.mrb[0].mxu0 %v453
      %v812 = vpop.f32.mrb[0].mxu0
      %v813 = vadd.f32 %v402, %v812
      %v814 = vpop.f32.mrb[0].mxu0
      %815 = vmatprep.mubr.f32.mxu0 0.0
      %816 = vmatmul.mubr.f32.gmra.mrb[0].mxu0 %v456
      %v817 = vpop.f32.mrb[0].mxu0
      %v818 = vadd.f32 %v407, %v817
      %v819 = vpop.f32.mrb[0].mxu0
      %820 = vdwg.mxu0
      %v821 = vmax.f32 %v743, 0.0
      %v822 = vmax.f32 %v748, 0.0
      %v823 = vmax.f32 %v753, 0.0
      %v824 = vmax.f32 %v758, 0.0
      %v825 = vmax.f32 %v763, 0.0
      %v826 = vmax.f32 %v768, 0.0
      %v827 = vmax.f32 %v773, 0.0
      %v828 = vmax.f32 %v778, 0.0
      %v829 = vmax.f32 %v783, 0.0
      %v830 = vmax.f32 %v788, 0.0
      %v831 = vmax.f32 %v793, 0.0
      %v832 = vmax.f32 %v798, 0.0
      %v833 = vmax.f32 %v803, 0.0
      %v834 = vmax.f32 %v808, 0.0
      %v835 = vmax.f32 %v813, 0.0
      %v836 = vmax.f32 %v818, 0.0
      %837 = vadd.xlane.f32.xlu0 %v821
      %v838 = vpop.xlane.xlu0 %837
      %839 = vadd.xlane.f32.xlu0 %v822
      %v840 = vpop.xlane.xlu0 %839
      %841 = vadd.xlane.f32.xlu0 %v823
      %v842 = vpop.xlane.xlu0 %841
      %843 = vadd.xlane.f32.xlu0 %v824
      %v844 = vpop.xlane.xlu0 %843
      %845 = vadd.xlane.f32.xlu0 %v825
      %v846 = vpop.xlane.xlu0 %845
      %847 = vadd.xlane.f32.xlu0 %v826
      %v848 = vpop.xlane.xlu0 %847
      %849 = vadd.xlane.f32.xlu0 %v827
      %v850 = vpop.xlane.xlu0 %849
      %851 = vadd.xlane.f32.xlu0 %v828
      %v852 = vpop.xlane.xlu0 %851
      %853 = vadd.xlane.f32.xlu0 %v829
      %v854 = vpop.xlane.xlu0 %853
      %855 = vadd.xlane.f32.xlu0 %v830
      %v856 = vpop.xlane.xlu0 %855
      %857 = vadd.xlane.f32.xlu0 %v831
      %v858 = vpop.xlane.xlu0 %857
      %859 = vadd.xlane.f32.xlu0 %v832
      %v860 = vpop.xlane.xlu0 %859
      %861 = vadd.xlane.f32.xlu0 %v833
      %v862 = vpop.xlane.xlu0 %861
      %863 = vadd.xlane.f32.xlu0 %v834
      %v864 = vpop.xlane.xlu0 %863
      %865 = vadd.xlane.f32.xlu0 %v835
      %v866 = vpop.xlane.xlu0 %865
      %867 = vadd.xlane.f32.xlu0 %v836
      %v868 = vpop.xlane.xlu0 %867
      %v869 = vadd.f32 %v655, %v838
      %v870 = vadd.f32 %v656, %v840
      %v871 = vadd.f32 %v657, %v842
      %v872 = vadd.f32 %v658, %v844
      %v873 = vadd.f32 %v659, %v846
      %v874 = vadd.f32 %v660, %v848
      %v875 = vadd.f32 %v661, %v850
      %v876 = vadd.f32 %v662, %v852
      %v877 = vadd.f32 %v663, %v854
      %v878 = vadd.f32 %v664, %v856
      %v879 = vadd.f32 %v665, %v858
      %v880 = vadd.f32 %v666, %v860
      %v881 = vadd.f32 %v667, %v862
      %v882 = vadd.f32 %v668, %v864
      %v883 = vadd.f32 %v669, %v866
      %v884 = vadd.f32 %v670, %v868
      %v885 = vld [vmem:[%s3] sm:$0xff]
      %v886 = vld [vmem:[%s3 + $0x28] sm:$0xff]
      %v887 = vld [vmem:[%s3 + $0x50] sm:$0xff]
      %v888 = vld [vmem:[%s3 + $0x78] sm:$0xff]
      %v889 = vld [vmem:[%s3 + $0xa0] sm:$0xff]
      %v890 = vld [vmem:[%s3 + $0xc8] sm:$0xff]
      %v891 = vld [vmem:[%s3 + $0xf0] sm:$0xff]
      %v892 = vld [vmem:[%s3 + $0x118] sm:$0xff]
      %v893 = vld [vmem:[%s3 + $0x140] sm:$0xff]
      %v894 = vld [vmem:[%s3 + $0x168] sm:$0xff]
      %v895 = vld [vmem:[%s3 + $0x190] sm:$0xff]
      %v896 = vld [vmem:[%s3 + $0x1b8] sm:$0xff]
      %v897 = vld [vmem:[%s3 + $0x1e0] sm:$0xff]
      %v898 = vld [vmem:[%s3 + $0x208] sm:$0xff]
      %v899 = vld [vmem:[%s3 + $0x230] sm:$0xff]
      %v900 = vld [vmem:[%s3 + $0x258] sm:$0xff]
      %901 = vmatprep.subr.mxu0 0.0
      %902 = vmatpush1.msra.mxu0 %v869
      %903 = vmatprep.subr.mxu0 0.0
      %904 = vmatpush1.msra.mxu0 %v870
      %905 = vmatprep.subr.mxu0 0.0
      %906 = vmatpush1.msra.mxu0 %v871
      %907 = vmatprep.subr.mxu0 0.0
      %908 = vmatpush1.msra.mxu0 %v872
      %909 = vmatprep.subr.mxu0 0.0
      %910 = vmatpush1.msra.mxu0 %v873
      %911 = vmatprep.subr.mxu0 0.0
      %912 = vmatpush1.msra.mxu0 %v874
      %913 = vmatprep.subr.mxu0 0.0
      %914 = vmatpush1.msra.mxu0 %v875
      %915 = vmatprep.subr.mxu0 0.0
      %916 = vmatpush1.msra.mxu0 %v876
      %917 = vmatprep.subr.mxu0 0.0
      %918 = vmatpush1.msra.mxu0 %v877
      %919 = vmatprep.subr.mxu0 0.0
      %920 = vmatpush1.msra.mxu0 %v878
      %921 = vmatprep.subr.mxu0 0.0
      %922 = vmatpush1.msra.mxu0 %v879
      %923 = vmatprep.subr.mxu0 0.0
      %924 = vmatpush1.msra.mxu0 %v880
      %925 = vmatprep.subr.mxu0 0.0
      %926 = vmatpush1.msra.mxu0 %v881
      %927 = vmatprep.subr.mxu0 0.0
      %928 = vmatpush1.msra.mxu0 %v882
      %929 = vmatprep.subr.mxu0 0.0
      %930 = vmatpush1.msra.mxu0 %v883
      %931 = vmatprep.subr.mxu0 0.0
      %932 = vmatpush1.msra.mxu0 %v884
      %933 = vmatprep.subr.mxu0 0.0
      %934 = vmatpush1.msra.mxu0 0.0
      %935 = vmatprep.subr.mxu0 0.0
      %936 = vmatpush1.msra.mxu0 0.0
      %937 = vmatprep.subr.mxu0 0.0
      %938 = vmatpush1.msra.mxu0 0.0
      %939 = vmatprep.subr.mxu0 0.0
      %940 = vmatpush1.msra.mxu0 0.0
      %941 = vmatprep.subr.mxu0 0.0
      %942 = vmatpush1.msra.mxu0 0.0
      %943 = vmatprep.subr.mxu0 0.0
      %944 = vmatpush1.msra.mxu0 0.0
      %945 = vmatprep.subr.mxu0 0.0
      %946 = vmatpush1.msra.mxu0 0.0
      %947 = vmatprep.subr.mxu0 0.0
      %948 = vmatpush1.msra.mxu0 0.0
      %949 = vmatprep.subr.mxu0 0.0
      %950 = vmatpush1.msra.mxu0 0.0
      %951 = vmatprep.subr.mxu0 0.0
      %952 = vmatpush1.msra.mxu0 0.0
      %953 = vmatprep.subr.mxu0 0.0
      %954 = vmatpush1.msra.mxu0 0.0
      %955 = vmatprep.subr.mxu0 0.0
      %956 = vmatpush1.msra.mxu0 0.0
      %957 = vmatprep.subr.mxu0 0.0
      %958 = vmatpush1.msra.mxu0 0.0
      %959 = vmatprep.subr.mxu0 0.0
      %960 = vmatpush1.msra.mxu0 0.0
      %961 = vmatprep.subr.mxu0 0.0
      %962 = vmatpush1.msra.mxu0 0.0
      %963 = vmatprep.subr.mxu0 0.0
      %964 = vmatpush1.msra.mxu0 0.0
      %965 = vmatprep.mubr.f32.mxu0 0.0
      %966 = vmatmul.mubr.f32.gmra.mrb[0].mxu0 %v885
      %v967 = vpop.f32.mrb[0].mxu0
      %v968 = vadd.f32 0.0, %v967
      %v969 = vpop.f32.mrb[0].mxu0
      %970 = vmatprep.mubr.f32.mxu0 0.0
      %971 = vmatmul.mubr.f32.gmra.mrb[0].mxu0 %v886
      %v972 = vpop.f32.mrb[0].mxu0
      %v973 = vadd.f32 0.0, %v972
      %v974 = vpop.f32.mrb[0].mxu0
      %975 = vmatprep.mubr.f32.mxu0 0.0
      %976 = vmatmul.mubr.f32.gmra.mrb[0].mxu0 %v887
      %v977 = vpop.f32.mrb[0].mxu0
      %v978 = vadd.f32 0.0, %v977
      %v979 = vpop.f32.mrb[0].mxu0
      %980 = vmatprep.mubr.f32.mxu0 0.0
      %981 = vmatmul.mubr.f32.gmra.mrb[0].mxu0 %v888
      %v982 = vpop.f32.mrb[0].mxu0
      %v983 = vadd.f32 0.0, %v982
      %v984 = vpop.f32.mrb[0].mxu0
      %985 = vmatprep.mubr.f32.mxu0 0.0
      %986 = vmatmul.mubr.f32.gmra.mrb[0].mxu0 %v889
      %v987 = vpop.f32.mrb[0].mxu0
      %v988 = vadd.f32 0.0, %v987
      %v989 = vpop.f32.mrb[0].mxu0
      %990 = vmatprep.mubr.f32.mxu0 0.0
      %991 = vmatmul.mubr.f32.gmra.mrb[0].mxu0 %v890
      %v992 = vpop.f32.mrb[0].mxu0
      %v993 = vadd.f32 0.0, %v992
      %v994 = vpop.f32.mrb[0].mxu0
      %995 = vmatprep.mubr.f32.mxu0 0.0
      %996 = vmatmul.mubr.f32.gmra.mrb[0].mxu0 %v891
      %v997 = vpop.f32.mrb[0].mxu0
      %v998 = vadd.f32 0.0, %v997
      %v999 = vpop.f32.mrb[0].mxu0
      %1000 = vmatprep.mubr.f32.mxu0 0.0
      %1001 = vmatmul.mubr.f32.gmra.mrb[0].mxu0 %v892
      %v1002 = vpop.f32.mrb[0].mxu0
      %v1003 = vadd.f32 0.0, %v1002
      %v1004 = vpop.f32.mrb[0].mxu0
      %1005 = vmatprep.mubr.f32.mxu0 0.0
      %1006 = vmatmul.mubr.f32.gmra.mrb[0].mxu0 %v893
      %v1007 = vpop.f32.mrb[0].mxu0
      %v1008 = vadd.f32 0.0, %v1007
      %v1009 = vpop.f32.mrb[0].mxu0
      %1010 = vmatprep.mubr.f32.mxu0 0.0
      %1011 = vmatmul.mubr.f32.gmra.mrb[0].mxu0 %v894
      %v1012 = vpop.f32.mrb[0].mxu0
      %v1013 = vadd.f32 0.0, %v1012
      %v1014 = vpop.f32.mrb[0].mxu0
      %1015 = vmatprep.mubr.f32.mxu0 0.0
      %1016 = vmatmul.mubr.f32.gmra.mrb[0].mxu0 %v895
      %v1017 = vpop.f32.mrb[0].mxu0
      %v1018 = vadd.f32 0.0, %v1017
      %v1019 = vpop.f32.mrb[0].mxu0
      %1020 = vmatprep.mubr.f32.mxu0 0.0
      %1021 = vmatmul.mubr.f32.gmra.mrb[0].mxu0 %v896
      %v1022 = vpop.f32.mrb[0].mxu0
      %v1023 = vadd.f32 0.0, %v1022
      %v1024 = vpop.f32.mrb[0].mxu0
      %1025 = vmatprep.mubr.f32.mxu0 0.0
      %1026 = vmatmul.mubr.f32.gmra.mrb[0].mxu0 %v897
      %v1027 = vpop.f32.mrb[0].mxu0
      %v1028 = vadd.f32 0.0, %v1027
      %v1029 = vpop.f32.mrb[0].mxu0
      %1030 = vmatprep.mubr.f32.mxu0 0.0
      %1031 = vmatmul.mubr.f32.gmra.mrb[0].mxu0 %v898
      %v1032 = vpop.f32.mrb[0].mxu0
      %v1033 = vadd.f32 0.0, %v1032
      %v1034 = vpop.f32.mrb[0].mxu0
      %1035 = vmatprep.mubr.f32.mxu0 0.0
      %1036 = vmatmul.mubr.f32.gmra.mrb[0].mxu0 %v899
      %v1037 = vpop.f32.mrb[0].mxu0
      %v1038 = vadd.f32 0.0, %v1037
      %v1039 = vpop.f32.mrb[0].mxu0
      %1040 = vmatprep.mubr.f32.mxu0 0.0
      %1041 = vmatmul.mubr.f32.gmra.mrb[0].mxu0 %v900
      %v1042 = vpop.f32.mrb[0].mxu0
      %v1043 = vadd.f32 0.0, %v1042
      %v1044 = vpop.f32.mrb[0].mxu0
      %1045 = vdwg.mxu0
      %v1046 = vadd.f32 %v279, %v968
      %v1047 = vadd.f32 %v280, %v973
      %v1048 = vadd.f32 %v281, %v978
      %v1049 = vadd.f32 %v282, %v983
      %v1050 = vadd.f32 %v283, %v988
      %v1051 = vadd.f32 %v284, %v993
      %v1052 = vadd.f32 %v285, %v998
      %v1053 = vadd.f32 %v286, %v1003
      %v1054 = vadd.f32 %v287, %v1008
      %v1055 = vadd.f32 %v288, %v1013
      %v1056 = vadd.f32 %v289, %v1018
      %v1057 = vadd.f32 %v290, %v1023
      %v1058 = vadd.f32 %v291, %v1028
      %v1059 = vadd.f32 %v292, %v1033
      %v1060 = vadd.f32 %v293, %v1038
      %v1061 = vadd.f32 %v294, %v1043
      %s1062 = scalar_lea.vmem %s273, 32
      %v1063 = vld [vmem:[%s1062] sm:$0xff]
      %v1064 = vld [vmem:[%s1062 + $0x10] sm:$0x1]
      %v1066 = vsel %vm458, %v1064, 0
      %1068 = vmatprep.subr.mxu0 0.0
      %1069 = vmatpush1.msra.mxu0 %v1063
      %1070 = vmatprep.subr.mxu0 0.0
      %1071 = vmatpush1.msra.mxu0 %v1066
      %1072 = vmatprep.subr.mxu0 0.0
      %1073 = vmatpush1.msra.mxu0 0.0
      %1074 = vmatprep.subr.mxu0 0.0
      %1075 = vmatpush1.msra.mxu0 0.0
      %1076 = vmatprep.subr.mxu0 0.0
      %1077 = vmatpush1.msra.mxu0 0.0
      %1078 = vmatprep.subr.mxu0 0.0
      %1079 = vmatpush1.msra.mxu0 0.0
      %1080 = vmatprep.subr.mxu0 0.0
      %1081 = vmatpush1.msra.mxu0 0.0
      %1082 = vmatprep.subr.mxu0 0.0
      %1083 = vmatpush1.msra.mxu0 0.0
      %1084 = vmatprep.subr.mxu0 0.0
      %1085 = vmatpush1.msra.mxu0 0.0
      %1086 = vmatprep.subr.mxu0 0.0
      %1087 = vmatpush1.msra.mxu0 0.0
      %1088 = vmatprep.subr.mxu0 0.0
      %1089 = vmatpush1.msra.mxu0 0.0
      %1090 = vmatprep.subr.mxu0 0.0
      %1091 = vmatpush1.msra.mxu0 0.0
      %1092 = vmatprep.subr.mxu0 0.0
      %1093 = vmatpush1.msra.mxu0 0.0
      %1094 = vmatprep.subr.mxu0 0.0
      %1095 = vmatpush1.msra.mxu0 0.0
      %1096 = vmatprep.subr.mxu0 0.0
      %1097 = vmatpush1.msra.mxu0 0.0
      %1098 = vmatprep.subr.mxu0 0.0
      %1099 = vmatpush1.msra.mxu0 0.0
      %1100 = vmatprep.subr.mxu0 0.0
      %1101 = vmatpush1.msra.mxu0 0.0
      %1102 = vmatprep.subr.mxu0 0.0
      %1103 = vmatpush1.msra.mxu0 0.0
      %1104 = vmatprep.subr.mxu0 0.0
      %1105 = vmatpush1.msra.mxu0 0.0
      %1106 = vmatprep.subr.mxu0 0.0
      %1107 = vmatpush1.msra.mxu0 0.0
      %1108 = vmatprep.subr.mxu0 0.0
      %1109 = vmatpush1.msra.mxu0 0.0
      %1110 = vmatprep.subr.mxu0 0.0
      %1111 = vmatpush1.msra.mxu0 0.0
      %1112 = vmatprep.subr.mxu0 0.0
      %1113 = vmatpush1.msra.mxu0 0.0
      %1114 = vmatprep.subr.mxu0 0.0
      %1115 = vmatpush1.msra.mxu0 0.0
      %1116 = vmatprep.subr.mxu0 0.0
      %1117 = vmatpush1.msra.mxu0 0.0
      %1118 = vmatprep.subr.mxu0 0.0
      %1119 = vmatpush1.msra.mxu0 0.0
      %1120 = vmatprep.subr.mxu0 0.0
      %1121 = vmatpush1.msra.mxu0 0.0
      %1122 = vmatprep.subr.mxu0 0.0
      %1123 = vmatpush1.msra.mxu0 0.0
      %1124 = vmatprep.subr.mxu0 0.0
      %1125 = vmatpush1.msra.mxu0 0.0
      %1126 = vmatprep.subr.mxu0 0.0
      %1127 = vmatpush1.msra.mxu0 0.0
      %1128 = vmatprep.subr.mxu0 0.0
      %1129 = vmatpush1.msra.mxu0 0.0
      %1130 = vmatprep.subr.mxu0 0.0
      %1131 = vmatpush1.msra.mxu0 0.0
      %1132 = vmatprep.mubr.f32.mxu0 0.0
      %1133 = vmatmul.mubr.f32.gmra.mrb[0].mxu0 %v411
      %v1134 = vpop.f32.mrb[0].mxu0
      %v1135 = vadd.f32 %v332, %v1134
      %v1136 = vpop.f32.mrb[0].mxu0
      %1137 = vmatprep.mubr.f32.mxu0 0.0
      %1138 = vmatmul.mubr.f32.gmra.mrb[0].mxu0 %v414
      %v1139 = vpop.f32.mrb[0].mxu0
      %v1140 = vadd.f32 %v337, %v1139
      %v1141 = vpop.f32.mrb[0].mxu0
      %1142 = vmatprep.mubr.f32.mxu0 0.0
      %1143 = vmatmul.mubr.f32.gmra.mrb[0].mxu0 %v417
      %v1144 = vpop.f32.mrb[0].mxu0
      %v1145 = vadd.f32 %v342, %v1144
      %v1146 = vpop.f32.mrb[0].mxu0
      %1147 = vmatprep.mubr.f32.mxu0 0.0
      %1148 = vmatmul.mubr.f32.gmra.mrb[0].mxu0 %v420
      %v1149 = vpop.f32.mrb[0].mxu0
      %v1150 = vadd.f32 %v347, %v1149
      %v1151 = vpop.f32.mrb[0].mxu0
      %1152 = vmatprep.mubr.f32.mxu0 0.0
      %1153 = vmatmul.mubr.f32.gmra.mrb[0].mxu0 %v423
      %v1154 = vpop.f32.mrb[0].mxu0
      %v1155 = vadd.f32 %v352, %v1154
      %v1156 = vpop.f32.mrb[0].mxu0
      %1157 = vmatprep.mubr.f32.mxu0 0.0
      %1158 = vmatmul.mubr.f32.gmra.mrb[0].mxu0 %v426
      %v1159 = vpop.f32.mrb[0].mxu0
      %v1160 = vadd.f32 %v357, %v1159
      %v1161 = vpop.f32.mrb[0].mxu0
      %1162 = vmatprep.mubr.f32.mxu0 0.0
      %1163 = vmatmul.mubr.f32.gmra.mrb[0].mxu0 %v429
      %v1164 = vpop.f32.mrb[0].mxu0
      %v1165 = vadd.f32 %v362, %v1164
      %v1166 = vpop.f32.mrb[0].mxu0
      %1167 = vmatprep.mubr.f32.mxu0 0.0
      %1168 = vmatmul.mubr.f32.gmra.mrb[0].mxu0 %v432
      %v1169 = vpop.f32.mrb[0].mxu0
      %v1170 = vadd.f32 %v367, %v1169
      %v1171 = vpop.f32.mrb[0].mxu0
      %1172 = vmatprep.mubr.f32.mxu0 0.0
      %1173 = vmatmul.mubr.f32.gmra.mrb[0].mxu0 %v435
      %v1174 = vpop.f32.mrb[0].mxu0
      %v1175 = vadd.f32 %v372, %v1174
      %v1176 = vpop.f32.mrb[0].mxu0
      %1177 = vmatprep.mubr.f32.mxu0 0.0
      %1178 = vmatmul.mubr.f32.gmra.mrb[0].mxu0 %v438
      %v1179 = vpop.f32.mrb[0].mxu0
      %v1180 = vadd.f32 %v377, %v1179
      %v1181 = vpop.f32.mrb[0].mxu0
      %1182 = vmatprep.mubr.f32.mxu0 0.0
      %1183 = vmatmul.mubr.f32.gmra.mrb[0].mxu0 %v441
      %v1184 = vpop.f32.mrb[0].mxu0
      %v1185 = vadd.f32 %v382, %v1184
      %v1186 = vpop.f32.mrb[0].mxu0
      %1187 = vmatprep.mubr.f32.mxu0 0.0
      %1188 = vmatmul.mubr.f32.gmra.mrb[0].mxu0 %v444
      %v1189 = vpop.f32.mrb[0].mxu0
      %v1190 = vadd.f32 %v387, %v1189
      %v1191 = vpop.f32.mrb[0].mxu0
      %1192 = vmatprep.mubr.f32.mxu0 0.0
      %1193 = vmatmul.mubr.f32.gmra.mrb[0].mxu0 %v447
      %v1194 = vpop.f32.mrb[0].mxu0
      %v1195 = vadd.f32 %v392, %v1194
      %v1196 = vpop.f32.mrb[0].mxu0
      %1197 = vmatprep.mubr.f32.mxu0 0.0
      %1198 = vmatmul.mubr.f32.gmra.mrb[0].mxu0 %v450
      %v1199 = vpop.f32.mrb[0].mxu0
      %v1200 = vadd.f32 %v397, %v1199
      %v1201 = vpop.f32.mrb[0].mxu0
      %1202 = vmatprep.mubr.f32.mxu0 0.0
      %1203 = vmatmul.mubr.f32.gmra.mrb[0].mxu0 %v453
      %v1204 = vpop.f32.mrb[0].mxu0
      %v1205 = vadd.f32 %v402, %v1204
      %v1206 = vpop.f32.mrb[0].mxu0
      %1207 = vmatprep.mubr.f32.mxu0 0.0
      %1208 = vmatmul.mubr.f32.gmra.mrb[0].mxu0 %v456
      %v1209 = vpop.f32.mrb[0].mxu0
      %v1210 = vadd.f32 %v407, %v1209
      %v1211 = vpop.f32.mrb[0].mxu0
      %1212 = vdwg.mxu0
      %v1213 = vmax.f32 %v1135, 0.0
      %v1214 = vmax.f32 %v1140, 0.0
      %v1215 = vmax.f32 %v1145, 0.0
      %v1216 = vmax.f32 %v1150, 0.0
      %v1217 = vmax.f32 %v1155, 0.0
      %v1218 = vmax.f32 %v1160, 0.0
      %v1219 = vmax.f32 %v1165, 0.0
      %v1220 = vmax.f32 %v1170, 0.0
      %v1221 = vmax.f32 %v1175, 0.0
      %v1222 = vmax.f32 %v1180, 0.0
      %v1223 = vmax.f32 %v1185, 0.0
      %v1224 = vmax.f32 %v1190, 0.0
      %v1225 = vmax.f32 %v1195, 0.0
      %v1226 = vmax.f32 %v1200, 0.0
      %v1227 = vmax.f32 %v1205, 0.0
      %v1228 = vmax.f32 %v1210, 0.0
      %1229 = vadd.xlane.f32.xlu0 %v1213
      %v1230 = vpop.xlane.xlu0 %1229
      %1231 = vadd.xlane.f32.xlu0 %v1214
      %v1232 = vpop.xlane.xlu0 %1231
      %1233 = vadd.xlane.f32.xlu0 %v1215
      %v1234 = vpop.xlane.xlu0 %1233
      %1235 = vadd.xlane.f32.xlu0 %v1216
      %v1236 = vpop.xlane.xlu0 %1235
      %1237 = vadd.xlane.f32.xlu0 %v1217
      %v1238 = vpop.xlane.xlu0 %1237
      %1239 = vadd.xlane.f32.xlu0 %v1218
      %v1240 = vpop.xlane.xlu0 %1239
      %1241 = vadd.xlane.f32.xlu0 %v1219
      %v1242 = vpop.xlane.xlu0 %1241
      %1243 = vadd.xlane.f32.xlu0 %v1220
      %v1244 = vpop.xlane.xlu0 %1243
      %1245 = vadd.xlane.f32.xlu0 %v1221
      %v1246 = vpop.xlane.xlu0 %1245
      %1247 = vadd.xlane.f32.xlu0 %v1222
      %v1248 = vpop.xlane.xlu0 %1247
      %1249 = vadd.xlane.f32.xlu0 %v1223
      %v1250 = vpop.xlane.xlu0 %1249
      %1251 = vadd.xlane.f32.xlu0 %v1224
      %v1252 = vpop.xlane.xlu0 %1251
      %1253 = vadd.xlane.f32.xlu0 %v1225
      %v1254 = vpop.xlane.xlu0 %1253
      %1255 = vadd.xlane.f32.xlu0 %v1226
      %v1256 = vpop.xlane.xlu0 %1255
      %1257 = vadd.xlane.f32.xlu0 %v1227
      %v1258 = vpop.xlane.xlu0 %1257
      %1259 = vadd.xlane.f32.xlu0 %v1228
      %v1260 = vpop.xlane.xlu0 %1259
      %v1261 = vadd.f32 %v1230, 0.0
      %v1262 = vadd.f32 %v1232, 0.0
      %v1263 = vadd.f32 %v1234, 0.0
      %v1264 = vadd.f32 %v1236, 0.0
      %v1265 = vadd.f32 %v1238, 0.0
      %v1266 = vadd.f32 %v1240, 0.0
      %v1267 = vadd.f32 %v1242, 0.0
      %v1268 = vadd.f32 %v1244, 0.0
      %v1269 = vadd.f32 %v1246, 0.0
      %v1270 = vadd.f32 %v1248, 0.0
      %v1271 = vadd.f32 %v1250, 0.0
      %v1272 = vadd.f32 %v1252, 0.0
      %v1273 = vadd.f32 %v1254, 0.0
      %v1274 = vadd.f32 %v1256, 0.0
      %v1275 = vadd.f32 %v1258, 0.0
      %v1276 = vadd.f32 %v1260, 0.0
      %v1277 = vld [vmem:[%s1062 + $0x8] sm:$0xff]
      %v1278 = vld [vmem:[%s1062 + $0x18] sm:$0x1]
      %v1280 = vsel %vm458, %v1278, 0
      %1282 = vmatprep.subr.mxu0 0.0
      %1283 = vmatpush1.msra.mxu0 %v1277
      %1284 = vmatprep.subr.mxu0 0.0
      %1285 = vmatpush1.msra.mxu0 %v1280
      %1286 = vmatprep.subr.mxu0 0.0
      %1287 = vmatpush1.msra.mxu0 0.0
      %1288 = vmatprep.subr.mxu0 0.0
      %1289 = vmatpush1.msra.mxu0 0.0
      %1290 = vmatprep.subr.mxu0 0.0
      %1291 = vmatpush1.msra.mxu0 0.0
      %1292 = vmatprep.subr.mxu0 0.0
      %1293 = vmatpush1.msra.mxu0 0.0
      %1294 = vmatprep.subr.mxu0 0.0
      %1295 = vmatpush1.msra.mxu0 0.0
      %1296 = vmatprep.subr.mxu0 0.0
      %1297 = vmatpush1.msra.mxu0 0.0
      %1298 = vmatprep.subr.mxu0 0.0
      %1299 = vmatpush1.msra.mxu0 0.0
      %1300 = vmatprep.subr.mxu0 0.0
      %1301 = vmatpush1.msra.mxu0 0.0
      %1302 = vmatprep.subr.mxu0 0.0
      %1303 = vmatpush1.msra.mxu0 0.0
      %1304 = vmatprep.subr.mxu0 0.0
      %1305 = vmatpush1.msra.mxu0 0.0
      %1306 = vmatprep.subr.mxu0 0.0
      %1307 = vmatpush1.msra.mxu0 0.0
      %1308 = vmatprep.subr.mxu0 0.0
      %1309 = vmatpush1.msra.mxu0 0.0
      %1310 = vmatprep.subr.mxu0 0.0
      %1311 = vmatpush1.msra.mxu0 0.0
      %1312 = vmatprep.subr.mxu0 0.0
      %1313 = vmatpush1.msra.mxu0 0.0
      %1314 = vmatprep.subr.mxu0 0.0
      %1315 = vmatpush1.msra.mxu0 0.0
      %1316 = vmatprep.subr.mxu0 0.0
      %1317 = vmatpush1.msra.mxu0 0.0
      %1318 = vmatprep.subr.mxu0 0.0
      %1319 = vmatpush1.msra.mxu0 0.0
      %1320 = vmatprep.subr.mxu0 0.0
      %1321 = vmatpush1.msra.mxu0 0.0
      %1322 = vmatprep.subr.mxu0 0.0
      %1323 = vmatpush1.msra.mxu0 0.0
      %1324 = vmatprep.subr.mxu0 0.0
      %1325 = vmatpush1.msra.mxu0 0.0
      %1326 = vmatprep.subr.mxu0 0.0
      %1327 = vmatpush1.msra.mxu0 0.0
      %1328 = vmatprep.subr.mxu0 0.0
      %1329 = vmatpush1.msra.mxu0 0.0
      %1330 = vmatprep.subr.mxu0 0.0
      %1331 = vmatpush1.msra.mxu0 0.0
      %1332 = vmatprep.subr.mxu0 0.0
      %1333 = vmatpush1.msra.mxu0 0.0
      %1334 = vmatprep.subr.mxu0 0.0
      %1335 = vmatpush1.msra.mxu0 0.0
      %1336 = vmatprep.subr.mxu0 0.0
      %1337 = vmatpush1.msra.mxu0 0.0
      %1338 = vmatprep.subr.mxu0 0.0
      %1339 = vmatpush1.msra.mxu0 0.0
      %1340 = vmatprep.subr.mxu0 0.0
      %1341 = vmatpush1.msra.mxu0 0.0
      %1342 = vmatprep.subr.mxu0 0.0
      %1343 = vmatpush1.msra.mxu0 0.0
      %1344 = vmatprep.subr.mxu0 0.0
      %1345 = vmatpush1.msra.mxu0 0.0
      %1346 = vmatprep.mubr.f32.mxu0 0.0
      %1347 = vmatmul.mubr.f32.gmra.mrb[0].mxu0 %v411
      %v1348 = vpop.f32.mrb[0].mxu0
      %v1349 = vadd.f32 %v332, %v1348
      %v1350 = vpop.f32.mrb[0].mxu0
      %1351 = vmatprep.mubr.f32.mxu0 0.0
      %1352 = vmatmul.mubr.f32.gmra.mrb[0].mxu0 %v414
      %v1353 = vpop.f32.mrb[0].mxu0
      %v1354 = vadd.f32 %v337, %v1353
      %v1355 = vpop.f32.mrb[0].mxu0
      %1356 = vmatprep.mubr.f32.mxu0 0.0
      %1357 = vmatmul.mubr.f32.gmra.mrb[0].mxu0 %v417
      %v1358 = vpop.f32.mrb[0].mxu0
      %v1359 = vadd.f32 %v342, %v1358
      %v1360 = vpop.f32.mrb[0].mxu0
      %1361 = vmatprep.mubr.f32.mxu0 0.0
      %1362 = vmatmul.mubr.f32.gmra.mrb[0].mxu0 %v420
      %v1363 = vpop.f32.mrb[0].mxu0
      %v1364 = vadd.f32 %v347, %v1363
      %v1365 = vpop.f32.mrb[0].mxu0
      %1366 = vmatprep.mubr.f32.mxu0 0.0
      %1367 = vmatmul.mubr.f32.gmra.mrb[0].mxu0 %v423
      %v1368 = vpop.f32.mrb[0].mxu0
      %v1369 = vadd.f32 %v352, %v1368
      %v1370 = vpop.f32.mrb[0].mxu0
      %1371 = vmatprep.mubr.f32.mxu0 0.0
      %1372 = vmatmul.mubr.f32.gmra.mrb[0].mxu0 %v426
      %v1373 = vpop.f32.mrb[0].mxu0
      %v1374 = vadd.f32 %v357, %v1373
      %v1375 = vpop.f32.mrb[0].mxu0
      %1376 = vmatprep.mubr.f32.mxu0 0.0
      %1377 = vmatmul.mubr.f32.gmra.mrb[0].mxu0 %v429
      %v1378 = vpop.f32.mrb[0].mxu0
      %v1379 = vadd.f32 %v362, %v1378
      %v1380 = vpop.f32.mrb[0].mxu0
      %1381 = vmatprep.mubr.f32.mxu0 0.0
      %1382 = vmatmul.mubr.f32.gmra.mrb[0].mxu0 %v432
      %v1383 = vpop.f32.mrb[0].mxu0
      %v1384 = vadd.f32 %v367, %v1383
      %v1385 = vpop.f32.mrb[0].mxu0
      %1386 = vmatprep.mubr.f32.mxu0 0.0
      %1387 = vmatmul.mubr.f32.gmra.mrb[0].mxu0 %v435
      %v1388 = vpop.f32.mrb[0].mxu0
      %v1389 = vadd.f32 %v372, %v1388
      %v1390 = vpop.f32.mrb[0].mxu0
      %1391 = vmatprep.mubr.f32.mxu0 0.0
      %1392 = vmatmul.mubr.f32.gmra.mrb[0].mxu0 %v438
      %v1393 = vpop.f32.mrb[0].mxu0
      %v1394 = vadd.f32 %v377, %v1393
      %v1395 = vpop.f32.mrb[0].mxu0
      %1396 = vmatprep.mubr.f32.mxu0 0.0
      %1397 = vmatmul.mubr.f32.gmra.mrb[0].mxu0 %v441
      %v1398 = vpop.f32.mrb[0].mxu0
      %v1399 = vadd.f32 %v382, %v1398
      %v1400 = vpop.f32.mrb[0].mxu0
      %1401 = vmatprep.mubr.f32.mxu0 0.0
      %1402 = vmatmul.mubr.f32.gmra.mrb[0].mxu0 %v444
      %v1403 = vpop.f32.mrb[0].mxu0
      %v1404 = vadd.f32 %v387, %v1403
      %v1405 = vpop.f32.mrb[0].mxu0
      %1406 = vmatprep.mubr.f32.mxu0 0.0
      %1407 = vmatmul.mubr.f32.gmra.mrb[0].mxu0 %v447
      %v1408 = vpop.f32.mrb[0].mxu0
      %v1409 = vadd.f32 %v392, %v1408
      %v1410 = vpop.f32.mrb[0].mxu0
      %1411 = vmatprep.mubr.f32.mxu0 0.0
      %1412 = vmatmul.mubr.f32.gmra.mrb[0].mxu0 %v450
      %v1413 = vpop.f32.mrb[0].mxu0
      %v1414 = vadd.f32 %v397, %v1413
      %v1415 = vpop.f32.mrb[0].mxu0
      %1416 = vmatprep.mubr.f32.mxu0 0.0
      %1417 = vmatmul.mubr.f32.gmra.mrb[0].mxu0 %v453
      %v1418 = vpop.f32.mrb[0].mxu0
      %v1419 = vadd.f32 %v402, %v1418
      %v1420 = vpop.f32.mrb[0].mxu0
      %1421 = vmatprep.mubr.f32.mxu0 0.0
      %1422 = vmatmul.mubr.f32.gmra.mrb[0].mxu0 %v456
      %v1423 = vpop.f32.mrb[0].mxu0
      %v1424 = vadd.f32 %v407, %v1423
      %v1425 = vpop.f32.mrb[0].mxu0
      %1426 = vdwg.mxu0
      %v1427 = vmax.f32 %v1349, 0.0
      %v1428 = vmax.f32 %v1354, 0.0
      %v1429 = vmax.f32 %v1359, 0.0
      %v1430 = vmax.f32 %v1364, 0.0
      %v1431 = vmax.f32 %v1369, 0.0
      %v1432 = vmax.f32 %v1374, 0.0
      %v1433 = vmax.f32 %v1379, 0.0
      %v1434 = vmax.f32 %v1384, 0.0
      %v1435 = vmax.f32 %v1389, 0.0
      %v1436 = vmax.f32 %v1394, 0.0
      %v1437 = vmax.f32 %v1399, 0.0
      %v1438 = vmax.f32 %v1404, 0.0
      %v1439 = vmax.f32 %v1409, 0.0
      %v1440 = vmax.f32 %v1414, 0.0
      %v1441 = vmax.f32 %v1419, 0.0
      %v1442 = vmax.f32 %v1424, 0.0
      %1443 = vadd.xlane.f32.xlu0 %v1427
      %v1444 = vpop.xlane.xlu0 %1443
      %1445 = vadd.xlane.f32.xlu0 %v1428
      %v1446 = vpop.xlane.xlu0 %1445
      %1447 = vadd.xlane.f32.xlu0 %v1429
      %v1448 = vpop.xlane.xlu0 %1447
      %1449 = vadd.xlane.f32.xlu0 %v1430
      %v1450 = vpop.xlane.xlu0 %1449
      %1451 = vadd.xlane.f32.xlu0 %v1431
      %v1452 = vpop.xlane.xlu0 %1451
      %1453 = vadd.xlane.f32.xlu0 %v1432
      %v1454 = vpop.xlane.xlu0 %1453
      %1455 = vadd.xlane.f32.xlu0 %v1433
      %v1456 = vpop.xlane.xlu0 %1455
      %1457 = vadd.xlane.f32.xlu0 %v1434
      %v1458 = vpop.xlane.xlu0 %1457
      %1459 = vadd.xlane.f32.xlu0 %v1435
      %v1460 = vpop.xlane.xlu0 %1459
      %1461 = vadd.xlane.f32.xlu0 %v1436
      %v1462 = vpop.xlane.xlu0 %1461
      %1463 = vadd.xlane.f32.xlu0 %v1437
      %v1464 = vpop.xlane.xlu0 %1463
      %1465 = vadd.xlane.f32.xlu0 %v1438
      %v1466 = vpop.xlane.xlu0 %1465
      %1467 = vadd.xlane.f32.xlu0 %v1439
      %v1468 = vpop.xlane.xlu0 %1467
      %1469 = vadd.xlane.f32.xlu0 %v1440
      %v1470 = vpop.xlane.xlu0 %1469
      %1471 = vadd.xlane.f32.xlu0 %v1441
      %v1472 = vpop.xlane.xlu0 %1471
      %1473 = vadd.xlane.f32.xlu0 %v1442
      %v1474 = vpop.xlane.xlu0 %1473
      %v1475 = vadd.f32 %v1261, %v1444
      %v1476 = vadd.f32 %v1262, %v1446
      %v1477 = vadd.f32 %v1263, %v1448
      %v1478 = vadd.f32 %v1264, %v1450
      %v1479 = vadd.f32 %v1265, %v1452
      %v1480 = vadd.f32 %v1266, %v1454
      %v1481 = vadd.f32 %v1267, %v1456
      %v1482 = vadd.f32 %v1268, %v1458
      %v1483 = vadd.f32 %v1269, %v1460
      %v1484 = vadd.f32 %v1270, %v1462
      %v1485 = vadd.f32 %v1271, %v1464
      %v1486 = vadd.f32 %v1272, %v1466
      %v1487 = vadd.f32 %v1273, %v1468
      %v1488 = vadd.f32 %v1274, %v1470
      %v1489 = vadd.f32 %v1275, %v1472
      %v1490 = vadd.f32 %v1276, %v1474
      %v1491 = vld [vmem:[%s3 + $0x8] sm:$0xff]
      %v1492 = vld [vmem:[%s3 + $0x30] sm:$0xff]
      %v1493 = vld [vmem:[%s3 + $0x58] sm:$0xff]
      %v1494 = vld [vmem:[%s3 + $0x80] sm:$0xff]
      %v1495 = vld [vmem:[%s3 + $0xa8] sm:$0xff]
      %v1496 = vld [vmem:[%s3 + $0xd0] sm:$0xff]
      %v1497 = vld [vmem:[%s3 + $0xf8] sm:$0xff]
      %v1498 = vld [vmem:[%s3 + $0x120] sm:$0xff]
      %v1499 = vld [vmem:[%s3 + $0x148] sm:$0xff]
      %v1500 = vld [vmem:[%s3 + $0x170] sm:$0xff]
      %v1501 = vld [vmem:[%s3 + $0x198] sm:$0xff]
      %v1502 = vld [vmem:[%s3 + $0x1c0] sm:$0xff]
      %v1503 = vld [vmem:[%s3 + $0x1e8] sm:$0xff]
      %v1504 = vld [vmem:[%s3 + $0x210] sm:$0xff]
      %v1505 = vld [vmem:[%s3 + $0x238] sm:$0xff]
      %v1506 = vld [vmem:[%s3 + $0x260] sm:$0xff]
      %1507 = vmatprep.subr.mxu0 0.0
      %1508 = vmatpush1.msra.mxu0 %v1475
      %1509 = vmatprep.subr.mxu0 0.0
      %1510 = vmatpush1.msra.mxu0 %v1476
      %1511 = vmatprep.subr.mxu0 0.0
      %1512 = vmatpush1.msra.mxu0 %v1477
      %1513 = vmatprep.subr.mxu0 0.0
      %1514 = vmatpush1.msra.mxu0 %v1478
      %1515 = vmatprep.subr.mxu0 0.0
      %1516 = vmatpush1.msra.mxu0 %v1479
      %1517 = vmatprep.subr.mxu0 0.0
      %1518 = vmatpush1.msra.mxu0 %v1480
      %1519 = vmatprep.subr.mxu0 0.0
      %1520 = vmatpush1.msra.mxu0 %v1481
      %1521 = vmatprep.subr.mxu0 0.0
      %1522 = vmatpush1.msra.mxu0 %v1482
      %1523 = vmatprep.subr.mxu0 0.0
      %1524 = vmatpush1.msra.mxu0 %v1483
      %1525 = vmatprep.subr.mxu0 0.0
      %1526 = vmatpush1.msra.mxu0 %v1484
      %1527 = vmatprep.subr.mxu0 0.0
      %1528 = vmatpush1.msra.mxu0 %v1485
      %1529 = vmatprep.subr.mxu0 0.0
      %1530 = vmatpush1.msra.mxu0 %v1486
      %1531 = vmatprep.subr.mxu0 0.0
      %1532 = vmatpush1.msra.mxu0 %v1487
      %1533 = vmatprep.subr.mxu0 0.0
      %1534 = vmatpush1.msra.mxu0 %v1488
      %1535 = vmatprep.subr.mxu0 0.0
      %1536 = vmatpush1.msra.mxu0 %v1489
      %1537 = vmatprep.subr.mxu0 0.0
      %1538 = vmatpush1.msra.mxu0 %v1490
      %1539 = vmatprep.subr.mxu0 0.0
      %1540 = vmatpush1.msra.mxu0 0.0
      %1541 = vmatprep.subr.mxu0 0.0
      %1542 = vmatpush1.msra.mxu0 0.0
      %1543 = vmatprep.subr.mxu0 0.0
      %1544 = vmatpush1.msra.mxu0 0.0
      %1545 = vmatprep.subr.mxu0 0.0
      %1546 = vmatpush1.msra.mxu0 0.0
      %1547 = vmatprep.subr.mxu0 0.0
      %1548 = vmatpush1.msra.mxu0 0.0
      %1549 = vmatprep.subr.mxu0 0.0
      %1550 = vmatpush1.msra.mxu0 0.0
      %1551 = vmatprep.subr.mxu0 0.0
      %1552 = vmatpush1.msra.mxu0 0.0
      %1553 = vmatprep.subr.mxu0 0.0
      %1554 = vmatpush1.msra.mxu0 0.0
      %1555 = vmatprep.subr.mxu0 0.0
      %1556 = vmatpush1.msra.mxu0 0.0
      %1557 = vmatprep.subr.mxu0 0.0
      %1558 = vmatpush1.msra.mxu0 0.0
      %1559 = vmatprep.subr.mxu0 0.0
      %1560 = vmatpush1.msra.mxu0 0.0
      %1561 = vmatprep.subr.mxu0 0.0
      %1562 = vmatpush1.msra.mxu0 0.0
      %1563 = vmatprep.subr.mxu0 0.0
      %1564 = vmatpush1.msra.mxu0 0.0
      %1565 = vmatprep.subr.mxu0 0.0
      %1566 = vmatpush1.msra.mxu0 0.0
      %1567 = vmatprep.subr.mxu0 0.0
      %1568 = vmatpush1.msra.mxu0 0.0
      %1569 = vmatprep.subr.mxu0 0.0
      %1570 = vmatpush1.msra.mxu0 0.0
      %1571 = vmatprep.mubr.f32.mxu0 0.0
      %1572 = vmatmul.mubr.f32.gmra.mrb[0].mxu0 %v1491
      %v1573 = vpop.f32.mrb[0].mxu0
      %v1574 = vadd.f32 0.0, %v1573
      %v1575 = vpop.f32.mrb[0].mxu0
      %1576 = vmatprep.mubr.f32.mxu0 0.0
      %1577 = vmatmul.mubr.f32.gmra.mrb[0].mxu0 %v1492
      %v1578 = vpop.f32.mrb[0].mxu0
      %v1579 = vadd.f32 0.0, %v1578
      %v1580 = vpop.f32.mrb[0].mxu0
      %1581 = vmatprep.mubr.f32.mxu0 0.0
      %1582 = vmatmul.mubr.f32.gmra.mrb[0].mxu0 %v1493
      %v1583 = vpop.f32.mrb[0].mxu0
      %v1584 = vadd.f32 0.0, %v1583
      %v1585 = vpop.f32.mrb[0].mxu0
      %1586 = vmatprep.mubr.f32.mxu0 0.0
      %1587 = vmatmul.mubr.f32.gmra.mrb[0].mxu0 %v1494
      %v1588 = vpop.f32.mrb[0].mxu0
      %v1589 = vadd.f32 0.0, %v1588
      %v1590 = vpop.f32.mrb[0].mxu0
      %1591 = vmatprep.mubr.f32.mxu0 0.0
      %1592 = vmatmul.mubr.f32.gmra.mrb[0].mxu0 %v1495
      %v1593 = vpop.f32.mrb[0].mxu0
      %v1594 = vadd.f32 0.0, %v1593
      %v1595 = vpop.f32.mrb[0].mxu0
      %1596 = vmatprep.mubr.f32.mxu0 0.0
      %1597 = vmatmul.mubr.f32.gmra.mrb[0].mxu0 %v1496
      %v1598 = vpop.f32.mrb[0].mxu0
      %v1599 = vadd.f32 0.0, %v1598
      %v1600 = vpop.f32.mrb[0].mxu0
      %1601 = vmatprep.mubr.f32.mxu0 0.0
      %1602 = vmatmul.mubr.f32.gmra.mrb[0].mxu0 %v1497
      %v1603 = vpop.f32.mrb[0].mxu0
      %v1604 = vadd.f32 0.0, %v1603
      %v1605 = vpop.f32.mrb[0].mxu0
      %1606 = vmatprep.mubr.f32.mxu0 0.0
      %1607 = vmatmul.mubr.f32.gmra.mrb[0].mxu0 %v1498
      %v1608 = vpop.f32.mrb[0].mxu0
      %v1609 = vadd.f32 0.0, %v1608
      %v1610 = vpop.f32.mrb[0].mxu0
      %1611 = vmatprep.mubr.f32.mxu0 0.0
      %1612 = vmatmul.mubr.f32.gmra.mrb[0].mxu0 %v1499
      %v1613 = vpop.f32.mrb[0].mxu0
      %v1614 = vadd.f32 0.0, %v1613
      %v1615 = vpop.f32.mrb[0].mxu0
      %1616 = vmatprep.mubr.f32.mxu0 0.0
      %1617 = vmatmul.mubr.f32.gmra.mrb[0].mxu0 %v1500
      %v1618 = vpop.f32.mrb[0].mxu0
      %v1619 = vadd.f32 0.0, %v1618
      %v1620 = vpop.f32.mrb[0].mxu0
      %1621 = vmatprep.mubr.f32.mxu0 0.0
      %1622 = vmatmul.mubr.f32.gmra.mrb[0].mxu0 %v1501
      %v1623 = vpop.f32.mrb[0].mxu0
      %v1624 = vadd.f32 0.0, %v1623
      %v1625 = vpop.f32.mrb[0].mxu0
      %1626 = vmatprep.mubr.f32.mxu0 0.0
      %1627 = vmatmul.mubr.f32.gmra.mrb[0].mxu0 %v1502
      %v1628 = vpop.f32.mrb[0].mxu0
      %v1629 = vadd.f32 0.0, %v1628
      %v1630 = vpop.f32.mrb[0].mxu0
      %1631 = vmatprep.mubr.f32.mxu0 0.0
      %1632 = vmatmul.mubr.f32.gmra.mrb[0].mxu0 %v1503
      %v1633 = vpop.f32.mrb[0].mxu0
      %v1634 = vadd.f32 0.0, %v1633
      %v1635 = vpop.f32.mrb[0].mxu0
      %1636 = vmatprep.mubr.f32.mxu0 0.0
      %1637 = vmatmul.mubr.f32.gmra.mrb[0].mxu0 %v1504
      %v1638 = vpop.f32.mrb[0].mxu0
      %v1639 = vadd.f32 0.0, %v1638
      %v1640 = vpop.f32.mrb[0].mxu0
      %1641 = vmatprep.mubr.f32.mxu0 0.0
      %1642 = vmatmul.mubr.f32.gmra.mrb[0].mxu0 %v1505
      %v1643 = vpop.f32.mrb[0].mxu0
      %v1644 = vadd.f32 0.0, %v1643
      %v1645 = vpop.f32.mrb[0].mxu0
      %1646 = vmatprep.mubr.f32.mxu0 0.0
      %1647 = vmatmul.mubr.f32.gmra.mrb[0].mxu0 %v1506
      %v1648 = vpop.f32.mrb[0].mxu0
      %v1649 = vadd.f32 0.0, %v1648
      %v1650 = vpop.f32.mrb[0].mxu0
      %1651 = vdwg.mxu0
      %v1652 = vadd.f32 %v1046, %v1574
      %v1653 = vadd.f32 %v1047, %v1579
      %v1654 = vadd.f32 %v1048, %v1584
      %v1655 = vadd.f32 %v1049, %v1589
      %v1656 = vadd.f32 %v1050, %v1594
      %v1657 = vadd.f32 %v1051, %v1599
      %v1658 = vadd.f32 %v1052, %v1604
      %v1659 = vadd.f32 %v1053, %v1609
      %v1660 = vadd.f32 %v1054, %v1614
      %v1661 = vadd.f32 %v1055, %v1619
      %v1662 = vadd.f32 %v1056, %v1624
      %v1663 = vadd.f32 %v1057, %v1629
      %v1664 = vadd.f32 %v1058, %v1634
      %v1665 = vadd.f32 %v1059, %v1639
      %v1666 = vadd.f32 %v1060, %v1644
      %v1667 = vadd.f32 %v1061, %v1649
      %s1668 = scalar_lea.vmem %s273, 64
      %v1669 = vld [vmem:[%s1668] sm:$0xff]
      %v1670 = vld [vmem:[%s1668 + $0x10] sm:$0x1]
      %v1672 = vsel %vm458, %v1670, 0
      %1674 = vmatprep.subr.mxu0 0.0
      %1675 = vmatpush1.msra.mxu0 %v1669
      %1676 = vmatprep.subr.mxu0 0.0
      %1677 = vmatpush1.msra.mxu0 %v1672
      %1678 = vmatprep.subr.mxu0 0.0
      %1679 = vmatpush1.msra.mxu0 0.0
      %1680 = vmatprep.subr.mxu0 0.0
      %1681 = vmatpush1.msra.mxu0 0.0
      %1682 = vmatprep.subr.mxu0 0.0
      %1683 = vmatpush1.msra.mxu0 0.0
      %1684 = vmatprep.subr.mxu0 0.0
      %1685 = vmatpush1.msra.mxu0 0.0
      %1686 = vmatprep.subr.mxu0 0.0
      %1687 = vmatpush1.msra.mxu0 0.0
      %1688 = vmatprep.subr.mxu0 0.0
      %1689 = vmatpush1.msra.mxu0 0.0
      %1690 = vmatprep.subr.mxu0 0.0
      %1691 = vmatpush1.msra.mxu0 0.0
      %1692 = vmatprep.subr.mxu0 0.0
      %1693 = vmatpush1.msra.mxu0 0.0
      %1694 = vmatprep.subr.mxu0 0.0
      %1695 = vmatpush1.msra.mxu0 0.0
      %1696 = vmatprep.subr.mxu0 0.0
      %1697 = vmatpush1.msra.mxu0 0.0
      %1698 = vmatprep.subr.mxu0 0.0
      %1699 = vmatpush1.msra.mxu0 0.0
      %1700 = vmatprep.subr.mxu0 0.0
      %1701 = vmatpush1.msra.mxu0 0.0
      %1702 = vmatprep.subr.mxu0 0.0
      %1703 = vmatpush1.msra.mxu0 0.0
      %1704 = vmatprep.subr.mxu0 0.0
      %1705 = vmatpush1.msra.mxu0 0.0
      %1706 = vmatprep.subr.mxu0 0.0
      %1707 = vmatpush1.msra.mxu0 0.0
      %1708 = vmatprep.subr.mxu0 0.0
      %1709 = vmatpush1.msra.mxu0 0.0
      %1710 = vmatprep.subr.mxu0 0.0
      %1711 = vmatpush1.msra.mxu0 0.0
      %1712 = vmatprep.subr.mxu0 0.0
      %1713 = vmatpush1.msra.mxu0 0.0
      %1714 = vmatprep.subr.mxu0 0.0
      %1715 = vmatpush1.msra.mxu0 0.0
      %1716 = vmatprep.subr.mxu0 0.0
      %1717 = vmatpush1.msra.mxu0 0.0
      %1718 = vmatprep.subr.mxu0 0.0
      %1719 = vmatpush1.msra.mxu0 0.0
      %1720 = vmatprep.subr.mxu0 0.0
      %1721 = vmatpush1.msra.mxu0 0.0
      %1722 = vmatprep.subr.mxu0 0.0
      %1723 = vmatpush1.msra.mxu0 0.0
      %1724 = vmatprep.subr.mxu0 0.0
      %1725 = vmatpush1.msra.mxu0 0.0
      %1726 = vmatprep.subr.mxu0 0.0
      %1727 = vmatpush1.msra.mxu0 0.0
      %1728 = vmatprep.subr.mxu0 0.0
      %1729 = vmatpush1.msra.mxu0 0.0
      %1730 = vmatprep.subr.mxu0 0.0
      %1731 = vmatpush1.msra.mxu0 0.0
      %1732 = vmatprep.subr.mxu0 0.0
      %1733 = vmatpush1.msra.mxu0 0.0
      %1734 = vmatprep.subr.mxu0 0.0
      %1735 = vmatpush1.msra.mxu0 0.0
      %1736 = vmatprep.subr.mxu0 0.0
      %1737 = vmatpush1.msra.mxu0 0.0
      %1738 = vmatprep.mubr.f32.mxu0 0.0
      %1739 = vmatmul.mubr.f32.gmra.mrb[0].mxu0 %v411
      %v1740 = vpop.f32.mrb[0].mxu0
      %v1741 = vadd.f32 %v332, %v1740
      %v1742 = vpop.f32.mrb[0].mxu0
      %1743 = vmatprep.mubr.f32.mxu0 0.0
      %1744 = vmatmul.mubr.f32.gmra.mrb[0].mxu0 %v414
      %v1745 = vpop.f32.mrb[0].mxu0
      %v1746 = vadd.f32 %v337, %v1745
      %v1747 = vpop.f32.mrb[0].mxu0
      %1748 = vmatprep.mubr.f32.mxu0 0.0
      %1749 = vmatmul.mubr.f32.gmra.mrb[0].mxu0 %v417
      %v1750 = vpop.f32.mrb[0].mxu0
      %v1751 = vadd.f32 %v342, %v1750
      %v1752 = vpop.f32.mrb[0].mxu0
      %1753 = vmatprep.mubr.f32.mxu0 0.0
      %1754 = vmatmul.mubr.f32.gmra.mrb[0].mxu0 %v420
      %v1755 = vpop.f32.mrb[0].mxu0
      %v1756 = vadd.f32 %v347, %v1755
      %v1757 = vpop.f32.mrb[0].mxu0
      %1758 = vmatprep.mubr.f32.mxu0 0.0
      %1759 = vmatmul.mubr.f32.gmra.mrb[0].mxu0 %v423
      %v1760 = vpop.f32.mrb[0].mxu0
      %v1761 = vadd.f32 %v352, %v1760
      %v1762 = vpop.f32.mrb[0].mxu0
      %1763 = vmatprep.mubr.f32.mxu0 0.0
      %1764 = vmatmul.mubr.f32.gmra.mrb[0].mxu0 %v426
      %v1765 = vpop.f32.mrb[0].mxu0
      %v1766 = vadd.f32 %v357, %v1765
      %v1767 = vpop.f32.mrb[0].mxu0
      %1768 = vmatprep.mubr.f32.mxu0 0.0
      %1769 = vmatmul.mubr.f32.gmra.mrb[0].mxu0 %v429
      %v1770 = vpop.f32.mrb[0].mxu0
      %v1771 = vadd.f32 %v362, %v1770
      %v1772 = vpop.f32.mrb[0].mxu0
      %1773 = vmatprep.mubr.f32.mxu0 0.0
      %1774 = vmatmul.mubr.f32.gmra.mrb[0].mxu0 %v432
      %v1775 = vpop.f32.mrb[0].mxu0
      %v1776 = vadd.f32 %v367, %v1775
      %v1777 = vpop.f32.mrb[0].mxu0
      %1778 = vmatprep.mubr.f32.mxu0 0.0
      %1779 = vmatmul.mubr.f32.gmra.mrb[0].mxu0 %v435
      %v1780 = vpop.f32.mrb[0].mxu0
      %v1781 = vadd.f32 %v372, %v1780
      %v1782 = vpop.f32.mrb[0].mxu0
      %1783 = vmatprep.mubr.f32.mxu0 0.0
      %1784 = vmatmul.mubr.f32.gmra.mrb[0].mxu0 %v438
      %v1785 = vpop.f32.mrb[0].mxu0
      %v1786 = vadd.f32 %v377, %v1785
      %v1787 = vpop.f32.mrb[0].mxu0
      %1788 = vmatprep.mubr.f32.mxu0 0.0
      %1789 = vmatmul.mubr.f32.gmra.mrb[0].mxu0 %v441
      %v1790 = vpop.f32.mrb[0].mxu0
      %v1791 = vadd.f32 %v382, %v1790
      %v1792 = vpop.f32.mrb[0].mxu0
      %1793 = vmatprep.mubr.f32.mxu0 0.0
      %1794 = vmatmul.mubr.f32.gmra.mrb[0].mxu0 %v444
      %v1795 = vpop.f32.mrb[0].mxu0
      %v1796 = vadd.f32 %v387, %v1795
      %v1797 = vpop.f32.mrb[0].mxu0
      %1798 = vmatprep.mubr.f32.mxu0 0.0
      %1799 = vmatmul.mubr.f32.gmra.mrb[0].mxu0 %v447
      %v1800 = vpop.f32.mrb[0].mxu0
      %v1801 = vadd.f32 %v392, %v1800
      %v1802 = vpop.f32.mrb[0].mxu0
      %1803 = vmatprep.mubr.f32.mxu0 0.0
      %1804 = vmatmul.mubr.f32.gmra.mrb[0].mxu0 %v450
      %v1805 = vpop.f32.mrb[0].mxu0
      %v1806 = vadd.f32 %v397, %v1805
      %v1807 = vpop.f32.mrb[0].mxu0
      %1808 = vmatprep.mubr.f32.mxu0 0.0
      %1809 = vmatmul.mubr.f32.gmra.mrb[0].mxu0 %v453
      %v1810 = vpop.f32.mrb[0].mxu0
      %v1811 = vadd.f32 %v402, %v1810
      %v1812 = vpop.f32.mrb[0].mxu0
      %1813 = vmatprep.mubr.f32.mxu0 0.0
      %1814 = vmatmul.mubr.f32.gmra.mrb[0].mxu0 %v456
      %v1815 = vpop.f32.mrb[0].mxu0
      %v1816 = vadd.f32 %v407, %v1815
      %v1817 = vpop.f32.mrb[0].mxu0
      %1818 = vdwg.mxu0
      %v1819 = vmax.f32 %v1741, 0.0
      %v1820 = vmax.f32 %v1746, 0.0
      %v1821 = vmax.f32 %v1751, 0.0
      %v1822 = vmax.f32 %v1756, 0.0
      %v1823 = vmax.f32 %v1761, 0.0
      %v1824 = vmax.f32 %v1766, 0.0
      %v1825 = vmax.f32 %v1771, 0.0
      %v1826 = vmax.f32 %v1776, 0.0
      %v1827 = vmax.f32 %v1781, 0.0
      %v1828 = vmax.f32 %v1786, 0.0
      %v1829 = vmax.f32 %v1791, 0.0
      %v1830 = vmax.f32 %v1796, 0.0
      %v1831 = vmax.f32 %v1801, 0.0
      %v1832 = vmax.f32 %v1806, 0.0
      %v1833 = vmax.f32 %v1811, 0.0
      %v1834 = vmax.f32 %v1816, 0.0
      %1835 = vadd.xlane.f32.xlu0 %v1819
      %v1836 = vpop.xlane.xlu0 %1835
      %1837 = vadd.xlane.f32.xlu0 %v1820
      %v1838 = vpop.xlane.xlu0 %1837
      %1839 = vadd.xlane.f32.xlu0 %v1821
      %v1840 = vpop.xlane.xlu0 %1839
      %1841 = vadd.xlane.f32.xlu0 %v1822
      %v1842 = vpop.xlane.xlu0 %1841
      %1843 = vadd.xlane.f32.xlu0 %v1823
      %v1844 = vpop.xlane.xlu0 %1843
      %1845 = vadd.xlane.f32.xlu0 %v1824
      %v1846 = vpop.xlane.xlu0 %1845
      %1847 = vadd.xlane.f32.xlu0 %v1825
      %v1848 = vpop.xlane.xlu0 %1847
      %1849 = vadd.xlane.f32.xlu0 %v1826
      %v1850 = vpop.xlane.xlu0 %1849
      %1851 = vadd.xlane.f32.xlu0 %v1827
      %v1852 = vpop.xlane.xlu0 %1851
      %1853 = vadd.xlane.f32.xlu0 %v1828
      %v1854 = vpop.xlane.xlu0 %1853
      %1855 = vadd.xlane.f32.xlu0 %v1829
      %v1856 = vpop.xlane.xlu0 %1855
      %1857 = vadd.xlane.f32.xlu0 %v1830
      %v1858 = vpop.xlane.xlu0 %1857
      %1859 = vadd.xlane.f32.xlu0 %v1831
      %v1860 = vpop.xlane.xlu0 %1859
      %1861 = vadd.xlane.f32.xlu0 %v1832
      %v1862 = vpop.xlane.xlu0 %1861
      %1863 = vadd.xlane.f32.xlu0 %v1833
      %v1864 = vpop.xlane.xlu0 %1863
      %1865 = vadd.xlane.f32.xlu0 %v1834
      %v1866 = vpop.xlane.xlu0 %1865
      %v1867 = vadd.f32 %v1836, 0.0
      %v1868 = vadd.f32 %v1838, 0.0
      %v1869 = vadd.f32 %v1840, 0.0
      %v1870 = vadd.f32 %v1842, 0.0
      %v1871 = vadd.f32 %v1844, 0.0
      %v1872 = vadd.f32 %v1846, 0.0
      %v1873 = vadd.f32 %v1848, 0.0
      %v1874 = vadd.f32 %v1850, 0.0
      %v1875 = vadd.f32 %v1852, 0.0
      %v1876 = vadd.f32 %v1854, 0.0
      %v1877 = vadd.f32 %v1856, 0.0
      %v1878 = vadd.f32 %v1858, 0.0
      %v1879 = vadd.f32 %v1860, 0.0
      %v1880 = vadd.f32 %v1862, 0.0
      %v1881 = vadd.f32 %v1864, 0.0
      %v1882 = vadd.f32 %v1866, 0.0
      %v1883 = vld [vmem:[%s1668 + $0x8] sm:$0xff]
      %v1884 = vld [vmem:[%s1668 + $0x18] sm:$0x1]
      %v1886 = vsel %vm458, %v1884, 0
      %1888 = vmatprep.subr.mxu0 0.0
      %1889 = vmatpush1.msra.mxu0 %v1883
      %1890 = vmatprep.subr.mxu0 0.0
      %1891 = vmatpush1.msra.mxu0 %v1886
      %1892 = vmatprep.subr.mxu0 0.0
      %1893 = vmatpush1.msra.mxu0 0.0
      %1894 = vmatprep.subr.mxu0 0.0
      %1895 = vmatpush1.msra.mxu0 0.0
      %1896 = vmatprep.subr.mxu0 0.0
      %1897 = vmatpush1.msra.mxu0 0.0
      %1898 = vmatprep.subr.mxu0 0.0
      %1899 = vmatpush1.msra.mxu0 0.0
      %1900 = vmatprep.subr.mxu0 0.0
      %1901 = vmatpush1.msra.mxu0 0.0
      %1902 = vmatprep.subr.mxu0 0.0
      %1903 = vmatpush1.msra.mxu0 0.0
      %1904 = vmatprep.subr.mxu0 0.0
      %1905 = vmatpush1.msra.mxu0 0.0
      %1906 = vmatprep.subr.mxu0 0.0
      %1907 = vmatpush1.msra.mxu0 0.0
      %1908 = vmatprep.subr.mxu0 0.0
      %1909 = vmatpush1.msra.mxu0 0.0
      %1910 = vmatprep.subr.mxu0 0.0
      %1911 = vmatpush1.msra.mxu0 0.0
      %1912 = vmatprep.subr.mxu0 0.0
      %1913 = vmatpush1.msra.mxu0 0.0
      %1914 = vmatprep.subr.mxu0 0.0
      %1915 = vmatpush1.msra.mxu0 0.0
      %1916 = vmatprep.subr.mxu0 0.0
      %1917 = vmatpush1.msra.mxu0 0.0
      %1918 = vmatprep.subr.mxu0 0.0
      %1919 = vmatpush1.msra.mxu0 0.0
      %1920 = vmatprep.subr.mxu0 0.0
      %1921 = vmatpush1.msra.mxu0 0.0
      %1922 = vmatprep.subr.mxu0 0.0
      %1923 = vmatpush1.msra.mxu0 0.0
      %1924 = vmatprep.subr.mxu0 0.0
      %1925 = vmatpush1.msra.mxu0 0.0
      %1926 = vmatprep.subr.mxu0 0.0
      %1927 = vmatpush1.msra.mxu0 0.0
      %1928 = vmatprep.subr.mxu0 0.0
      %1929 = vmatpush1.msra.mxu0 0.0
      %1930 = vmatprep.subr.mxu0 0.0
      %1931 = vmatpush1.msra.mxu0 0.0
      %1932 = vmatprep.subr.mxu0 0.0
      %1933 = vmatpush1.msra.mxu0 0.0
      %1934 = vmatprep.subr.mxu0 0.0
      %1935 = vmatpush1.msra.mxu0 0.0
      %1936 = vmatprep.subr.mxu0 0.0
      %1937 = vmatpush1.msra.mxu0 0.0
      %1938 = vmatprep.subr.mxu0 0.0
      %1939 = vmatpush1.msra.mxu0 0.0
      %1940 = vmatprep.subr.mxu0 0.0
      %1941 = vmatpush1.msra.mxu0 0.0
      %1942 = vmatprep.subr.mxu0 0.0
      %1943 = vmatpush1.msra.mxu0 0.0
      %1944 = vmatprep.subr.mxu0 0.0
      %1945 = vmatpush1.msra.mxu0 0.0
      %1946 = vmatprep.subr.mxu0 0.0
      %1947 = vmatpush1.msra.mxu0 0.0
      %1948 = vmatprep.subr.mxu0 0.0
      %1949 = vmatpush1.msra.mxu0 0.0
      %1950 = vmatprep.subr.mxu0 0.0
      %1951 = vmatpush1.msra.mxu0 0.0
      %1952 = vmatprep.mubr.f32.mxu0 0.0
      %1953 = vmatmul.mubr.f32.gmra.mrb[0].mxu0 %v411
      %v1954 = vpop.f32.mrb[0].mxu0
      %v1955 = vadd.f32 %v332, %v1954
      %v1956 = vpop.f32.mrb[0].mxu0
      %1957 = vmatprep.mubr.f32.mxu0 0.0
      %1958 = vmatmul.mubr.f32.gmra.mrb[0].mxu0 %v414
      %v1959 = vpop.f32.mrb[0].mxu0
      %v1960 = vadd.f32 %v337, %v1959
      %v1961 = vpop.f32.mrb[0].mxu0
      %1962 = vmatprep.mubr.f32.mxu0 0.0
      %1963 = vmatmul.mubr.f32.gmra.mrb[0].mxu0 %v417
      %v1964 = vpop.f32.mrb[0].mxu0
      %v1965 = vadd.f32 %v342, %v1964
      %v1966 = vpop.f32.mrb[0].mxu0
      %1967 = vmatprep.mubr.f32.mxu0 0.0
      %1968 = vmatmul.mubr.f32.gmra.mrb[0].mxu0 %v420
      %v1969 = vpop.f32.mrb[0].mxu0
      %v1970 = vadd.f32 %v347, %v1969
      %v1971 = vpop.f32.mrb[0].mxu0
      %1972 = vmatprep.mubr.f32.mxu0 0.0
      %1973 = vmatmul.mubr.f32.gmra.mrb[0].mxu0 %v423
      %v1974 = vpop.f32.mrb[0].mxu0
      %v1975 = vadd.f32 %v352, %v1974
      %v1976 = vpop.f32.mrb[0].mxu0
      %1977 = vmatprep.mubr.f32.mxu0 0.0
      %1978 = vmatmul.mubr.f32.gmra.mrb[0].mxu0 %v426
      %v1979 = vpop.f32.mrb[0].mxu0
      %v1980 = vadd.f32 %v357, %v1979
      %v1981 = vpop.f32.mrb[0].mxu0
      %1982 = vmatprep.mubr.f32.mxu0 0.0
      %1983 = vmatmul.mubr.f32.gmra.mrb[0].mxu0 %v429
      %v1984 = vpop.f32.mrb[0].mxu0
      %v1985 = vadd.f32 %v362, %v1984
      %v1986 = vpop.f32.mrb[0].mxu0
      %1987 = vmatprep.mubr.f32.mxu0 0.0
      %1988 = vmatmul.mubr.f32.gmra.mrb[0].mxu0 %v432
      %v1989 = vpop.f32.mrb[0].mxu0
      %v1990 = vadd.f32 %v367, %v1989
      %v1991 = vpop.f32.mrb[0].mxu0
      %1992 = vmatprep.mubr.f32.mxu0 0.0
      %1993 = vmatmul.mubr.f32.gmra.mrb[0].mxu0 %v435
      %v1994 = vpop.f32.mrb[0].mxu0
      %v1995 = vadd.f32 %v372, %v1994
      %v1996 = vpop.f32.mrb[0].mxu0
      %1997 = vmatprep.mubr.f32.mxu0 0.0
      %1998 = vmatmul.mubr.f32.gmra.mrb[0].mxu0 %v438
      %v1999 = vpop.f32.mrb[0].mxu0
      %v2000 = vadd.f32 %v377, %v1999
      %v2001 = vpop.f32.mrb[0].mxu0
      %2002 = vmatprep.mubr.f32.mxu0 0.0
      %2003 = vmatmul.mubr.f32.gmra.mrb[0].mxu0 %v441
      %v2004 = vpop.f32.mrb[0].mxu0
      %v2005 = vadd.f32 %v382, %v2004
      %v2006 = vpop.f32.mrb[0].mxu0
      %2007 = vmatprep.mubr.f32.mxu0 0.0
      %2008 = vmatmul.mubr.f32.gmra.mrb[0].mxu0 %v444
      %v2009 = vpop.f32.mrb[0].mxu0
      %v2010 = vadd.f32 %v387, %v2009
      %v2011 = vpop.f32.mrb[0].mxu0
      %2012 = vmatprep.mubr.f32.mxu0 0.0
      %2013 = vmatmul.mubr.f32.gmra.mrb[0].mxu0 %v447
      %v2014 = vpop.f32.mrb[0].mxu0
      %v2015 = vadd.f32 %v392, %v2014
      %v2016 = vpop.f32.mrb[0].mxu0
      %2017 = vmatprep.mubr.f32.mxu0 0.0
      %2018 = vmatmul.mubr.f32.gmra.mrb[0].mxu0 %v450
      %v2019 = vpop.f32.mrb[0].mxu0
      %v2020 = vadd.f32 %v397, %v2019
      %v2021 = vpop.f32.mrb[0].mxu0
      %2022 = vmatprep.mubr.f32.mxu0 0.0
      %2023 = vmatmul.mubr.f32.gmra.mrb[0].mxu0 %v453
      %v2024 = vpop.f32.mrb[0].mxu0
      %v2025 = vadd.f32 %v402, %v2024
      %v2026 = vpop.f32.mrb[0].mxu0
      %2027 = vmatprep.mubr.f32.mxu0 0.0
      %2028 = vmatmul.mubr.f32.gmra.mrb[0].mxu0 %v456
      %v2029 = vpop.f32.mrb[0].mxu0
      %v2030 = vadd.f32 %v407, %v2029
      %v2031 = vpop.f32.mrb[0].mxu0
      %2032 = vdwg.mxu0
      %v2033 = vmax.f32 %v1955, 0.0
      %v2034 = vmax.f32 %v1960, 0.0
      %v2035 = vmax.f32 %v1965, 0.0
      %v2036 = vmax.f32 %v1970, 0.0
      %v2037 = vmax.f32 %v1975, 0.0
      %v2038 = vmax.f32 %v1980, 0.0
      %v2039 = vmax.f32 %v1985, 0.0
      %v2040 = vmax.f32 %v1990, 0.0
      %v2041 = vmax.f32 %v1995, 0.0
      %v2042 = vmax.f32 %v2000, 0.0
      %v2043 = vmax.f32 %v2005, 0.0
      %v2044 = vmax.f32 %v2010, 0.0
      %v2045 = vmax.f32 %v2015, 0.0
      %v2046 = vmax.f32 %v2020, 0.0
      %v2047 = vmax.f32 %v2025, 0.0
      %v2048 = vmax.f32 %v2030, 0.0
      %2049 = vadd.xlane.f32.xlu0 %v2033
      %v2050 = vpop.xlane.xlu0 %2049
      %2051 = vadd.xlane.f32.xlu0 %v2034
      %v2052 = vpop.xlane.xlu0 %2051
      %2053 = vadd.xlane.f32.xlu0 %v2035
      %v2054 = vpop.xlane.xlu0 %2053
      %2055 = vadd.xlane.f32.xlu0 %v2036
      %v2056 = vpop.xlane.xlu0 %2055
      %2057 = vadd.xlane.f32.xlu0 %v2037
      %v2058 = vpop.xlane.xlu0 %2057
      %2059 = vadd.xlane.f32.xlu0 %v2038
      %v2060 = vpop.xlane.xlu0 %2059
      %2061 = vadd.xlane.f32.xlu0 %v2039
      %v2062 = vpop.xlane.xlu0 %2061
      %2063 = vadd.xlane.f32.xlu0 %v2040
      %v2064 = vpop.xlane.xlu0 %2063
      %2065 = vadd.xlane.f32.xlu0 %v2041
      %v2066 = vpop.xlane.xlu0 %2065
      %2067 = vadd.xlane.f32.xlu0 %v2042
      %v2068 = vpop.xlane.xlu0 %2067
      %2069 = vadd.xlane.f32.xlu0 %v2043
      %v2070 = vpop.xlane.xlu0 %2069
      %2071 = vadd.xlane.f32.xlu0 %v2044
      %v2072 = vpop.xlane.xlu0 %2071
      %2073 = vadd.xlane.f32.xlu0 %v2045
      %v2074 = vpop.xlane.xlu0 %2073
      %2075 = vadd.xlane.f32.xlu0 %v2046
      %v2076 = vpop.xlane.xlu0 %2075
      %2077 = vadd.xlane.f32.xlu0 %v2047
      %v2078 = vpop.xlane.xlu0 %2077
      %2079 = vadd.xlane.f32.xlu0 %v2048
      %v2080 = vpop.xlane.xlu0 %2079
      %v2081 = vadd.f32 %v1867, %v2050
      %v2082 = vadd.f32 %v1868, %v2052
      %v2083 = vadd.f32 %v1869, %v2054
      %v2084 = vadd.f32 %v1870, %v2056
      %v2085 = vadd.f32 %v1871, %v2058
      %v2086 = vadd.f32 %v1872, %v2060
      %v2087 = vadd.f32 %v1873, %v2062
      %v2088 = vadd.f32 %v1874, %v2064
      %v2089 = vadd.f32 %v1875, %v2066
      %v2090 = vadd.f32 %v1876, %v2068
      %v2091 = vadd.f32 %v1877, %v2070
      %v2092 = vadd.f32 %v1878, %v2072
      %v2093 = vadd.f32 %v1879, %v2074
      %v2094 = vadd.f32 %v1880, %v2076
      %v2095 = vadd.f32 %v1881, %v2078
      %v2096 = vadd.f32 %v1882, %v2080
      %v2097 = vld [vmem:[%s3 + $0x10] sm:$0xff]
      %v2098 = vld [vmem:[%s3 + $0x38] sm:$0xff]
      %v2099 = vld [vmem:[%s3 + $0x60] sm:$0xff]
      %v2100 = vld [vmem:[%s3 + $0x88] sm:$0xff]
      %v2101 = vld [vmem:[%s3 + $0xb0] sm:$0xff]
      %v2102 = vld [vmem:[%s3 + $0xd8] sm:$0xff]
      %v2103 = vld [vmem:[%s3 + $0x100] sm:$0xff]
      %v2104 = vld [vmem:[%s3 + $0x128] sm:$0xff]
      %v2105 = vld [vmem:[%s3 + $0x150] sm:$0xff]
      %v2106 = vld [vmem:[%s3 + $0x178] sm:$0xff]
      %v2107 = vld [vmem:[%s3 + $0x1a0] sm:$0xff]
      %v2108 = vld [vmem:[%s3 + $0x1c8] sm:$0xff]
      %v2109 = vld [vmem:[%s3 + $0x1f0] sm:$0xff]
      %v2110 = vld [vmem:[%s3 + $0x218] sm:$0xff]
      %v2111 = vld [vmem:[%s3 + $0x240] sm:$0xff]
      %v2112 = vld [vmem:[%s3 + $0x268] sm:$0xff]
      %2113 = vmatprep.subr.mxu0 0.0
      %2114 = vmatpush1.msra.mxu0 %v2081
      %2115 = vmatprep.subr.mxu0 0.0
      %2116 = vmatpush1.msra.mxu0 %v2082
      %2117 = vmatprep.subr.mxu0 0.0
      %2118 = vmatpush1.msra.mxu0 %v2083
      %2119 = vmatprep.subr.mxu0 0.0
      %2120 = vmatpush1.msra.mxu0 %v2084
      %2121 = vmatprep.subr.mxu0 0.0
      %2122 = vmatpush1.msra.mxu0 %v2085
      %2123 = vmatprep.subr.mxu0 0.0
      %2124 = vmatpush1.msra.mxu0 %v2086
      %2125 = vmatprep.subr.mxu0 0.0
      %2126 = vmatpush1.msra.mxu0 %v2087
      %2127 = vmatprep.subr.mxu0 0.0
      %2128 = vmatpush1.msra.mxu0 %v2088
      %2129 = vmatprep.subr.mxu0 0.0
      %2130 = vmatpush1.msra.mxu0 %v2089
      %2131 = vmatprep.subr.mxu0 0.0
      %2132 = vmatpush1.msra.mxu0 %v2090
      %2133 = vmatprep.subr.mxu0 0.0
      %2134 = vmatpush1.msra.mxu0 %v2091
      %2135 = vmatprep.subr.mxu0 0.0
      %2136 = vmatpush1.msra.mxu0 %v2092
      %2137 = vmatprep.subr.mxu0 0.0
      %2138 = vmatpush1.msra.mxu0 %v2093
      %2139 = vmatprep.subr.mxu0 0.0
      %2140 = vmatpush1.msra.mxu0 %v2094
      %2141 = vmatprep.subr.mxu0 0.0
      %2142 = vmatpush1.msra.mxu0 %v2095
      %2143 = vmatprep.subr.mxu0 0.0
      %2144 = vmatpush1.msra.mxu0 %v2096
      %2145 = vmatprep.subr.mxu0 0.0
      %2146 = vmatpush1.msra.mxu0 0.0
      %2147 = vmatprep.subr.mxu0 0.0
      %2148 = vmatpush1.msra.mxu0 0.0
      %2149 = vmatprep.subr.mxu0 0.0
      %2150 = vmatpush1.msra.mxu0 0.0
      %2151 = vmatprep.subr.mxu0 0.0
      %2152 = vmatpush1.msra.mxu0 0.0
      %2153 = vmatprep.subr.mxu0 0.0
      %2154 = vmatpush1.msra.mxu0 0.0
      %2155 = vmatprep.subr.mxu0 0.0
      %2156 = vmatpush1.msra.mxu0 0.0
      %2157 = vmatprep.subr.mxu0 0.0
      %2158 = vmatpush1.msra.mxu0 0.0
      %2159 = vmatprep.subr.mxu0 0.0
      %2160 = vmatpush1.msra.mxu0 0.0
      %2161 = vmatprep.subr.mxu0 0.0
      %2162 = vmatpush1.msra.mxu0 0.0
      %2163 = vmatprep.subr.mxu0 0.0
      %2164 = vmatpush1.msra.mxu0 0.0
      %2165 = vmatprep.subr.mxu0 0.0
      %2166 = vmatpush1.msra.mxu0 0.0
      %2167 = vmatprep.subr.mxu0 0.0
      %2168 = vmatpush1.msra.mxu0 0.0
      %2169 = vmatprep.subr.mxu0 0.0
      %2170 = vmatpush1.msra.mxu0 0.0
      %2171 = vmatprep.subr.mxu0 0.0
      %2172 = vmatpush1.msra.mxu0 0.0
      %2173 = vmatprep.subr.mxu0 0.0
      %2174 = vmatpush1.msra.mxu0 0.0
      %2175 = vmatprep.subr.mxu0 0.0
      %2176 = vmatpush1.msra.mxu0 0.0
      %2177 = vmatprep.mubr.f32.mxu0 0.0
      %2178 = vmatmul.mubr.f32.gmra.mrb[0].mxu0 %v2097
      %v2179 = vpop.f32.mrb[0].mxu0
      %v2180 = vadd.f32 0.0, %v2179
      %v2181 = vpop.f32.mrb[0].mxu0
      %2182 = vmatprep.mubr.f32.mxu0 0.0
      %2183 = vmatmul.mubr.f32.gmra.mrb[0].mxu0 %v2098
      %v2184 = vpop.f32.mrb[0].mxu0
      %v2185 = vadd.f32 0.0, %v2184
      %v2186 = vpop.f32.mrb[0].mxu0
      %2187 = vmatprep.mubr.f32.mxu0 0.0
      %2188 = vmatmul.mubr.f32.gmra.mrb[0].mxu0 %v2099
      %v2189 = vpop.f32.mrb[0].mxu0
      %v2190 = vadd.f32 0.0, %v2189
      %v2191 = vpop.f32.mrb[0].mxu0
      %2192 = vmatprep.mubr.f32.mxu0 0.0
      %2193 = vmatmul.mubr.f32.gmra.mrb[0].mxu0 %v2100
      %v2194 = vpop.f32.mrb[0].mxu0
      %v2195 = vadd.f32 0.0, %v2194
      %v2196 = vpop.f32.mrb[0].mxu0
      %2197 = vmatprep.mubr.f32.mxu0 0.0
      %2198 = vmatmul.mubr.f32.gmra.mrb[0].mxu0 %v2101
      %v2199 = vpop.f32.mrb[0].mxu0
      %v2200 = vadd.f32 0.0, %v2199
      %v2201 = vpop.f32.mrb[0].mxu0
      %2202 = vmatprep.mubr.f32.mxu0 0.0
      %2203 = vmatmul.mubr.f32.gmra.mrb[0].mxu0 %v2102
      %v2204 = vpop.f32.mrb[0].mxu0
      %v2205 = vadd.f32 0.0, %v2204
      %v2206 = vpop.f32.mrb[0].mxu0
      %2207 = vmatprep.mubr.f32.mxu0 0.0
      %2208 = vmatmul.mubr.f32.gmra.mrb[0].mxu0 %v2103
      %v2209 = vpop.f32.mrb[0].mxu0
      %v2210 = vadd.f32 0.0, %v2209
      %v2211 = vpop.f32.mrb[0].mxu0
      %2212 = vmatprep.mubr.f32.mxu0 0.0
      %2213 = vmatmul.mubr.f32.gmra.mrb[0].mxu0 %v2104
      %v2214 = vpop.f32.mrb[0].mxu0
      %v2215 = vadd.f32 0.0, %v2214
      %v2216 = vpop.f32.mrb[0].mxu0
      %2217 = vmatprep.mubr.f32.mxu0 0.0
      %2218 = vmatmul.mubr.f32.gmra.mrb[0].mxu0 %v2105
      %v2219 = vpop.f32.mrb[0].mxu0
      %v2220 = vadd.f32 0.0, %v2219
      %v2221 = vpop.f32.mrb[0].mxu0
      %2222 = vmatprep.mubr.f32.mxu0 0.0
      %2223 = vmatmul.mubr.f32.gmra.mrb[0].mxu0 %v2106
      %v2224 = vpop.f32.mrb[0].mxu0
      %v2225 = vadd.f32 0.0, %v2224
      %v2226 = vpop.f32.mrb[0].mxu0
      %2227 = vmatprep.mubr.f32.mxu0 0.0
      %2228 = vmatmul.mubr.f32.gmra.mrb[0].mxu0 %v2107
      %v2229 = vpop.f32.mrb[0].mxu0
      %v2230 = vadd.f32 0.0, %v2229
      %v2231 = vpop.f32.mrb[0].mxu0
      %2232 = vmatprep.mubr.f32.mxu0 0.0
      %2233 = vmatmul.mubr.f32.gmra.mrb[0].mxu0 %v2108
      %v2234 = vpop.f32.mrb[0].mxu0
      %v2235 = vadd.f32 0.0, %v2234
      %v2236 = vpop.f32.mrb[0].mxu0
      %2237 = vmatprep.mubr.f32.mxu0 0.0
      %2238 = vmatmul.mubr.f32.gmra.mrb[0].mxu0 %v2109
      %v2239 = vpop.f32.mrb[0].mxu0
      %v2240 = vadd.f32 0.0, %v2239
      %v2241 = vpop.f32.mrb[0].mxu0
      %2242 = vmatprep.mubr.f32.mxu0 0.0
      %2243 = vmatmul.mubr.f32.gmra.mrb[0].mxu0 %v2110
      %v2244 = vpop.f32.mrb[0].mxu0
      %v2245 = vadd.f32 0.0, %v2244
      %v2246 = vpop.f32.mrb[0].mxu0
      %2247 = vmatprep.mubr.f32.mxu0 0.0
      %2248 = vmatmul.mubr.f32.gmra.mrb[0].mxu0 %v2111
      %v2249 = vpop.f32.mrb[0].mxu0
      %v2250 = vadd.f32 0.0, %v2249
      %v2251 = vpop.f32.mrb[0].mxu0
      %2252 = vmatprep.mubr.f32.mxu0 0.0
      %2253 = vmatmul.mubr.f32.gmra.mrb[0].mxu0 %v2112
      %v2254 = vpop.f32.mrb[0].mxu0
      %v2255 = vadd.f32 0.0, %v2254
      %v2256 = vpop.f32.mrb[0].mxu0
      %2257 = vdwg.mxu0
      %v2258 = vadd.f32 %v1652, %v2180
      %v2259 = vadd.f32 %v1653, %v2185
      %v2260 = vadd.f32 %v1654, %v2190
      %v2261 = vadd.f32 %v1655, %v2195
      %v2262 = vadd.f32 %v1656, %v2200
      %v2263 = vadd.f32 %v1657, %v2205
      %v2264 = vadd.f32 %v1658, %v2210
      %v2265 = vadd.f32 %v1659, %v2215
      %v2266 = vadd.f32 %v1660, %v2220
      %v2267 = vadd.f32 %v1661, %v2225
      %v2268 = vadd.f32 %v1662, %v2230
      %v2269 = vadd.f32 %v1663, %v2235
      %v2270 = vadd.f32 %v1664, %v2240
      %v2271 = vadd.f32 %v1665, %v2245
      %v2272 = vadd.f32 %v1666, %v2250
      %v2273 = vadd.f32 %v1667, %v2255
      %s2274 = scalar_lea.vmem %s273, 96
      %v2275 = vld [vmem:[%s2274] sm:$0xff]
      %v2276 = vld [vmem:[%s2274 + $0x10] sm:$0x1]
      %v2278 = vsel %vm458, %v2276, 0
      %2280 = vmatprep.subr.mxu0 0.0
      %2281 = vmatpush1.msra.mxu0 %v2275
      %2282 = vmatprep.subr.mxu0 0.0
      %2283 = vmatpush1.msra.mxu0 %v2278
      %2284 = vmatprep.subr.mxu0 0.0
      %2285 = vmatpush1.msra.mxu0 0.0
      %2286 = vmatprep.subr.mxu0 0.0
      %2287 = vmatpush1.msra.mxu0 0.0
      %2288 = vmatprep.subr.mxu0 0.0
      %2289 = vmatpush1.msra.mxu0 0.0
      %2290 = vmatprep.subr.mxu0 0.0
      %2291 = vmatpush1.msra.mxu0 0.0
      %2292 = vmatprep.subr.mxu0 0.0
      %2293 = vmatpush1.msra.mxu0 0.0
      %2294 = vmatprep.subr.mxu0 0.0
      %2295 = vmatpush1.msra.mxu0 0.0
      %2296 = vmatprep.subr.mxu0 0.0
      %2297 = vmatpush1.msra.mxu0 0.0
      %2298 = vmatprep.subr.mxu0 0.0
      %2299 = vmatpush1.msra.mxu0 0.0
      %2300 = vmatprep.subr.mxu0 0.0
      %2301 = vmatpush1.msra.mxu0 0.0
      %2302 = vmatprep.subr.mxu0 0.0
      %2303 = vmatpush1.msra.mxu0 0.0
      %2304 = vmatprep.subr.mxu0 0.0
      %2305 = vmatpush1.msra.mxu0 0.0
      %2306 = vmatprep.subr.mxu0 0.0
      %2307 = vmatpush1.msra.mxu0 0.0
      %2308 = vmatprep.subr.mxu0 0.0
      %2309 = vmatpush1.msra.mxu0 0.0
      %2310 = vmatprep.subr.mxu0 0.0
      %2311 = vmatpush1.msra.mxu0 0.0
      %2312 = vmatprep.subr.mxu0 0.0
      %2313 = vmatpush1.msra.mxu0 0.0
      %2314 = vmatprep.subr.mxu0 0.0
      %2315 = vmatpush1.msra.mxu0 0.0
      %2316 = vmatprep.subr.mxu0 0.0
      %2317 = vmatpush1.msra.mxu0 0.0
      %2318 = vmatprep.subr.mxu0 0.0
      %2319 = vmatpush1.msra.mxu0 0.0
      %2320 = vmatprep.subr.mxu0 0.0
      %2321 = vmatpush1.msra.mxu0 0.0
      %2322 = vmatprep.subr.mxu0 0.0
      %2323 = vmatpush1.msra.mxu0 0.0
      %2324 = vmatprep.subr.mxu0 0.0
      %2325 = vmatpush1.msra.mxu0 0.0
      %2326 = vmatprep.subr.mxu0 0.0
      %2327 = vmatpush1.msra.mxu0 0.0
      %2328 = vmatprep.subr.mxu0 0.0
      %2329 = vmatpush1.msra.mxu0 0.0
      %2330 = vmatprep.subr.mxu0 0.0
      %2331 = vmatpush1.msra.mxu0 0.0
      %2332 = vmatprep.subr.mxu0 0.0
      %2333 = vmatpush1.msra.mxu0 0.0
      %2334 = vmatprep.subr.mxu0 0.0
      %2335 = vmatpush1.msra.mxu0 0.0
      %2336 = vmatprep.subr.mxu0 0.0
      %2337 = vmatpush1.msra.mxu0 0.0
      %2338 = vmatprep.subr.mxu0 0.0
      %2339 = vmatpush1.msra.mxu0 0.0
      %2340 = vmatprep.subr.mxu0 0.0
      %2341 = vmatpush1.msra.mxu0 0.0
      %2342 = vmatprep.subr.mxu0 0.0
      %2343 = vmatpush1.msra.mxu0 0.0
      %2344 = vmatprep.mubr.f32.mxu0 0.0
      %2345 = vmatmul.mubr.f32.gmra.mrb[0].mxu0 %v411
      %v2346 = vpop.f32.mrb[0].mxu0
      %v2347 = vadd.f32 %v332, %v2346
      %v2348 = vpop.f32.mrb[0].mxu0
      %2349 = vmatprep.mubr.f32.mxu0 0.0
      %2350 = vmatmul.mubr.f32.gmra.mrb[0].mxu0 %v414
      %v2351 = vpop.f32.mrb[0].mxu0
      %v2352 = vadd.f32 %v337, %v2351
      %v2353 = vpop.f32.mrb[0].mxu0
      %2354 = vmatprep.mubr.f32.mxu0 0.0
      %2355 = vmatmul.mubr.f32.gmra.mrb[0].mxu0 %v417
      %v2356 = vpop.f32.mrb[0].mxu0
      %v2357 = vadd.f32 %v342, %v2356
      %v2358 = vpop.f32.mrb[0].mxu0
      %2359 = vmatprep.mubr.f32.mxu0 0.0
      %2360 = vmatmul.mubr.f32.gmra.mrb[0].mxu0 %v420
      %v2361 = vpop.f32.mrb[0].mxu0
      %v2362 = vadd.f32 %v347, %v2361
      %v2363 = vpop.f32.mrb[0].mxu0
      %2364 = vmatprep.mubr.f32.mxu0 0.0
      %2365 = vmatmul.mubr.f32.gmra.mrb[0].mxu0 %v423
      %v2366 = vpop.f32.mrb[0].mxu0
      %v2367 = vadd.f32 %v352, %v2366
      %v2368 = vpop.f32.mrb[0].mxu0
      %2369 = vmatprep.mubr.f32.mxu0 0.0
      %2370 = vmatmul.mubr.f32.gmra.mrb[0].mxu0 %v426
      %v2371 = vpop.f32.mrb[0].mxu0
      %v2372 = vadd.f32 %v357, %v2371
      %v2373 = vpop.f32.mrb[0].mxu0
      %2374 = vmatprep.mubr.f32.mxu0 0.0
      %2375 = vmatmul.mubr.f32.gmra.mrb[0].mxu0 %v429
      %v2376 = vpop.f32.mrb[0].mxu0
      %v2377 = vadd.f32 %v362, %v2376
      %v2378 = vpop.f32.mrb[0].mxu0
      %2379 = vmatprep.mubr.f32.mxu0 0.0
      %2380 = vmatmul.mubr.f32.gmra.mrb[0].mxu0 %v432
      %v2381 = vpop.f32.mrb[0].mxu0
      %v2382 = vadd.f32 %v367, %v2381
      %v2383 = vpop.f32.mrb[0].mxu0
      %2384 = vmatprep.mubr.f32.mxu0 0.0
      %2385 = vmatmul.mubr.f32.gmra.mrb[0].mxu0 %v435
      %v2386 = vpop.f32.mrb[0].mxu0
      %v2387 = vadd.f32 %v372, %v2386
      %v2388 = vpop.f32.mrb[0].mxu0
      %2389 = vmatprep.mubr.f32.mxu0 0.0
      %2390 = vmatmul.mubr.f32.gmra.mrb[0].mxu0 %v438
      %v2391 = vpop.f32.mrb[0].mxu0
      %v2392 = vadd.f32 %v377, %v2391
      %v2393 = vpop.f32.mrb[0].mxu0
      %2394 = vmatprep.mubr.f32.mxu0 0.0
      %2395 = vmatmul.mubr.f32.gmra.mrb[0].mxu0 %v441
      %v2396 = vpop.f32.mrb[0].mxu0
      %v2397 = vadd.f32 %v382, %v2396
      %v2398 = vpop.f32.mrb[0].mxu0
      %2399 = vmatprep.mubr.f32.mxu0 0.0
      %2400 = vmatmul.mubr.f32.gmra.mrb[0].mxu0 %v444
      %v2401 = vpop.f32.mrb[0].mxu0
      %v2402 = vadd.f32 %v387, %v2401
      %v2403 = vpop.f32.mrb[0].mxu0
      %2404 = vmatprep.mubr.f32.mxu0 0.0
      %2405 = vmatmul.mubr.f32.gmra.mrb[0].mxu0 %v447
      %v2406 = vpop.f32.mrb[0].mxu0
      %v2407 = vadd.f32 %v392, %v2406
      %v2408 = vpop.f32.mrb[0].mxu0
      %2409 = vmatprep.mubr.f32.mxu0 0.0
      %2410 = vmatmul.mubr.f32.gmra.mrb[0].mxu0 %v450
      %v2411 = vpop.f32.mrb[0].mxu0
      %v2412 = vadd.f32 %v397, %v2411
      %v2413 = vpop.f32.mrb[0].mxu0
      %2414 = vmatprep.mubr.f32.mxu0 0.0
      %2415 = vmatmul.mubr.f32.gmra.mrb[0].mxu0 %v453
      %v2416 = vpop.f32.mrb[0].mxu0
      %v2417 = vadd.f32 %v402, %v2416
      %v2418 = vpop.f32.mrb[0].mxu0
      %2419 = vmatprep.mubr.f32.mxu0 0.0
      %2420 = vmatmul.mubr.f32.gmra.mrb[0].mxu0 %v456
      %v2421 = vpop.f32.mrb[0].mxu0
      %v2422 = vadd.f32 %v407, %v2421
      %v2423 = vpop.f32.mrb[0].mxu0
      %2424 = vdwg.mxu0
      %v2425 = vmax.f32 %v2347, 0.0
      %v2426 = vmax.f32 %v2352, 0.0
      %v2427 = vmax.f32 %v2357, 0.0
      %v2428 = vmax.f32 %v2362, 0.0
      %v2429 = vmax.f32 %v2367, 0.0
      %v2430 = vmax.f32 %v2372, 0.0
      %v2431 = vmax.f32 %v2377, 0.0
      %v2432 = vmax.f32 %v2382, 0.0
      %v2433 = vmax.f32 %v2387, 0.0
      %v2434 = vmax.f32 %v2392, 0.0
      %v2435 = vmax.f32 %v2397, 0.0
      %v2436 = vmax.f32 %v2402, 0.0
      %v2437 = vmax.f32 %v2407, 0.0
      %v2438 = vmax.f32 %v2412, 0.0
      %v2439 = vmax.f32 %v2417, 0.0
      %v2440 = vmax.f32 %v2422, 0.0
      %2441 = vadd.xlane.f32.xlu0 %v2425
      %v2442 = vpop.xlane.xlu0 %2441
      %2443 = vadd.xlane.f32.xlu0 %v2426
      %v2444 = vpop.xlane.xlu0 %2443
      %2445 = vadd.xlane.f32.xlu0 %v2427
      %v2446 = vpop.xlane.xlu0 %2445
      %2447 = vadd.xlane.f32.xlu0 %v2428
      %v2448 = vpop.xlane.xlu0 %2447
      %2449 = vadd.xlane.f32.xlu0 %v2429
      %v2450 = vpop.xlane.xlu0 %2449
      %2451 = vadd.xlane.f32.xlu0 %v2430
      %v2452 = vpop.xlane.xlu0 %2451
      %2453 = vadd.xlane.f32.xlu0 %v2431
      %v2454 = vpop.xlane.xlu0 %2453
      %2455 = vadd.xlane.f32.xlu0 %v2432
      %v2456 = vpop.xlane.xlu0 %2455
      %2457 = vadd.xlane.f32.xlu0 %v2433
      %v2458 = vpop.xlane.xlu0 %2457
      %2459 = vadd.xlane.f32.xlu0 %v2434
      %v2460 = vpop.xlane.xlu0 %2459
      %2461 = vadd.xlane.f32.xlu0 %v2435
      %v2462 = vpop.xlane.xlu0 %2461
      %2463 = vadd.xlane.f32.xlu0 %v2436
      %v2464 = vpop.xlane.xlu0 %2463
      %2465 = vadd.xlane.f32.xlu0 %v2437
      %v2466 = vpop.xlane.xlu0 %2465
      %2467 = vadd.xlane.f32.xlu0 %v2438
      %v2468 = vpop.xlane.xlu0 %2467
      %2469 = vadd.xlane.f32.xlu0 %v2439
      %v2470 = vpop.xlane.xlu0 %2469
      %2471 = vadd.xlane.f32.xlu0 %v2440
      %v2472 = vpop.xlane.xlu0 %2471
      %v2473 = vadd.f32 %v2442, 0.0
      %v2474 = vadd.f32 %v2444, 0.0
      %v2475 = vadd.f32 %v2446, 0.0
      %v2476 = vadd.f32 %v2448, 0.0
      %v2477 = vadd.f32 %v2450, 0.0
      %v2478 = vadd.f32 %v2452, 0.0
      %v2479 = vadd.f32 %v2454, 0.0
      %v2480 = vadd.f32 %v2456, 0.0
      %v2481 = vadd.f32 %v2458, 0.0
      %v2482 = vadd.f32 %v2460, 0.0
      %v2483 = vadd.f32 %v2462, 0.0
      %v2484 = vadd.f32 %v2464, 0.0
      %v2485 = vadd.f32 %v2466, 0.0
      %v2486 = vadd.f32 %v2468, 0.0
      %v2487 = vadd.f32 %v2470, 0.0
      %v2488 = vadd.f32 %v2472, 0.0
      %v2489 = vld [vmem:[%s2274 + $0x8] sm:$0xff]
      %v2490 = vld [vmem:[%s2274 + $0x18] sm:$0x1]
      %v2492 = vsel %vm458, %v2490, 0
      %2494 = vmatprep.subr.mxu0 0.0
      %2495 = vmatpush1.msra.mxu0 %v2489
      %2496 = vmatprep.subr.mxu0 0.0
      %2497 = vmatpush1.msra.mxu0 %v2492
      %2498 = vmatprep.subr.mxu0 0.0
      %2499 = vmatpush1.msra.mxu0 0.0
      %2500 = vmatprep.subr.mxu0 0.0
      %2501 = vmatpush1.msra.mxu0 0.0
      %2502 = vmatprep.subr.mxu0 0.0
      %2503 = vmatpush1.msra.mxu0 0.0
      %2504 = vmatprep.subr.mxu0 0.0
      %2505 = vmatpush1.msra.mxu0 0.0
      %2506 = vmatprep.subr.mxu0 0.0
      %2507 = vmatpush1.msra.mxu0 0.0
      %2508 = vmatprep.subr.mxu0 0.0
      %2509 = vmatpush1.msra.mxu0 0.0
      %2510 = vmatprep.subr.mxu0 0.0
      %2511 = vmatpush1.msra.mxu0 0.0
      %2512 = vmatprep.subr.mxu0 0.0
      %2513 = vmatpush1.msra.mxu0 0.0
      %2514 = vmatprep.subr.mxu0 0.0
      %2515 = vmatpush1.msra.mxu0 0.0
      %2516 = vmatprep.subr.mxu0 0.0
      %2517 = vmatpush1.msra.mxu0 0.0
      %2518 = vmatprep.subr.mxu0 0.0
      %2519 = vmatpush1.msra.mxu0 0.0
      %2520 = vmatprep.subr.mxu0 0.0
      %2521 = vmatpush1.msra.mxu0 0.0
      %2522 = vmatprep.subr.mxu0 0.0
      %2523 = vmatpush1.msra.mxu0 0.0
      %2524 = vmatprep.subr.mxu0 0.0
      %2525 = vmatpush1.msra.mxu0 0.0
      %2526 = vmatprep.subr.mxu0 0.0
      %2527 = vmatpush1.msra.mxu0 0.0
      %2528 = vmatprep.subr.mxu0 0.0
      %2529 = vmatpush1.msra.mxu0 0.0
      %2530 = vmatprep.subr.mxu0 0.0
      %2531 = vmatpush1.msra.mxu0 0.0
      %2532 = vmatprep.subr.mxu0 0.0
      %2533 = vmatpush1.msra.mxu0 0.0
      %2534 = vmatprep.subr.mxu0 0.0
      %2535 = vmatpush1.msra.mxu0 0.0
      %2536 = vmatprep.subr.mxu0 0.0
      %2537 = vmatpush1.msra.mxu0 0.0
      %2538 = vmatprep.subr.mxu0 0.0
      %2539 = vmatpush1.msra.mxu0 0.0
      %2540 = vmatprep.subr.mxu0 0.0
      %2541 = vmatpush1.msra.mxu0 0.0
      %2542 = vmatprep.subr.mxu0 0.0
      %2543 = vmatpush1.msra.mxu0 0.0
      %2544 = vmatprep.subr.mxu0 0.0
      %2545 = vmatpush1.msra.mxu0 0.0
      %2546 = vmatprep.subr.mxu0 0.0
      %2547 = vmatpush1.msra.mxu0 0.0
      %2548 = vmatprep.subr.mxu0 0.0
      %2549 = vmatpush1.msra.mxu0 0.0
      %2550 = vmatprep.subr.mxu0 0.0
      %2551 = vmatpush1.msra.mxu0 0.0
      %2552 = vmatprep.subr.mxu0 0.0
      %2553 = vmatpush1.msra.mxu0 0.0
      %2554 = vmatprep.subr.mxu0 0.0
      %2555 = vmatpush1.msra.mxu0 0.0
      %2556 = vmatprep.subr.mxu0 0.0
      %2557 = vmatpush1.msra.mxu0 0.0
      %2558 = vmatprep.mubr.f32.mxu0 0.0
      %2559 = vmatmul.mubr.f32.gmra.mrb[0].mxu0 %v411
      %v2560 = vpop.f32.mrb[0].mxu0
      %v2561 = vadd.f32 %v332, %v2560
      %v2562 = vpop.f32.mrb[0].mxu0
      %2563 = vmatprep.mubr.f32.mxu0 0.0
      %2564 = vmatmul.mubr.f32.gmra.mrb[0].mxu0 %v414
      %v2565 = vpop.f32.mrb[0].mxu0
      %v2566 = vadd.f32 %v337, %v2565
      %v2567 = vpop.f32.mrb[0].mxu0
      %2568 = vmatprep.mubr.f32.mxu0 0.0
      %2569 = vmatmul.mubr.f32.gmra.mrb[0].mxu0 %v417
      %v2570 = vpop.f32.mrb[0].mxu0
      %v2571 = vadd.f32 %v342, %v2570
      %v2572 = vpop.f32.mrb[0].mxu0
      %2573 = vmatprep.mubr.f32.mxu0 0.0
      %2574 = vmatmul.mubr.f32.gmra.mrb[0].mxu0 %v420
      %v2575 = vpop.f32.mrb[0].mxu0
      %v2576 = vadd.f32 %v347, %v2575
      %v2577 = vpop.f32.mrb[0].mxu0
      %2578 = vmatprep.mubr.f32.mxu0 0.0
      %2579 = vmatmul.mubr.f32.gmra.mrb[0].mxu0 %v423
      %v2580 = vpop.f32.mrb[0].mxu0
      %v2581 = vadd.f32 %v352, %v2580
      %v2582 = vpop.f32.mrb[0].mxu0
      %2583 = vmatprep.mubr.f32.mxu0 0.0
      %2584 = vmatmul.mubr.f32.gmra.mrb[0].mxu0 %v426
      %v2585 = vpop.f32.mrb[0].mxu0
      %v2586 = vadd.f32 %v357, %v2585
      %v2587 = vpop.f32.mrb[0].mxu0
      %2588 = vmatprep.mubr.f32.mxu0 0.0
      %2589 = vmatmul.mubr.f32.gmra.mrb[0].mxu0 %v429
      %v2590 = vpop.f32.mrb[0].mxu0
      %v2591 = vadd.f32 %v362, %v2590
      %v2592 = vpop.f32.mrb[0].mxu0
      %2593 = vmatprep.mubr.f32.mxu0 0.0
      %2594 = vmatmul.mubr.f32.gmra.mrb[0].mxu0 %v432
      %v2595 = vpop.f32.mrb[0].mxu0
      %v2596 = vadd.f32 %v367, %v2595
      %v2597 = vpop.f32.mrb[0].mxu0
      %2598 = vmatprep.mubr.f32.mxu0 0.0
      %2599 = vmatmul.mubr.f32.gmra.mrb[0].mxu0 %v435
      %v2600 = vpop.f32.mrb[0].mxu0
      %v2601 = vadd.f32 %v372, %v2600
      %v2602 = vpop.f32.mrb[0].mxu0
      %2603 = vmatprep.mubr.f32.mxu0 0.0
      %2604 = vmatmul.mubr.f32.gmra.mrb[0].mxu0 %v438
      %v2605 = vpop.f32.mrb[0].mxu0
      %v2606 = vadd.f32 %v377, %v2605
      %v2607 = vpop.f32.mrb[0].mxu0
      %2608 = vmatprep.mubr.f32.mxu0 0.0
      %2609 = vmatmul.mubr.f32.gmra.mrb[0].mxu0 %v441
      %v2610 = vpop.f32.mrb[0].mxu0
      %v2611 = vadd.f32 %v382, %v2610
      %v2612 = vpop.f32.mrb[0].mxu0
      %2613 = vmatprep.mubr.f32.mxu0 0.0
      %2614 = vmatmul.mubr.f32.gmra.mrb[0].mxu0 %v444
      %v2615 = vpop.f32.mrb[0].mxu0
      %v2616 = vadd.f32 %v387, %v2615
      %v2617 = vpop.f32.mrb[0].mxu0
      %2618 = vmatprep.mubr.f32.mxu0 0.0
      %2619 = vmatmul.mubr.f32.gmra.mrb[0].mxu0 %v447
      %v2620 = vpop.f32.mrb[0].mxu0
      %v2621 = vadd.f32 %v392, %v2620
      %v2622 = vpop.f32.mrb[0].mxu0
      %2623 = vmatprep.mubr.f32.mxu0 0.0
      %2624 = vmatmul.mubr.f32.gmra.mrb[0].mxu0 %v450
      %v2625 = vpop.f32.mrb[0].mxu0
      %v2626 = vadd.f32 %v397, %v2625
      %v2627 = vpop.f32.mrb[0].mxu0
      %2628 = vmatprep.mubr.f32.mxu0 0.0
      %2629 = vmatmul.mubr.f32.gmra.mrb[0].mxu0 %v453
      %v2630 = vpop.f32.mrb[0].mxu0
      %v2631 = vadd.f32 %v402, %v2630
      %v2632 = vpop.f32.mrb[0].mxu0
      %2633 = vmatprep.mubr.f32.mxu0 0.0
      %2634 = vmatmul.mubr.f32.gmra.mrb[0].mxu0 %v456
      %v2635 = vpop.f32.mrb[0].mxu0
      %v2636 = vadd.f32 %v407, %v2635
      %v2637 = vpop.f32.mrb[0].mxu0
      %2638 = vdwg.mxu0
      %v2639 = vmax.f32 %v2561, 0.0
      %v2640 = vmax.f32 %v2566, 0.0
      %v2641 = vmax.f32 %v2571, 0.0
      %v2642 = vmax.f32 %v2576, 0.0
      %v2643 = vmax.f32 %v2581, 0.0
      %v2644 = vmax.f32 %v2586, 0.0
      %v2645 = vmax.f32 %v2591, 0.0
      %v2646 = vmax.f32 %v2596, 0.0
      %v2647 = vmax.f32 %v2601, 0.0
      %v2648 = vmax.f32 %v2606, 0.0
      %v2649 = vmax.f32 %v2611, 0.0
      %v2650 = vmax.f32 %v2616, 0.0
      %v2651 = vmax.f32 %v2621, 0.0
      %v2652 = vmax.f32 %v2626, 0.0
      %v2653 = vmax.f32 %v2631, 0.0
      %v2654 = vmax.f32 %v2636, 0.0
      %2655 = vadd.xlane.f32.xlu0 %v2639
      %v2656 = vpop.xlane.xlu0 %2655
      %2657 = vadd.xlane.f32.xlu0 %v2640
      %v2658 = vpop.xlane.xlu0 %2657
      %2659 = vadd.xlane.f32.xlu0 %v2641
      %v2660 = vpop.xlane.xlu0 %2659
      %2661 = vadd.xlane.f32.xlu0 %v2642
      %v2662 = vpop.xlane.xlu0 %2661
      %2663 = vadd.xlane.f32.xlu0 %v2643
      %v2664 = vpop.xlane.xlu0 %2663
      %2665 = vadd.xlane.f32.xlu0 %v2644
      %v2666 = vpop.xlane.xlu0 %2665
      %2667 = vadd.xlane.f32.xlu0 %v2645
      %v2668 = vpop.xlane.xlu0 %2667
      %2669 = vadd.xlane.f32.xlu0 %v2646
      %v2670 = vpop.xlane.xlu0 %2669
      %2671 = vadd.xlane.f32.xlu0 %v2647
      %v2672 = vpop.xlane.xlu0 %2671
      %2673 = vadd.xlane.f32.xlu0 %v2648
      %v2674 = vpop.xlane.xlu0 %2673
      %2675 = vadd.xlane.f32.xlu0 %v2649
      %v2676 = vpop.xlane.xlu0 %2675
      %2677 = vadd.xlane.f32.xlu0 %v2650
      %v2678 = vpop.xlane.xlu0 %2677
      %2679 = vadd.xlane.f32.xlu0 %v2651
      %v2680 = vpop.xlane.xlu0 %2679
      %2681 = vadd.xlane.f32.xlu0 %v2652
      %v2682 = vpop.xlane.xlu0 %2681
      %2683 = vadd.xlane.f32.xlu0 %v2653
      %v2684 = vpop.xlane.xlu0 %2683
      %2685 = vadd.xlane.f32.xlu0 %v2654
      %v2686 = vpop.xlane.xlu0 %2685
      %v2687 = vadd.f32 %v2473, %v2656
      %v2688 = vadd.f32 %v2474, %v2658
      %v2689 = vadd.f32 %v2475, %v2660
      %v2690 = vadd.f32 %v2476, %v2662
      %v2691 = vadd.f32 %v2477, %v2664
      %v2692 = vadd.f32 %v2478, %v2666
      %v2693 = vadd.f32 %v2479, %v2668
      %v2694 = vadd.f32 %v2480, %v2670
      %v2695 = vadd.f32 %v2481, %v2672
      %v2696 = vadd.f32 %v2482, %v2674
      %v2697 = vadd.f32 %v2483, %v2676
      %v2698 = vadd.f32 %v2484, %v2678
      %v2699 = vadd.f32 %v2485, %v2680
      %v2700 = vadd.f32 %v2486, %v2682
      %v2701 = vadd.f32 %v2487, %v2684
      %v2702 = vadd.f32 %v2488, %v2686
      %v2703 = vld [vmem:[%s3 + $0x18] sm:$0xff]
      %v2704 = vld [vmem:[%s3 + $0x40] sm:$0xff]
      %v2705 = vld [vmem:[%s3 + $0x68] sm:$0xff]
      %v2706 = vld [vmem:[%s3 + $0x90] sm:$0xff]
      %v2707 = vld [vmem:[%s3 + $0xb8] sm:$0xff]
      %v2708 = vld [vmem:[%s3 + $0xe0] sm:$0xff]
      %v2709 = vld [vmem:[%s3 + $0x108] sm:$0xff]
      %v2710 = vld [vmem:[%s3 + $0x130] sm:$0xff]
      %v2711 = vld [vmem:[%s3 + $0x158] sm:$0xff]
      %v2712 = vld [vmem:[%s3 + $0x180] sm:$0xff]
      %v2713 = vld [vmem:[%s3 + $0x1a8] sm:$0xff]
      %v2714 = vld [vmem:[%s3 + $0x1d0] sm:$0xff]
      %v2715 = vld [vmem:[%s3 + $0x1f8] sm:$0xff]
      %v2716 = vld [vmem:[%s3 + $0x220] sm:$0xff]
      %v2717 = vld [vmem:[%s3 + $0x248] sm:$0xff]
      %v2718 = vld [vmem:[%s3 + $0x270] sm:$0xff]
      %2719 = vmatprep.subr.mxu0 0.0
      %2720 = vmatpush1.msra.mxu0 %v2687
      %2721 = vmatprep.subr.mxu0 0.0
      %2722 = vmatpush1.msra.mxu0 %v2688
      %2723 = vmatprep.subr.mxu0 0.0
      %2724 = vmatpush1.msra.mxu0 %v2689
      %2725 = vmatprep.subr.mxu0 0.0
      %2726 = vmatpush1.msra.mxu0 %v2690
      %2727 = vmatprep.subr.mxu0 0.0
      %2728 = vmatpush1.msra.mxu0 %v2691
      %2729 = vmatprep.subr.mxu0 0.0
      %2730 = vmatpush1.msra.mxu0 %v2692
      %2731 = vmatprep.subr.mxu0 0.0
      %2732 = vmatpush1.msra.mxu0 %v2693
      %2733 = vmatprep.subr.mxu0 0.0
      %2734 = vmatpush1.msra.mxu0 %v2694
      %2735 = vmatprep.subr.mxu0 0.0
      %2736 = vmatpush1.msra.mxu0 %v2695
      %2737 = vmatprep.subr.mxu0 0.0
      %2738 = vmatpush1.msra.mxu0 %v2696
      %2739 = vmatprep.subr.mxu0 0.0
      %2740 = vmatpush1.msra.mxu0 %v2697
      %2741 = vmatprep.subr.mxu0 0.0
      %2742 = vmatpush1.msra.mxu0 %v2698
      %2743 = vmatprep.subr.mxu0 0.0
      %2744 = vmatpush1.msra.mxu0 %v2699
      %2745 = vmatprep.subr.mxu0 0.0
      %2746 = vmatpush1.msra.mxu0 %v2700
      %2747 = vmatprep.subr.mxu0 0.0
      %2748 = vmatpush1.msra.mxu0 %v2701
      %2749 = vmatprep.subr.mxu0 0.0
      %2750 = vmatpush1.msra.mxu0 %v2702
      %2751 = vmatprep.subr.mxu0 0.0
      %2752 = vmatpush1.msra.mxu0 0.0
      %2753 = vmatprep.subr.mxu0 0.0
      %2754 = vmatpush1.msra.mxu0 0.0
      %2755 = vmatprep.subr.mxu0 0.0
      %2756 = vmatpush1.msra.mxu0 0.0
      %2757 = vmatprep.subr.mxu0 0.0
      %2758 = vmatpush1.msra.mxu0 0.0
      %2759 = vmatprep.subr.mxu0 0.0
      %2760 = vmatpush1.msra.mxu0 0.0
      %2761 = vmatprep.subr.mxu0 0.0
      %2762 = vmatpush1.msra.mxu0 0.0
      %2763 = vmatprep.subr.mxu0 0.0
      %2764 = vmatpush1.msra.mxu0 0.0
      %2765 = vmatprep.subr.mxu0 0.0
      %2766 = vmatpush1.msra.mxu0 0.0
      %2767 = vmatprep.subr.mxu0 0.0
      %2768 = vmatpush1.msra.mxu0 0.0
      %2769 = vmatprep.subr.mxu0 0.0
      %2770 = vmatpush1.msra.mxu0 0.0
      %2771 = vmatprep.subr.mxu0 0.0
      %2772 = vmatpush1.msra.mxu0 0.0
      %2773 = vmatprep.subr.mxu0 0.0
      %2774 = vmatpush1.msra.mxu0 0.0
      %2775 = vmatprep.subr.mxu0 0.0
      %2776 = vmatpush1.msra.mxu0 0.0
      %2777 = vmatprep.subr.mxu0 0.0
      %2778 = vmatpush1.msra.mxu0 0.0
      %2779 = vmatprep.subr.mxu0 0.0
      %2780 = vmatpush1.msra.mxu0 0.0
      %2781 = vmatprep.subr.mxu0 0.0
      %2782 = vmatpush1.msra.mxu0 0.0
      %2783 = vmatprep.mubr.f32.mxu0 0.0
      %2784 = vmatmul.mubr.f32.gmra.mrb[0].mxu0 %v2703
      %v2785 = vpop.f32.mrb[0].mxu0
      %v2786 = vadd.f32 0.0, %v2785
      %v2787 = vpop.f32.mrb[0].mxu0
      %2788 = vmatprep.mubr.f32.mxu0 0.0
      %2789 = vmatmul.mubr.f32.gmra.mrb[0].mxu0 %v2704
      %v2790 = vpop.f32.mrb[0].mxu0
      %v2791 = vadd.f32 0.0, %v2790
      %v2792 = vpop.f32.mrb[0].mxu0
      %2793 = vmatprep.mubr.f32.mxu0 0.0
      %2794 = vmatmul.mubr.f32.gmra.mrb[0].mxu0 %v2705
      %v2795 = vpop.f32.mrb[0].mxu0
      %v2796 = vadd.f32 0.0, %v2795
      %v2797 = vpop.f32.mrb[0].mxu0
      %2798 = vmatprep.mubr.f32.mxu0 0.0
      %2799 = vmatmul.mubr.f32.gmra.mrb[0].mxu0 %v2706
      %v2800 = vpop.f32.mrb[0].mxu0
      %v2801 = vadd.f32 0.0, %v2800
      %v2802 = vpop.f32.mrb[0].mxu0
      %2803 = vmatprep.mubr.f32.mxu0 0.0
      %2804 = vmatmul.mubr.f32.gmra.mrb[0].mxu0 %v2707
      %v2805 = vpop.f32.mrb[0].mxu0
      %v2806 = vadd.f32 0.0, %v2805
      %v2807 = vpop.f32.mrb[0].mxu0
      %2808 = vmatprep.mubr.f32.mxu0 0.0
      %2809 = vmatmul.mubr.f32.gmra.mrb[0].mxu0 %v2708
      %v2810 = vpop.f32.mrb[0].mxu0
      %v2811 = vadd.f32 0.0, %v2810
      %v2812 = vpop.f32.mrb[0].mxu0
      %2813 = vmatprep.mubr.f32.mxu0 0.0
      %2814 = vmatmul.mubr.f32.gmra.mrb[0].mxu0 %v2709
      %v2815 = vpop.f32.mrb[0].mxu0
      %v2816 = vadd.f32 0.0, %v2815
      %v2817 = vpop.f32.mrb[0].mxu0
      %2818 = vmatprep.mubr.f32.mxu0 0.0
      %2819 = vmatmul.mubr.f32.gmra.mrb[0].mxu0 %v2710
      %v2820 = vpop.f32.mrb[0].mxu0
      %v2821 = vadd.f32 0.0, %v2820
      %v2822 = vpop.f32.mrb[0].mxu0
      %2823 = vmatprep.mubr.f32.mxu0 0.0
      %2824 = vmatmul.mubr.f32.gmra.mrb[0].mxu0 %v2711
      %v2825 = vpop.f32.mrb[0].mxu0
      %v2826 = vadd.f32 0.0, %v2825
      %v2827 = vpop.f32.mrb[0].mxu0
      %2828 = vmatprep.mubr.f32.mxu0 0.0
      %2829 = vmatmul.mubr.f32.gmra.mrb[0].mxu0 %v2712
      %v2830 = vpop.f32.mrb[0].mxu0
      %v2831 = vadd.f32 0.0, %v2830
      %v2832 = vpop.f32.mrb[0].mxu0
      %2833 = vmatprep.mubr.f32.mxu0 0.0
      %2834 = vmatmul.mubr.f32.gmra.mrb[0].mxu0 %v2713
      %v2835 = vpop.f32.mrb[0].mxu0
      %v2836 = vadd.f32 0.0, %v2835
      %v2837 = vpop.f32.mrb[0].mxu0
      %2838 = vmatprep.mubr.f32.mxu0 0.0
      %2839 = vmatmul.mubr.f32.gmra.mrb[0].mxu0 %v2714
      %v2840 = vpop.f32.mrb[0].mxu0
      %v2841 = vadd.f32 0.0, %v2840
      %v2842 = vpop.f32.mrb[0].mxu0
      %2843 = vmatprep.mubr.f32.mxu0 0.0
      %2844 = vmatmul.mubr.f32.gmra.mrb[0].mxu0 %v2715
      %v2845 = vpop.f32.mrb[0].mxu0
      %v2846 = vadd.f32 0.0, %v2845
      %v2847 = vpop.f32.mrb[0].mxu0
      %2848 = vmatprep.mubr.f32.mxu0 0.0
      %2849 = vmatmul.mubr.f32.gmra.mrb[0].mxu0 %v2716
      %v2850 = vpop.f32.mrb[0].mxu0
      %v2851 = vadd.f32 0.0, %v2850
      %v2852 = vpop.f32.mrb[0].mxu0
      %2853 = vmatprep.mubr.f32.mxu0 0.0
      %2854 = vmatmul.mubr.f32.gmra.mrb[0].mxu0 %v2717
      %v2855 = vpop.f32.mrb[0].mxu0
      %v2856 = vadd.f32 0.0, %v2855
      %v2857 = vpop.f32.mrb[0].mxu0
      %2858 = vmatprep.mubr.f32.mxu0 0.0
      %2859 = vmatmul.mubr.f32.gmra.mrb[0].mxu0 %v2718
      %v2860 = vpop.f32.mrb[0].mxu0
      %v2861 = vadd.f32 0.0, %v2860
      %v2862 = vpop.f32.mrb[0].mxu0
      %2863 = vdwg.mxu0
      %v2864 = vadd.f32 %v2258, %v2786
      %v2865 = vadd.f32 %v2259, %v2791
      %v2866 = vadd.f32 %v2260, %v2796
      %v2867 = vadd.f32 %v2261, %v2801
      %v2868 = vadd.f32 %v2262, %v2806
      %v2869 = vadd.f32 %v2263, %v2811
      %v2870 = vadd.f32 %v2264, %v2816
      %v2871 = vadd.f32 %v2265, %v2821
      %v2872 = vadd.f32 %v2266, %v2826
      %v2873 = vadd.f32 %v2267, %v2831
      %v2874 = vadd.f32 %v2268, %v2836
      %v2875 = vadd.f32 %v2269, %v2841
      %v2876 = vadd.f32 %v2270, %v2846
      %v2877 = vadd.f32 %v2271, %v2851
      %v2878 = vadd.f32 %v2272, %v2856
      %v2879 = vadd.f32 %v2273, %v2861
      %s2880 = scalar_lea.vmem %s273, 128
      %v2881 = vld [vmem:[%s2880] sm:$0xff]
      %v2882 = vld [vmem:[%s2880 + $0x10] sm:$0x1]
      %v2884 = vsel %vm458, %v2882, 0
      %2886 = vmatprep.subr.mxu0 0.0
      %2887 = vmatpush1.msra.mxu0 %v2881
      %2888 = vmatprep.subr.mxu0 0.0
      %2889 = vmatpush1.msra.mxu0 %v2884
      %2890 = vmatprep.subr.mxu0 0.0
      %2891 = vmatpush1.msra.mxu0 0.0
      %2892 = vmatprep.subr.mxu0 0.0
      %2893 = vmatpush1.msra.mxu0 0.0
      %2894 = vmatprep.subr.mxu0 0.0
      %2895 = vmatpush1.msra.mxu0 0.0
      %2896 = vmatprep.subr.mxu0 0.0
      %2897 = vmatpush1.msra.mxu0 0.0
      %2898 = vmatprep.subr.mxu0 0.0
      %2899 = vmatpush1.msra.mxu0 0.0
      %2900 = vmatprep.subr.mxu0 0.0
      %2901 = vmatpush1.msra.mxu0 0.0
      %2902 = vmatprep.subr.mxu0 0.0
      %2903 = vmatpush1.msra.mxu0 0.0
      %2904 = vmatprep.subr.mxu0 0.0
      %2905 = vmatpush1.msra.mxu0 0.0
      %2906 = vmatprep.subr.mxu0 0.0
      %2907 = vmatpush1.msra.mxu0 0.0
      %2908 = vmatprep.subr.mxu0 0.0
      %2909 = vmatpush1.msra.mxu0 0.0
      %2910 = vmatprep.subr.mxu0 0.0
      %2911 = vmatpush1.msra.mxu0 0.0
      %2912 = vmatprep.subr.mxu0 0.0
      %2913 = vmatpush1.msra.mxu0 0.0
      %2914 = vmatprep.subr.mxu0 0.0
      %2915 = vmatpush1.msra.mxu0 0.0
      %2916 = vmatprep.subr.mxu0 0.0
      %2917 = vmatpush1.msra.mxu0 0.0
      %2918 = vmatprep.subr.mxu0 0.0
      %2919 = vmatpush1.msra.mxu0 0.0
      %2920 = vmatprep.subr.mxu0 0.0
      %2921 = vmatpush1.msra.mxu0 0.0
      %2922 = vmatprep.subr.mxu0 0.0
      %2923 = vmatpush1.msra.mxu0 0.0
      %2924 = vmatprep.subr.mxu0 0.0
      %2925 = vmatpush1.msra.mxu0 0.0
      %2926 = vmatprep.subr.mxu0 0.0
      %2927 = vmatpush1.msra.mxu0 0.0
      %2928 = vmatprep.subr.mxu0 0.0
      %2929 = vmatpush1.msra.mxu0 0.0
      %2930 = vmatprep.subr.mxu0 0.0
      %2931 = vmatpush1.msra.mxu0 0.0
      %2932 = vmatprep.subr.mxu0 0.0
      %2933 = vmatpush1.msra.mxu0 0.0
      %2934 = vmatprep.subr.mxu0 0.0
      %2935 = vmatpush1.msra.mxu0 0.0
      %2936 = vmatprep.subr.mxu0 0.0
      %2937 = vmatpush1.msra.mxu0 0.0
      %2938 = vmatprep.subr.mxu0 0.0
      %2939 = vmatpush1.msra.mxu0 0.0
      %2940 = vmatprep.subr.mxu0 0.0
      %2941 = vmatpush1.msra.mxu0 0.0
      %2942 = vmatprep.subr.mxu0 0.0
      %2943 = vmatpush1.msra.mxu0 0.0
      %2944 = vmatprep.subr.mxu0 0.0
      %2945 = vmatpush1.msra.mxu0 0.0
      %2946 = vmatprep.subr.mxu0 0.0
      %2947 = vmatpush1.msra.mxu0 0.0
      %2948 = vmatprep.subr.mxu0 0.0
      %2949 = vmatpush1.msra.mxu0 0.0
      %2950 = vmatprep.mubr.f32.mxu0 0.0
      %2951 = vmatmul.mubr.f32.gmra.mrb[0].mxu0 %v411
      %v2952 = vpop.f32.mrb[0].mxu0
      %v2953 = vadd.f32 %v332, %v2952
      %v2954 = vpop.f32.mrb[0].mxu0
      %2955 = vmatprep.mubr.f32.mxu0 0.0
      %2956 = vmatmul.mubr.f32.gmra.mrb[0].mxu0 %v414
      %v2957 = vpop.f32.mrb[0].mxu0
      %v2958 = vadd.f32 %v337, %v2957
      %v2959 = vpop.f32.mrb[0].mxu0
      %2960 = vmatprep.mubr.f32.mxu0 0.0
      %2961 = vmatmul.mubr.f32.gmra.mrb[0].mxu0 %v417
      %v2962 = vpop.f32.mrb[0].mxu0
      %v2963 = vadd.f32 %v342, %v2962
      %v2964 = vpop.f32.mrb[0].mxu0
      %2965 = vmatprep.mubr.f32.mxu0 0.0
      %2966 = vmatmul.mubr.f32.gmra.mrb[0].mxu0 %v420
      %v2967 = vpop.f32.mrb[0].mxu0
      %v2968 = vadd.f32 %v347, %v2967
      %v2969 = vpop.f32.mrb[0].mxu0
      %2970 = vmatprep.mubr.f32.mxu0 0.0
      %2971 = vmatmul.mubr.f32.gmra.mrb[0].mxu0 %v423
      %v2972 = vpop.f32.mrb[0].mxu0
      %v2973 = vadd.f32 %v352, %v2972
      %v2974 = vpop.f32.mrb[0].mxu0
      %2975 = vmatprep.mubr.f32.mxu0 0.0
      %2976 = vmatmul.mubr.f32.gmra.mrb[0].mxu0 %v426
      %v2977 = vpop.f32.mrb[0].mxu0
      %v2978 = vadd.f32 %v357, %v2977
      %v2979 = vpop.f32.mrb[0].mxu0
      %2980 = vmatprep.mubr.f32.mxu0 0.0
      %2981 = vmatmul.mubr.f32.gmra.mrb[0].mxu0 %v429
      %v2982 = vpop.f32.mrb[0].mxu0
      %v2983 = vadd.f32 %v362, %v2982
      %v2984 = vpop.f32.mrb[0].mxu0
      %2985 = vmatprep.mubr.f32.mxu0 0.0
      %2986 = vmatmul.mubr.f32.gmra.mrb[0].mxu0 %v432
      %v2987 = vpop.f32.mrb[0].mxu0
      %v2988 = vadd.f32 %v367, %v2987
      %v2989 = vpop.f32.mrb[0].mxu0
      %2990 = vmatprep.mubr.f32.mxu0 0.0
      %2991 = vmatmul.mubr.f32.gmra.mrb[0].mxu0 %v435
      %v2992 = vpop.f32.mrb[0].mxu0
      %v2993 = vadd.f32 %v372, %v2992
      %v2994 = vpop.f32.mrb[0].mxu0
      %2995 = vmatprep.mubr.f32.mxu0 0.0
      %2996 = vmatmul.mubr.f32.gmra.mrb[0].mxu0 %v438
      %v2997 = vpop.f32.mrb[0].mxu0
      %v2998 = vadd.f32 %v377, %v2997
      %v2999 = vpop.f32.mrb[0].mxu0
      %3000 = vmatprep.mubr.f32.mxu0 0.0
      %3001 = vmatmul.mubr.f32.gmra.mrb[0].mxu0 %v441
      %v3002 = vpop.f32.mrb[0].mxu0
      %v3003 = vadd.f32 %v382, %v3002
      %v3004 = vpop.f32.mrb[0].mxu0
      %3005 = vmatprep.mubr.f32.mxu0 0.0
      %3006 = vmatmul.mubr.f32.gmra.mrb[0].mxu0 %v444
      %v3007 = vpop.f32.mrb[0].mxu0
      %v3008 = vadd.f32 %v387, %v3007
      %v3009 = vpop.f32.mrb[0].mxu0
      %3010 = vmatprep.mubr.f32.mxu0 0.0
      %3011 = vmatmul.mubr.f32.gmra.mrb[0].mxu0 %v447
      %v3012 = vpop.f32.mrb[0].mxu0
      %v3013 = vadd.f32 %v392, %v3012
      %v3014 = vpop.f32.mrb[0].mxu0
      %3015 = vmatprep.mubr.f32.mxu0 0.0
      %3016 = vmatmul.mubr.f32.gmra.mrb[0].mxu0 %v450
      %v3017 = vpop.f32.mrb[0].mxu0
      %v3018 = vadd.f32 %v397, %v3017
      %v3019 = vpop.f32.mrb[0].mxu0
      %3020 = vmatprep.mubr.f32.mxu0 0.0
      %3021 = vmatmul.mubr.f32.gmra.mrb[0].mxu0 %v453
      %v3022 = vpop.f32.mrb[0].mxu0
      %v3023 = vadd.f32 %v402, %v3022
      %v3024 = vpop.f32.mrb[0].mxu0
      %3025 = vmatprep.mubr.f32.mxu0 0.0
      %3026 = vmatmul.mubr.f32.gmra.mrb[0].mxu0 %v456
      %v3027 = vpop.f32.mrb[0].mxu0
      %v3028 = vadd.f32 %v407, %v3027
      %v3029 = vpop.f32.mrb[0].mxu0
      %3030 = vdwg.mxu0
      %v3031 = vmax.f32 %v2953, 0.0
      %v3032 = vmax.f32 %v2958, 0.0
      %v3033 = vmax.f32 %v2963, 0.0
      %v3034 = vmax.f32 %v2968, 0.0
      %v3035 = vmax.f32 %v2973, 0.0
      %v3036 = vmax.f32 %v2978, 0.0
      %v3037 = vmax.f32 %v2983, 0.0
      %v3038 = vmax.f32 %v2988, 0.0
      %v3039 = vmax.f32 %v2993, 0.0
      %v3040 = vmax.f32 %v2998, 0.0
      %v3041 = vmax.f32 %v3003, 0.0
      %v3042 = vmax.f32 %v3008, 0.0
      %v3043 = vmax.f32 %v3013, 0.0
      %v3044 = vmax.f32 %v3018, 0.0
      %v3045 = vmax.f32 %v3023, 0.0
      %v3046 = vmax.f32 %v3028, 0.0
      %3047 = vadd.xlane.f32.xlu0 %v3031
      %v3048 = vpop.xlane.xlu0 %3047
      %3049 = vadd.xlane.f32.xlu0 %v3032
      %v3050 = vpop.xlane.xlu0 %3049
      %3051 = vadd.xlane.f32.xlu0 %v3033
      %v3052 = vpop.xlane.xlu0 %3051
      %3053 = vadd.xlane.f32.xlu0 %v3034
      %v3054 = vpop.xlane.xlu0 %3053
      %3055 = vadd.xlane.f32.xlu0 %v3035
      %v3056 = vpop.xlane.xlu0 %3055
      %3057 = vadd.xlane.f32.xlu0 %v3036
      %v3058 = vpop.xlane.xlu0 %3057
      %3059 = vadd.xlane.f32.xlu0 %v3037
      %v3060 = vpop.xlane.xlu0 %3059
      %3061 = vadd.xlane.f32.xlu0 %v3038
      %v3062 = vpop.xlane.xlu0 %3061
      %3063 = vadd.xlane.f32.xlu0 %v3039
      %v3064 = vpop.xlane.xlu0 %3063
      %3065 = vadd.xlane.f32.xlu0 %v3040
      %v3066 = vpop.xlane.xlu0 %3065
      %3067 = vadd.xlane.f32.xlu0 %v3041
      %v3068 = vpop.xlane.xlu0 %3067
      %3069 = vadd.xlane.f32.xlu0 %v3042
      %v3070 = vpop.xlane.xlu0 %3069
      %3071 = vadd.xlane.f32.xlu0 %v3043
      %v3072 = vpop.xlane.xlu0 %3071
      %3073 = vadd.xlane.f32.xlu0 %v3044
      %v3074 = vpop.xlane.xlu0 %3073
      %3075 = vadd.xlane.f32.xlu0 %v3045
      %v3076 = vpop.xlane.xlu0 %3075
      %3077 = vadd.xlane.f32.xlu0 %v3046
      %v3078 = vpop.xlane.xlu0 %3077
      %v3079 = vadd.f32 %v3048, 0.0
      %v3080 = vadd.f32 %v3050, 0.0
      %v3081 = vadd.f32 %v3052, 0.0
      %v3082 = vadd.f32 %v3054, 0.0
      %v3083 = vadd.f32 %v3056, 0.0
      %v3084 = vadd.f32 %v3058, 0.0
      %v3085 = vadd.f32 %v3060, 0.0
      %v3086 = vadd.f32 %v3062, 0.0
      %v3087 = vadd.f32 %v3064, 0.0
      %v3088 = vadd.f32 %v3066, 0.0
      %v3089 = vadd.f32 %v3068, 0.0
      %v3090 = vadd.f32 %v3070, 0.0
      %v3091 = vadd.f32 %v3072, 0.0
      %v3092 = vadd.f32 %v3074, 0.0
      %v3093 = vadd.f32 %v3076, 0.0
      %v3094 = vadd.f32 %v3078, 0.0
      %v3095 = vld [vmem:[%s2880 + $0x8] sm:$0xff]
      %v3096 = vld [vmem:[%s2880 + $0x18] sm:$0x1]
      %v3098 = vsel %vm458, %v3096, 0
      %3100 = vmatprep.subr.mxu0 0.0
      %3101 = vmatpush1.msra.mxu0 %v3095
      %3102 = vmatprep.subr.mxu0 0.0
      %3103 = vmatpush1.msra.mxu0 %v3098
      %3104 = vmatprep.subr.mxu0 0.0
      %3105 = vmatpush1.msra.mxu0 0.0
      %3106 = vmatprep.subr.mxu0 0.0
      %3107 = vmatpush1.msra.mxu0 0.0
      %3108 = vmatprep.subr.mxu0 0.0
      %3109 = vmatpush1.msra.mxu0 0.0
      %3110 = vmatprep.subr.mxu0 0.0
      %3111 = vmatpush1.msra.mxu0 0.0
      %3112 = vmatprep.subr.mxu0 0.0
      %3113 = vmatpush1.msra.mxu0 0.0
      %3114 = vmatprep.subr.mxu0 0.0
      %3115 = vmatpush1.msra.mxu0 0.0
      %3116 = vmatprep.subr.mxu0 0.0
      %3117 = vmatpush1.msra.mxu0 0.0
      %3118 = vmatprep.subr.mxu0 0.0
      %3119 = vmatpush1.msra.mxu0 0.0
      %3120 = vmatprep.subr.mxu0 0.0
      %3121 = vmatpush1.msra.mxu0 0.0
      %3122 = vmatprep.subr.mxu0 0.0
      %3123 = vmatpush1.msra.mxu0 0.0
      %3124 = vmatprep.subr.mxu0 0.0
      %3125 = vmatpush1.msra.mxu0 0.0
      %3126 = vmatprep.subr.mxu0 0.0
      %3127 = vmatpush1.msra.mxu0 0.0
      %3128 = vmatprep.subr.mxu0 0.0
      %3129 = vmatpush1.msra.mxu0 0.0
      %3130 = vmatprep.subr.mxu0 0.0
      %3131 = vmatpush1.msra.mxu0 0.0
      %3132 = vmatprep.subr.mxu0 0.0
      %3133 = vmatpush1.msra.mxu0 0.0
      %3134 = vmatprep.subr.mxu0 0.0
      %3135 = vmatpush1.msra.mxu0 0.0
      %3136 = vmatprep.subr.mxu0 0.0
      %3137 = vmatpush1.msra.mxu0 0.0
      %3138 = vmatprep.subr.mxu0 0.0
      %3139 = vmatpush1.msra.mxu0 0.0
      %3140 = vmatprep.subr.mxu0 0.0
      %3141 = vmatpush1.msra.mxu0 0.0
      %3142 = vmatprep.subr.mxu0 0.0
      %3143 = vmatpush1.msra.mxu0 0.0
      %3144 = vmatprep.subr.mxu0 0.0
      %3145 = vmatpush1.msra.mxu0 0.0
      %3146 = vmatprep.subr.mxu0 0.0
      %3147 = vmatpush1.msra.mxu0 0.0
      %3148 = vmatprep.subr.mxu0 0.0
      %3149 = vmatpush1.msra.mxu0 0.0
      %3150 = vmatprep.subr.mxu0 0.0
      %3151 = vmatpush1.msra.mxu0 0.0
      %3152 = vmatprep.subr.mxu0 0.0
      %3153 = vmatpush1.msra.mxu0 0.0
      %3154 = vmatprep.subr.mxu0 0.0
      %3155 = vmatpush1.msra.mxu0 0.0
      %3156 = vmatprep.subr.mxu0 0.0
      %3157 = vmatpush1.msra.mxu0 0.0
      %3158 = vmatprep.subr.mxu0 0.0
      %3159 = vmatpush1.msra.mxu0 0.0
      %3160 = vmatprep.subr.mxu0 0.0
      %3161 = vmatpush1.msra.mxu0 0.0
      %3162 = vmatprep.subr.mxu0 0.0
      %3163 = vmatpush1.msra.mxu0 0.0
      %3164 = vmatprep.mubr.f32.mxu0 0.0
      %3165 = vmatmul.mubr.f32.gmra.mrb[0].mxu0 %v411
      %v3166 = vpop.f32.mrb[0].mxu0
      %v3167 = vadd.f32 %v332, %v3166
      %v3168 = vpop.f32.mrb[0].mxu0
      %3169 = vmatprep.mubr.f32.mxu0 0.0
      %3170 = vmatmul.mubr.f32.gmra.mrb[0].mxu0 %v414
      %v3171 = vpop.f32.mrb[0].mxu0
      %v3172 = vadd.f32 %v337, %v3171
      %v3173 = vpop.f32.mrb[0].mxu0
      %3174 = vmatprep.mubr.f32.mxu0 0.0
      %3175 = vmatmul.mubr.f32.gmra.mrb[0].mxu0 %v417
      %v3176 = vpop.f32.mrb[0].mxu0
      %v3177 = vadd.f32 %v342, %v3176
      %v3178 = vpop.f32.mrb[0].mxu0
      %3179 = vmatprep.mubr.f32.mxu0 0.0
      %3180 = vmatmul.mubr.f32.gmra.mrb[0].mxu0 %v420
      %v3181 = vpop.f32.mrb[0].mxu0
      %v3182 = vadd.f32 %v347, %v3181
      %v3183 = vpop.f32.mrb[0].mxu0
      %3184 = vmatprep.mubr.f32.mxu0 0.0
      %3185 = vmatmul.mubr.f32.gmra.mrb[0].mxu0 %v423
      %v3186 = vpop.f32.mrb[0].mxu0
      %v3187 = vadd.f32 %v352, %v3186
      %v3188 = vpop.f32.mrb[0].mxu0
      %3189 = vmatprep.mubr.f32.mxu0 0.0
      %3190 = vmatmul.mubr.f32.gmra.mrb[0].mxu0 %v426
      %v3191 = vpop.f32.mrb[0].mxu0
      %v3192 = vadd.f32 %v357, %v3191
      %v3193 = vpop.f32.mrb[0].mxu0
      %3194 = vmatprep.mubr.f32.mxu0 0.0
      %3195 = vmatmul.mubr.f32.gmra.mrb[0].mxu0 %v429
      %v3196 = vpop.f32.mrb[0].mxu0
      %v3197 = vadd.f32 %v362, %v3196
      %v3198 = vpop.f32.mrb[0].mxu0
      %3199 = vmatprep.mubr.f32.mxu0 0.0
      %3200 = vmatmul.mubr.f32.gmra.mrb[0].mxu0 %v432
      %v3201 = vpop.f32.mrb[0].mxu0
      %v3202 = vadd.f32 %v367, %v3201
      %v3203 = vpop.f32.mrb[0].mxu0
      %3204 = vmatprep.mubr.f32.mxu0 0.0
      %3205 = vmatmul.mubr.f32.gmra.mrb[0].mxu0 %v435
      %v3206 = vpop.f32.mrb[0].mxu0
      %v3207 = vadd.f32 %v372, %v3206
      %v3208 = vpop.f32.mrb[0].mxu0
      %3209 = vmatprep.mubr.f32.mxu0 0.0
      %3210 = vmatmul.mubr.f32.gmra.mrb[0].mxu0 %v438
      %v3211 = vpop.f32.mrb[0].mxu0
      %v3212 = vadd.f32 %v377, %v3211
      %v3213 = vpop.f32.mrb[0].mxu0
      %3214 = vmatprep.mubr.f32.mxu0 0.0
      %3215 = vmatmul.mubr.f32.gmra.mrb[0].mxu0 %v441
      %v3216 = vpop.f32.mrb[0].mxu0
      %v3217 = vadd.f32 %v382, %v3216
      %v3218 = vpop.f32.mrb[0].mxu0
      %3219 = vmatprep.mubr.f32.mxu0 0.0
      %3220 = vmatmul.mubr.f32.gmra.mrb[0].mxu0 %v444
      %v3221 = vpop.f32.mrb[0].mxu0
      %v3222 = vadd.f32 %v387, %v3221
      %v3223 = vpop.f32.mrb[0].mxu0
      %3224 = vmatprep.mubr.f32.mxu0 0.0
      %3225 = vmatmul.mubr.f32.gmra.mrb[0].mxu0 %v447
      %v3226 = vpop.f32.mrb[0].mxu0
      %v3227 = vadd.f32 %v392, %v3226
      %v3228 = vpop.f32.mrb[0].mxu0
      %3229 = vmatprep.mubr.f32.mxu0 0.0
      %3230 = vmatmul.mubr.f32.gmra.mrb[0].mxu0 %v450
      %v3231 = vpop.f32.mrb[0].mxu0
      %v3232 = vadd.f32 %v397, %v3231
      %v3233 = vpop.f32.mrb[0].mxu0
      %3234 = vmatprep.mubr.f32.mxu0 0.0
      %3235 = vmatmul.mubr.f32.gmra.mrb[0].mxu0 %v453
      %v3236 = vpop.f32.mrb[0].mxu0
      %v3237 = vadd.f32 %v402, %v3236
      %v3238 = vpop.f32.mrb[0].mxu0
      %3239 = vmatprep.mubr.f32.mxu0 0.0
      %3240 = vmatmul.mubr.f32.gmra.mrb[0].mxu0 %v456
      %v3241 = vpop.f32.mrb[0].mxu0
      %v3242 = vadd.f32 %v407, %v3241
      %v3243 = vpop.f32.mrb[0].mxu0
      %3244 = vdwg.mxu0
      %v3245 = vmax.f32 %v3167, 0.0
      %v3246 = vmax.f32 %v3172, 0.0
      %v3247 = vmax.f32 %v3177, 0.0
      %v3248 = vmax.f32 %v3182, 0.0
      %v3249 = vmax.f32 %v3187, 0.0
      %v3250 = vmax.f32 %v3192, 0.0
      %v3251 = vmax.f32 %v3197, 0.0
      %v3252 = vmax.f32 %v3202, 0.0
      %v3253 = vmax.f32 %v3207, 0.0
      %v3254 = vmax.f32 %v3212, 0.0
      %v3255 = vmax.f32 %v3217, 0.0
      %v3256 = vmax.f32 %v3222, 0.0
      %v3257 = vmax.f32 %v3227, 0.0
      %v3258 = vmax.f32 %v3232, 0.0
      %v3259 = vmax.f32 %v3237, 0.0
      %v3260 = vmax.f32 %v3242, 0.0
      %3261 = vadd.xlane.f32.xlu0 %v3245
      %v3262 = vpop.xlane.xlu0 %3261
      %3263 = vadd.xlane.f32.xlu0 %v3246
      %v3264 = vpop.xlane.xlu0 %3263
      %3265 = vadd.xlane.f32.xlu0 %v3247
      %v3266 = vpop.xlane.xlu0 %3265
      %3267 = vadd.xlane.f32.xlu0 %v3248
      %v3268 = vpop.xlane.xlu0 %3267
      %3269 = vadd.xlane.f32.xlu0 %v3249
      %v3270 = vpop.xlane.xlu0 %3269
      %3271 = vadd.xlane.f32.xlu0 %v3250
      %v3272 = vpop.xlane.xlu0 %3271
      %3273 = vadd.xlane.f32.xlu0 %v3251
      %v3274 = vpop.xlane.xlu0 %3273
      %3275 = vadd.xlane.f32.xlu0 %v3252
      %v3276 = vpop.xlane.xlu0 %3275
      %3277 = vadd.xlane.f32.xlu0 %v3253
      %v3278 = vpop.xlane.xlu0 %3277
      %3279 = vadd.xlane.f32.xlu0 %v3254
      %v3280 = vpop.xlane.xlu0 %3279
      %3281 = vadd.xlane.f32.xlu0 %v3255
      %v3282 = vpop.xlane.xlu0 %3281
      %3283 = vadd.xlane.f32.xlu0 %v3256
      %v3284 = vpop.xlane.xlu0 %3283
      %3285 = vadd.xlane.f32.xlu0 %v3257
      %v3286 = vpop.xlane.xlu0 %3285
      %3287 = vadd.xlane.f32.xlu0 %v3258
      %v3288 = vpop.xlane.xlu0 %3287
      %3289 = vadd.xlane.f32.xlu0 %v3259
      %v3290 = vpop.xlane.xlu0 %3289
      %3291 = vadd.xlane.f32.xlu0 %v3260
      %v3292 = vpop.xlane.xlu0 %3291
      %v3293 = vadd.f32 %v3079, %v3262
      %v3294 = vadd.f32 %v3080, %v3264
      %v3295 = vadd.f32 %v3081, %v3266
      %v3296 = vadd.f32 %v3082, %v3268
      %v3297 = vadd.f32 %v3083, %v3270
      %v3298 = vadd.f32 %v3084, %v3272
      %v3299 = vadd.f32 %v3085, %v3274
      %v3300 = vadd.f32 %v3086, %v3276
      %v3301 = vadd.f32 %v3087, %v3278
      %v3302 = vadd.f32 %v3088, %v3280
      %v3303 = vadd.f32 %v3089, %v3282
      %v3304 = vadd.f32 %v3090, %v3284
      %v3305 = vadd.f32 %v3091, %v3286
      %v3306 = vadd.f32 %v3092, %v3288
      %v3307 = vadd.f32 %v3093, %v3290
      %v3308 = vadd.f32 %v3094, %v3292
      %v3309 = vld [vmem:[%s3 + $0x20] sm:$0xff]
      %v3310 = vld [vmem:[%s3 + $0x48] sm:$0xff]
      %v3311 = vld [vmem:[%s3 + $0x70] sm:$0xff]
      %v3312 = vld [vmem:[%s3 + $0x98] sm:$0xff]
      %v3313 = vld [vmem:[%s3 + $0xc0] sm:$0xff]
      %v3314 = vld [vmem:[%s3 + $0xe8] sm:$0xff]
      %v3315 = vld [vmem:[%s3 + $0x110] sm:$0xff]
      %v3316 = vld [vmem:[%s3 + $0x138] sm:$0xff]
      %v3317 = vld [vmem:[%s3 + $0x160] sm:$0xff]
      %v3318 = vld [vmem:[%s3 + $0x188] sm:$0xff]
      %v3319 = vld [vmem:[%s3 + $0x1b0] sm:$0xff]
      %v3320 = vld [vmem:[%s3 + $0x1d8] sm:$0xff]
      %v3321 = vld [vmem:[%s3 + $0x200] sm:$0xff]
      %v3322 = vld [vmem:[%s3 + $0x228] sm:$0xff]
      %v3323 = vld [vmem:[%s3 + $0x250] sm:$0xff]
      %v3324 = vld [vmem:[%s3 + $0x278] sm:$0xff]
      %3325 = vmatprep.subr.mxu0 0.0
      %3326 = vmatpush1.msra.mxu0 %v3293
      %3327 = vmatprep.subr.mxu0 0.0
      %3328 = vmatpush1.msra.mxu0 %v3294
      %3329 = vmatprep.subr.mxu0 0.0
      %3330 = vmatpush1.msra.mxu0 %v3295
      %3331 = vmatprep.subr.mxu0 0.0
      %3332 = vmatpush1.msra.mxu0 %v3296
      %3333 = vmatprep.subr.mxu0 0.0
      %3334 = vmatpush1.msra.mxu0 %v3297
      %3335 = vmatprep.subr.mxu0 0.0
      %3336 = vmatpush1.msra.mxu0 %v3298
      %3337 = vmatprep.subr.mxu0 0.0
      %3338 = vmatpush1.msra.mxu0 %v3299
      %3339 = vmatprep.subr.mxu0 0.0
      %3340 = vmatpush1.msra.mxu0 %v3300
      %3341 = vmatprep.subr.mxu0 0.0
      %3342 = vmatpush1.msra.mxu0 %v3301
      %3343 = vmatprep.subr.mxu0 0.0
      %3344 = vmatpush1.msra.mxu0 %v3302
      %3345 = vmatprep.subr.mxu0 0.0
      %3346 = vmatpush1.msra.mxu0 %v3303
      %3347 = vmatprep.subr.mxu0 0.0
      %3348 = vmatpush1.msra.mxu0 %v3304
      %3349 = vmatprep.subr.mxu0 0.0
      %3350 = vmatpush1.msra.mxu0 %v3305
      %3351 = vmatprep.subr.mxu0 0.0
      %3352 = vmatpush1.msra.mxu0 %v3306
      %3353 = vmatprep.subr.mxu0 0.0
      %3354 = vmatpush1.msra.mxu0 %v3307
      %3355 = vmatprep.subr.mxu0 0.0
      %3356 = vmatpush1.msra.mxu0 %v3308
      %3357 = vmatprep.subr.mxu0 0.0
      %3358 = vmatpush1.msra.mxu0 0.0
      %3359 = vmatprep.subr.mxu0 0.0
      %3360 = vmatpush1.msra.mxu0 0.0
      %3361 = vmatprep.subr.mxu0 0.0
      %3362 = vmatpush1.msra.mxu0 0.0
      %3363 = vmatprep.subr.mxu0 0.0
      %3364 = vmatpush1.msra.mxu0 0.0
      %3365 = vmatprep.subr.mxu0 0.0
      %3366 = vmatpush1.msra.mxu0 0.0
      %3367 = vmatprep.subr.mxu0 0.0
      %3368 = vmatpush1.msra.mxu0 0.0
      %3369 = vmatprep.subr.mxu0 0.0
      %3370 = vmatpush1.msra.mxu0 0.0
      %3371 = vmatprep.subr.mxu0 0.0
      %3372 = vmatpush1.msra.mxu0 0.0
      %3373 = vmatprep.subr.mxu0 0.0
      %3374 = vmatpush1.msra.mxu0 0.0
      %3375 = vmatprep.subr.mxu0 0.0
      %3376 = vmatpush1.msra.mxu0 0.0
      %3377 = vmatprep.subr.mxu0 0.0
      %3378 = vmatpush1.msra.mxu0 0.0
      %3379 = vmatprep.subr.mxu0 0.0
      %3380 = vmatpush1.msra.mxu0 0.0
      %3381 = vmatprep.subr.mxu0 0.0
      %3382 = vmatpush1.msra.mxu0 0.0
      %3383 = vmatprep.subr.mxu0 0.0
      %3384 = vmatpush1.msra.mxu0 0.0
      %3385 = vmatprep.subr.mxu0 0.0
      %3386 = vmatpush1.msra.mxu0 0.0
      %3387 = vmatprep.subr.mxu0 0.0
      %3388 = vmatpush1.msra.mxu0 0.0
      %3389 = vmatprep.mubr.f32.mxu0 0.0
      %3390 = vmatmul.mubr.f32.gmra.mrb[0].mxu0 %v3309
      %v3391 = vpop.f32.mrb[0].mxu0
      %v3392 = vadd.f32 0.0, %v3391
      %v3393 = vpop.f32.mrb[0].mxu0
      %3394 = vmatprep.mubr.f32.mxu0 0.0
      %3395 = vmatmul.mubr.f32.gmra.mrb[0].mxu0 %v3310
      %v3396 = vpop.f32.mrb[0].mxu0
      %v3397 = vadd.f32 0.0, %v3396
      %v3398 = vpop.f32.mrb[0].mxu0
      %3399 = vmatprep.mubr.f32.mxu0 0.0
      %3400 = vmatmul.mubr.f32.gmra.mrb[0].mxu0 %v3311
      %v3401 = vpop.f32.mrb[0].mxu0
      %v3402 = vadd.f32 0.0, %v3401
      %v3403 = vpop.f32.mrb[0].mxu0
      %3404 = vmatprep.mubr.f32.mxu0 0.0
      %3405 = vmatmul.mubr.f32.gmra.mrb[0].mxu0 %v3312
      %v3406 = vpop.f32.mrb[0].mxu0
      %v3407 = vadd.f32 0.0, %v3406
      %v3408 = vpop.f32.mrb[0].mxu0
      %3409 = vmatprep.mubr.f32.mxu0 0.0
      %3410 = vmatmul.mubr.f32.gmra.mrb[0].mxu0 %v3313
      %v3411 = vpop.f32.mrb[0].mxu0
      %v3412 = vadd.f32 0.0, %v3411
      %v3413 = vpop.f32.mrb[0].mxu0
      %3414 = vmatprep.mubr.f32.mxu0 0.0
      %3415 = vmatmul.mubr.f32.gmra.mrb[0].mxu0 %v3314
      %v3416 = vpop.f32.mrb[0].mxu0
      %v3417 = vadd.f32 0.0, %v3416
      %v3418 = vpop.f32.mrb[0].mxu0
      %3419 = vmatprep.mubr.f32.mxu0 0.0
      %3420 = vmatmul.mubr.f32.gmra.mrb[0].mxu0 %v3315
      %v3421 = vpop.f32.mrb[0].mxu0
      %v3422 = vadd.f32 0.0, %v3421
      %v3423 = vpop.f32.mrb[0].mxu0
      %3424 = vmatprep.mubr.f32.mxu0 0.0
      %3425 = vmatmul.mubr.f32.gmra.mrb[0].mxu0 %v3316
      %v3426 = vpop.f32.mrb[0].mxu0
      %v3427 = vadd.f32 0.0, %v3426
      %v3428 = vpop.f32.mrb[0].mxu0
      %3429 = vmatprep.mubr.f32.mxu0 0.0
      %3430 = vmatmul.mubr.f32.gmra.mrb[0].mxu0 %v3317
      %v3431 = vpop.f32.mrb[0].mxu0
      %v3432 = vadd.f32 0.0, %v3431
      %v3433 = vpop.f32.mrb[0].mxu0
      %3434 = vmatprep.mubr.f32.mxu0 0.0
      %3435 = vmatmul.mubr.f32.gmra.mrb[0].mxu0 %v3318
      %v3436 = vpop.f32.mrb[0].mxu0
      %v3437 = vadd.f32 0.0, %v3436
      %v3438 = vpop.f32.mrb[0].mxu0
      %3439 = vmatprep.mubr.f32.mxu0 0.0
      %3440 = vmatmul.mubr.f32.gmra.mrb[0].mxu0 %v3319
      %v3441 = vpop.f32.mrb[0].mxu0
      %v3442 = vadd.f32 0.0, %v3441
      %v3443 = vpop.f32.mrb[0].mxu0
      %3444 = vmatprep.mubr.f32.mxu0 0.0
      %3445 = vmatmul.mubr.f32.gmra.mrb[0].mxu0 %v3320
      %v3446 = vpop.f32.mrb[0].mxu0
      %v3447 = vadd.f32 0.0, %v3446
      %v3448 = vpop.f32.mrb[0].mxu0
      %3449 = vmatprep.mubr.f32.mxu0 0.0
      %3450 = vmatmul.mubr.f32.gmra.mrb[0].mxu0 %v3321
      %v3451 = vpop.f32.mrb[0].mxu0
      %v3452 = vadd.f32 0.0, %v3451
      %v3453 = vpop.f32.mrb[0].mxu0
      %3454 = vmatprep.mubr.f32.mxu0 0.0
      %3455 = vmatmul.mubr.f32.gmra.mrb[0].mxu0 %v3322
      %v3456 = vpop.f32.mrb[0].mxu0
      %v3457 = vadd.f32 0.0, %v3456
      %v3458 = vpop.f32.mrb[0].mxu0
      %3459 = vmatprep.mubr.f32.mxu0 0.0
      %3460 = vmatmul.mubr.f32.gmra.mrb[0].mxu0 %v3323
      %v3461 = vpop.f32.mrb[0].mxu0
      %v3462 = vadd.f32 0.0, %v3461
      %v3463 = vpop.f32.mrb[0].mxu0
      %3464 = vmatprep.mubr.f32.mxu0 0.0
      %3465 = vmatmul.mubr.f32.gmra.mrb[0].mxu0 %v3324
      %v3466 = vpop.f32.mrb[0].mxu0
      %v3467 = vadd.f32 0.0, %v3466
      %v3468 = vpop.f32.mrb[0].mxu0
      %3469 = vdwg.mxu0
      %v3470 = vadd.f32 %v2864, %v3392
      %v3471 = vadd.f32 %v2865, %v3397
      %v3472 = vadd.f32 %v2866, %v3402
      %v3473 = vadd.f32 %v2867, %v3407
      %v3474 = vadd.f32 %v2868, %v3412
      %v3475 = vadd.f32 %v2869, %v3417
      %v3476 = vadd.f32 %v2870, %v3422
      %v3477 = vadd.f32 %v2871, %v3427
      %v3478 = vadd.f32 %v2872, %v3432
      %v3479 = vadd.f32 %v2873, %v3437
      %v3480 = vadd.f32 %v2874, %v3442
      %v3481 = vadd.f32 %v2875, %v3447
      %v3482 = vadd.f32 %v2876, %v3452
      %v3483 = vadd.f32 %v2877, %v3457
      %v3484 = vadd.f32 %v2878, %v3462
      %v3485 = vadd.f32 %v2879, %v3467
      %v3486 = vld [vmem:[%s5] sm:$0xff]
      %v3487 = vld [vmem:[%s5 + $0x8] sm:$0xff]
      %v3488 = vld [vmem:[%s5 + $0x10] sm:$0xff]
      %v3489 = vld [vmem:[%s5 + $0x18] sm:$0xff]
      %v3490 = vld [vmem:[%s5 + $0x20] sm:$0xff]
      %v3491 = vld [vmem:[%s5 + $0x28] sm:$0xff]
      %v3492 = vld [vmem:[%s5 + $0x30] sm:$0xff]
      %v3493 = vld [vmem:[%s5 + $0x38] sm:$0xff]
      %v3494 = vld [vmem:[%s5 + $0x40] sm:$0xff]
      %v3495 = vld [vmem:[%s5 + $0x48] sm:$0xff]
      %v3496 = vld [vmem:[%s5 + $0x50] sm:$0xff]
      %v3497 = vld [vmem:[%s5 + $0x58] sm:$0xff]
      %v3498 = vld [vmem:[%s5 + $0x60] sm:$0xff]
      %v3499 = vld [vmem:[%s5 + $0x68] sm:$0xff]
      %v3500 = vld [vmem:[%s5 + $0x70] sm:$0xff]
      %v3501 = vld [vmem:[%s5 + $0x78] sm:$0xff]
      %v3502 = vld [vmem:[%s6] sm:$0xff]
      %v3503 = vld [vmem:[%s6 + $0x8] sm:$0xff]
      %v3504 = vld [vmem:[%s6 + $0x10] sm:$0xff]
      %v3505 = vld [vmem:[%s6 + $0x18] sm:$0xff]
      %v3506 = vld [vmem:[%s6 + $0x20] sm:$0xff]
      %v3507 = vld [vmem:[%s6 + $0x28] sm:$0xff]
      %v3508 = vld [vmem:[%s6 + $0x30] sm:$0xff]
      %v3509 = vld [vmem:[%s6 + $0x38] sm:$0xff]
      %v3510 = vld [vmem:[%s6 + $0x40] sm:$0xff]
      %v3511 = vld [vmem:[%s6 + $0x48] sm:$0xff]
      %v3512 = vld [vmem:[%s6 + $0x50] sm:$0xff]
      %v3513 = vld [vmem:[%s6 + $0x58] sm:$0xff]
      %v3514 = vld [vmem:[%s6 + $0x60] sm:$0xff]
      %v3515 = vld [vmem:[%s6 + $0x68] sm:$0xff]
      %v3516 = vld [vmem:[%s6 + $0x70] sm:$0xff]
      %v3517 = vld [vmem:[%s6 + $0x78] sm:$0xff]
      %3518 = vmatprep.subr.mxu0 0.0
      %3519 = vmatpush1.msra.mxu0 %v3470
      %3520 = vmatprep.subr.mxu0 0.0
      %3521 = vmatpush1.msra.mxu0 %v3471
      %3522 = vmatprep.subr.mxu0 0.0
      %3523 = vmatpush1.msra.mxu0 %v3472
      %3524 = vmatprep.subr.mxu0 0.0
      %3525 = vmatpush1.msra.mxu0 %v3473
      %3526 = vmatprep.subr.mxu0 0.0
      %3527 = vmatpush1.msra.mxu0 %v3474
      %3528 = vmatprep.subr.mxu0 0.0
      %3529 = vmatpush1.msra.mxu0 %v3475
      %3530 = vmatprep.subr.mxu0 0.0
      %3531 = vmatpush1.msra.mxu0 %v3476
      %3532 = vmatprep.subr.mxu0 0.0
      %3533 = vmatpush1.msra.mxu0 %v3477
      %3534 = vmatprep.subr.mxu0 0.0
      %3535 = vmatpush1.msra.mxu0 %v3478
      %3536 = vmatprep.subr.mxu0 0.0
      %3537 = vmatpush1.msra.mxu0 %v3479
      %3538 = vmatprep.subr.mxu0 0.0
      %3539 = vmatpush1.msra.mxu0 %v3480
      %3540 = vmatprep.subr.mxu0 0.0
      %3541 = vmatpush1.msra.mxu0 %v3481
      %3542 = vmatprep.subr.mxu0 0.0
      %3543 = vmatpush1.msra.mxu0 %v3482
      %3544 = vmatprep.subr.mxu0 0.0
      %3545 = vmatpush1.msra.mxu0 %v3483
      %3546 = vmatprep.subr.mxu0 0.0
      %3547 = vmatpush1.msra.mxu0 %v3484
      %3548 = vmatprep.subr.mxu0 0.0
      %3549 = vmatpush1.msra.mxu0 %v3485
      %3550 = vmatprep.subr.mxu0 0.0
      %3551 = vmatpush1.msra.mxu0 0.0
      %3552 = vmatprep.subr.mxu0 0.0
      %3553 = vmatpush1.msra.mxu0 0.0
      %3554 = vmatprep.subr.mxu0 0.0
      %3555 = vmatpush1.msra.mxu0 0.0
      %3556 = vmatprep.subr.mxu0 0.0
      %3557 = vmatpush1.msra.mxu0 0.0
      %3558 = vmatprep.subr.mxu0 0.0
      %3559 = vmatpush1.msra.mxu0 0.0
      %3560 = vmatprep.subr.mxu0 0.0
      %3561 = vmatpush1.msra.mxu0 0.0
      %3562 = vmatprep.subr.mxu0 0.0
      %3563 = vmatpush1.msra.mxu0 0.0
      %3564 = vmatprep.subr.mxu0 0.0
      %3565 = vmatpush1.msra.mxu0 0.0
      %3566 = vmatprep.subr.mxu0 0.0
      %3567 = vmatpush1.msra.mxu0 0.0
      %3568 = vmatprep.subr.mxu0 0.0
      %3569 = vmatpush1.msra.mxu0 0.0
      %3570 = vmatprep.subr.mxu0 0.0
      %3571 = vmatpush1.msra.mxu0 0.0
      %3572 = vmatprep.subr.mxu0 0.0
      %3573 = vmatpush1.msra.mxu0 0.0
      %3574 = vmatprep.subr.mxu0 0.0
      %3575 = vmatpush1.msra.mxu0 0.0
      %3576 = vmatprep.subr.mxu0 0.0
      %3577 = vmatpush1.msra.mxu0 0.0
      %3578 = vmatprep.subr.mxu0 0.0
      %3579 = vmatpush1.msra.mxu0 0.0
      %3580 = vmatprep.subr.mxu0 0.0
      %3581 = vmatpush1.msra.mxu0 0.0
      %3582 = vmatprep.mubr.f32.mxu0 0.0
      %3583 = vmatmul.mubr.f32.gmra.mrb[0].mxu0 %v3486
      %v3584 = vpop.f32.mrb[0].mxu0
      %v3585 = vadd.f32 %v3502, %v3584
      %v3586 = vpop.f32.mrb[0].mxu0
      %3587 = vmatprep.mubr.f32.mxu0 0.0
      %3588 = vmatmul.mubr.f32.gmra.mrb[0].mxu0 %v3487
      %v3589 = vpop.f32.mrb[0].mxu0
      %v3590 = vadd.f32 %v3503, %v3589
      %v3591 = vpop.f32.mrb[0].mxu0
      %3592 = vmatprep.mubr.f32.mxu0 0.0
      %3593 = vmatmul.mubr.f32.gmra.mrb[0].mxu0 %v3488
      %v3594 = vpop.f32.mrb[0].mxu0
      %v3595 = vadd.f32 %v3504, %v3594
      %v3596 = vpop.f32.mrb[0].mxu0
      %3597 = vmatprep.mubr.f32.mxu0 0.0
      %3598 = vmatmul.mubr.f32.gmra.mrb[0].mxu0 %v3489
      %v3599 = vpop.f32.mrb[0].mxu0
      %v3600 = vadd.f32 %v3505, %v3599
      %v3601 = vpop.f32.mrb[0].mxu0
      %3602 = vmatprep.mubr.f32.mxu0 0.0
      %3603 = vmatmul.mubr.f32.gmra.mrb[0].mxu0 %v3490
      %v3604 = vpop.f32.mrb[0].mxu0
      %v3605 = vadd.f32 %v3506, %v3604
      %v3606 = vpop.f32.mrb[0].mxu0
      %3607 = vmatprep.mubr.f32.mxu0 0.0
      %3608 = vmatmul.mubr.f32.gmra.mrb[0].mxu0 %v3491
      %v3609 = vpop.f32.mrb[0].mxu0
      %v3610 = vadd.f32 %v3507, %v3609
      %v3611 = vpop.f32.mrb[0].mxu0
      %3612 = vmatprep.mubr.f32.mxu0 0.0
      %3613 = vmatmul.mubr.f32.gmra.mrb[0].mxu0 %v3492
      %v3614 = vpop.f32.mrb[0].mxu0
      %v3615 = vadd.f32 %v3508, %v3614
      %v3616 = vpop.f32.mrb[0].mxu0
      %3617 = vmatprep.mubr.f32.mxu0 0.0
      %3618 = vmatmul.mubr.f32.gmra.mrb[0].mxu0 %v3493
      %v3619 = vpop.f32.mrb[0].mxu0
      %v3620 = vadd.f32 %v3509, %v3619
      %v3621 = vpop.f32.mrb[0].mxu0
      %3622 = vmatprep.mubr.f32.mxu0 0.0
      %3623 = vmatmul.mubr.f32.gmra.mrb[0].mxu0 %v3494
      %v3624 = vpop.f32.mrb[0].mxu0
      %v3625 = vadd.f32 %v3510, %v3624
      %v3626 = vpop.f32.mrb[0].mxu0
      %3627 = vmatprep.mubr.f32.mxu0 0.0
      %3628 = vmatmul.mubr.f32.gmra.mrb[0].mxu0 %v3495
      %v3629 = vpop.f32.mrb[0].mxu0
      %v3630 = vadd.f32 %v3511, %v3629
      %v3631 = vpop.f32.mrb[0].mxu0
      %3632 = vmatprep.mubr.f32.mxu0 0.0
      %3633 = vmatmul.mubr.f32.gmra.mrb[0].mxu0 %v3496
      %v3634 = vpop.f32.mrb[0].mxu0
      %v3635 = vadd.f32 %v3512, %v3634
      %v3636 = vpop.f32.mrb[0].mxu0
      %3637 = vmatprep.mubr.f32.mxu0 0.0
      %3638 = vmatmul.mubr.f32.gmra.mrb[0].mxu0 %v3497
      %v3639 = vpop.f32.mrb[0].mxu0
      %v3640 = vadd.f32 %v3513, %v3639
      %v3641 = vpop.f32.mrb[0].mxu0
      %3642 = vmatprep.mubr.f32.mxu0 0.0
      %3643 = vmatmul.mubr.f32.gmra.mrb[0].mxu0 %v3498
      %v3644 = vpop.f32.mrb[0].mxu0
      %v3645 = vadd.f32 %v3514, %v3644
      %v3646 = vpop.f32.mrb[0].mxu0
      %3647 = vmatprep.mubr.f32.mxu0 0.0
      %3648 = vmatmul.mubr.f32.gmra.mrb[0].mxu0 %v3499
      %v3649 = vpop.f32.mrb[0].mxu0
      %v3650 = vadd.f32 %v3515, %v3649
      %v3651 = vpop.f32.mrb[0].mxu0
      %3652 = vmatprep.mubr.f32.mxu0 0.0
      %3653 = vmatmul.mubr.f32.gmra.mrb[0].mxu0 %v3500
      %v3654 = vpop.f32.mrb[0].mxu0
      %v3655 = vadd.f32 %v3516, %v3654
      %v3656 = vpop.f32.mrb[0].mxu0
      %3657 = vmatprep.mubr.f32.mxu0 0.0
      %3658 = vmatmul.mubr.f32.gmra.mrb[0].mxu0 %v3501
      %v3659 = vpop.f32.mrb[0].mxu0
      %v3660 = vadd.f32 %v3517, %v3659
      %v3661 = vpop.f32.mrb[0].mxu0
      %3662 = vdwg.mxu0
      %vm3663 = vcmask 7168
      %3664 = vst.msk [vmem:[%s278] sm:$0xff] %vm3663, %v3585
      %3665 = vst.msk [vmem:[%s278 + $0x8] sm:$0xff] %vm3663, %v3590
      %3666 = vst.msk [vmem:[%s278 + $0x10] sm:$0xff] %vm3663, %v3595
      %3667 = vst.msk [vmem:[%s278 + $0x18] sm:$0xff] %vm3663, %v3600
      %3668 = vst.msk [vmem:[%s278 + $0x20] sm:$0xff] %vm3663, %v3605
      %3669 = vst.msk [vmem:[%s278 + $0x28] sm:$0xff] %vm3663, %v3610
      %3670 = vst.msk [vmem:[%s278 + $0x30] sm:$0xff] %vm3663, %v3615
      %3671 = vst.msk [vmem:[%s278 + $0x38] sm:$0xff] %vm3663, %v3620
      %3672 = vst.msk [vmem:[%s278 + $0x40] sm:$0xff] %vm3663, %v3625
      %3673 = vst.msk [vmem:[%s278 + $0x48] sm:$0xff] %vm3663, %v3630
      %3674 = vst.msk [vmem:[%s278 + $0x50] sm:$0xff] %vm3663, %v3635
      %3675 = vst.msk [vmem:[%s278 + $0x58] sm:$0xff] %vm3663, %v3640
      %3676 = vst.msk [vmem:[%s278 + $0x60] sm:$0xff] %vm3663, %v3645
      %3677 = vst.msk [vmem:[%s278 + $0x68] sm:$0xff] %vm3663, %v3650
      %3678 = vst.msk [vmem:[%s278 + $0x70] sm:$0xff] %vm3663, %v3655
      %3679 = vst.msk [vmem:[%s278 + $0x78] sm:$0xff] %vm3663, %v3660
      %p3680 = scmp.lt.s32.totalorder %s18, 1
      %s3681 = scalar_select %p3680, %s18, 1
      %s3682 = smul.addr %s3681, 16
      %s3683 = smul.addr %s3682, 8
      %s3684 = scalar_lea.vmem %s7, %s3683
      // Predicated region
      $region49: #{touchnet_forward.1} parent=47 // pred_check
        %p3685 = pneg %p188
      $region50: #{touchnet_forward.1} parent=47 // pred_check_branch
        %3687 = sbr.rel (%p3685) target = $region52
      $region51: #{touchnet_forward.1} parent=47 // pred_region
        _
      $region52: #{touchnet_forward.1} parent=47 // pred_fallthru
        _
    $region48: #{touchnet_forward.1} parent=5 // pred_fallthru
      _
    %p3688 = scmp.le.s32.totalorder 2, %s13
    // Predicated region
    $region53: #{touchnet_forward.1} parent=5 // pred_check
      %p3689 = pneg %p3688
    $region54: #{touchnet_forward.1} parent=5 // pred_check_branch
      %3691 = sbr.rel (%p3689) target = $region56
    $region55: #{touchnet_forward.1} parent=5 // pred_region
      %s3692 = ssub.s32 %s13, 2
      // Predicated region
      $region57: #{touchnet_forward.1} parent=55 // pred_check
        %p3693 = pneg %p194
      $region58: #{touchnet_forward.1} parent=55 // pred_check_branch
        %3695 = sbr.rel (%p3693) target = $region60
      $region59: #{touchnet_forward.1} parent=55 // pred_region
        %p3696 = scmp.lt.s32.totalorder %s19, 1
        %s3697 = scalar_select %p3696, %s19, 1
        %s3698 = smul.addr %s3697, 16
        %s3699 = smul.addr %s3698, 8
        %s3700 = scalar_lea.vmem %s7, %s3699
      $region60: #{touchnet_forward.1} parent=55 // pred_fallthru
        _
    $region56: #{touchnet_forward.1} parent=5 // pred_fallthru
      _
  $region6: #{touchnet_forward.1} parent=0 // loop_footer
    %s17 = sadd.s32 1, %s13
  $region7: #{touchnet_forward.1} parent=0 // loop_footer_branch
    %12 = sbr.rel target = $region3
  $region8: #{touchnet_forward.1} parent=0 // loop_exit
    _

</llo_original>
